<compile_context>
chip_gen: v7x
topology: tpu7x:2x2x1
jax: 0.10.0
libtpu: 0.0.40
codegen_flags: <defaults>
</compile_context>

<pallas_src>
import functools
import jax
import jax.numpy as jnp
from jax.experimental import pallas as pl
from jax.experimental.pallas import tpu as pltpu


# ------------------------- tiled fused matmul kernels -------------------------

def _mm_kernel(x_ref, w_ref, b_ref, o_ref, acc_ref, *, activation):
    @pl.when(pl.program_id(2) == 0)
    def _init():
        acc_ref[...] = jnp.zeros_like(acc_ref)

    acc_ref[...] += jnp.dot(x_ref[...], w_ref[...],
                            preferred_element_type=jnp.float32)

    @pl.when(pl.program_id(2) == pl.num_programs(2) - 1)
    def _fin():
        y = acc_ref[...] + b_ref[...].astype(jnp.float32)
        if activation == "relu":
            y = jnp.maximum(y, 0.0)
        o_ref[...] = y.astype(o_ref.dtype)


def _mm_res_ln_kernel(x_ref, w_ref, b_ref, r_ref, g_ref, bt_ref, o_ref, acc_ref, *, eps):
    @pl.when(pl.program_id(2) == 0)
    def _init():
        acc_ref[...] = jnp.zeros_like(acc_ref)

    acc_ref[...] += jnp.dot(x_ref[...], w_ref[...],
                            preferred_element_type=jnp.float32)

    @pl.when(pl.program_id(2) == pl.num_programs(2) - 1)
    def _fin():
        # fused: bias + residual add + LayerNorm over the full output row
        y = acc_ref[...] + b_ref[...].astype(jnp.float32) + r_ref[...].astype(jnp.float32)
        mu = jnp.mean(y, axis=-1, keepdims=True)
        var = jnp.mean((y - mu) ** 2, axis=-1, keepdims=True)
        yn = (y - mu) * jax.lax.rsqrt(var + eps)
        o_ref[...] = (yn * g_ref[...].astype(jnp.float32)
                      + bt_ref[...].astype(jnp.float32)).astype(o_ref.dtype)


def _pick_tile(dim, prefs):
    for p in prefs:
        if dim >= p and dim % p == 0:
            return p
    return dim  # full-extent block: always legal w.r.t. the (8,128) rule


def matmul_fused(x, w, b, *, activation=None, residual=None, ln_gamma=None,
                 ln_beta=None, ln_eps=1e-5, out_dtype=None):
    """out = epilogue(x @ w + b), tiled & pipelined.

    Epilogues (run once in the k==last finalize, no extra HBM round trip):
      - activation='relu'
      - residual + LayerNorm (residual/ln_gamma/ln_beta given); the N tile then spans
        the full output width so the row statistics are exact.
    """
    M, K = x.shape
    K2, Nout = w.shape
    assert K == K2
    out_dtype = out_dtype or x.dtype
    use_ln = ln_gamma is not None

    # 256-multiple M/N tiles feed the 2x256^2 MXU of v6e/v7x (128 also fine for v5e);
    # with double-buffering these stay well under v7x's 64 MiB (32 MiB scoped) VMEM.
    bm = _pick_tile(M, (256, 128, 64, 32, 16, 8))
    bk = _pick_tile(K, (512, 256, 128))
    bn = Nout if use_ln else _pick_tile(Nout, (256, 128))
    grid = (M // bm, Nout // bn, K // bk)

    x_spec = pl.BlockSpec((bm, bk), lambda i, j, k: (i, k))
    w_spec = pl.BlockSpec((bk, bn), lambda i, j, k: (k, j))
    vec_spec = pl.BlockSpec((1, bn), lambda i, j, k: (0, j))
    row_spec = pl.BlockSpec((bm, bn), lambda i, j, k: (i, j))
    out_spec = pl.BlockSpec((bm, bn), lambda i, j, k: (i, j))

    itemsize = jnp.dtype(x.dtype).itemsize
    cost = pl.CostEstimate(flops=2 * M * K * Nout, transcendentals=0,
                           bytes_accessed=(M * K + K * Nout + M * Nout) * itemsize)

    if use_ln:
        assert residual is not None and residual.shape == (M, Nout)
        kernel = functools.partial(_mm_res_ln_kernel, eps=ln_eps)
        in_specs = [x_spec, w_spec, vec_spec, row_spec, vec_spec, vec_spec]
        args = (x, w, b.reshape(1, Nout), residual,
                ln_gamma.reshape(1, Nout), ln_beta.reshape(1, Nout))
    else:
        kernel = functools.partial(_mm_kernel, activation=activation)
        in_specs = [x_spec, w_spec, vec_spec]
        args = (x, w, b.reshape(1, Nout))

    return pl.pallas_call(
        kernel,
        out_shape=jax.ShapeDtypeStruct((M, Nout), out_dtype),
        grid=grid,
        in_specs=in_specs,
        out_specs=out_spec,
        scratch_shapes=[pltpu.VMEM((bm, bn), jnp.float32)],
        compiler_params=pltpu.CompilerParams(
            dimension_semantics=("parallel", "parallel", "arbitrary")),
        cost_estimate=cost,
    )(*args)


# --------------------- fused patch embedding (conv + bias + pos) ---------------------

def _patch_embed_kernel(x_ref, w_ref, b_ref, pos_ref, o_ref):
    # per-batch matmul on the MXU; bias + positional embedding fused into the epilogue
    y = jnp.dot(x_ref[0], w_ref[...], preferred_element_type=jnp.float32)
    y = y + b_ref[...].astype(jnp.float32) + pos_ref[...].astype(jnp.float32)
    o_ref[0] = y.astype(o_ref.dtype)


def patch_embed(x_patches, w, b, pos):
    """x_patches: (B, N, C*P*P) patchified image.  Returns tokens (B, N, D) with the
    Conv2d(kernel=stride=P) projection, bias and learnable positional embedding fused."""
    B, N, CPP = x_patches.shape
    D = w.shape[1]
    itemsize = jnp.dtype(x_patches.dtype).itemsize
    cost = pl.CostEstimate(
        flops=2 * B * N * CPP * D, transcendentals=0,
        bytes_accessed=(B * N * CPP + CPP * D + N * D + B * N * D) * itemsize)
    return pl.pallas_call(
        _patch_embed_kernel,
        out_shape=jax.ShapeDtypeStruct((B, N, D), x_patches.dtype),
        grid=(B,),
        in_specs=[pl.BlockSpec((1, N, CPP), lambda bi: (bi, 0, 0)),
                  pl.BlockSpec((CPP, D), lambda bi: (0, 0)),   # resident across batch steps
                  pl.BlockSpec((1, D), lambda bi: (0, 0)),
                  pl.BlockSpec((N, D), lambda bi: (0, 0))],
        out_specs=pl.BlockSpec((1, N, D), lambda bi: (bi, 0, 0)),
        compiler_params=pltpu.CompilerParams(dimension_semantics=("parallel",)),
        cost_estimate=cost,
    )(x_patches, w, b.reshape(1, D), pos)


# ------------------------------- fused MHSA kernel -------------------------------

def _mhsa_body(qkv_ref, mask_ref, ctx_ref, attn_ref, red_ref, gm_ref, *, nhead, dh):
    qkv = qkv_ref[0]                      # (N, 3D) fused q|k|v, heads contiguous per chunk
    D = nhead * dh
    scale = float(dh) ** -0.5
    ctx_parts = []
    red_acc = None
    for h in range(nhead):                # static unroll over heads
        q = qkv[:, h * dh:(h + 1) * dh]
        k = qkv[:, D + h * dh:D + (h + 1) * dh]
        v = qkv[:, 2 * D + h * dh:2 * D + (h + 1) * dh]
        # q @ k^T on the MXU via contracting dims (no explicit transpose/relayout);
        # operands stay in their native dtype, accumulation is f32.
        s = jax.lax.dot_general(q, k, (((1,), (1,)), ((), ())),
                                preferred_element_type=jnp.float32) * scale
        s = s + mask_ref[h].astype(jnp.float32)   # learnable additive attention mask
        m = jnp.max(s, axis=-1, keepdims=True)
        p = jnp.exp(s - m)
        attn = p * pl.reciprocal(jnp.sum(p, axis=-1, keepdims=True), approx=True)
        ctx_parts.append(jnp.dot(attn.astype(v.dtype), v,
                                 preferred_element_type=jnp.float32))
        if attn_ref is not None:          # only materialized for the last encoder layer
            attn_ref[0, h] = attn.astype(attn_ref.dtype)
            red_acc = attn if red_acc is None else red_acc + attn
    # lane-dense (N, D) context store; the out-projection consumes it directly.
    ctx_ref[0] = jnp.concatenate(ctx_parts, axis=-1).astype(ctx_ref.dtype)
    if red_ref is not None:
        # head-mean and grid-map (query-mean) fused into the kernel epilogue while the
        # attention matrix is still resident in VMEM.
        red = red_acc * (1.0 / nhead)
        red_ref[0] = red.astype(red_ref.dtype)
        gm_ref[0] = jnp.mean(red, axis=0, keepdims=True).astype(gm_ref.dtype)


def _mhsa_kernel(qkv_ref, mask_ref, ctx_ref, *, nhead, dh):
    _mhsa_body(qkv_ref, mask_ref, ctx_ref, None, None, None, nhead=nhead, dh=dh)


def _mhsa_last_kernel(qkv_ref, mask_ref, ctx_ref, attn_ref, red_ref, gm_ref, *, nhead, dh):
    _mhsa_body(qkv_ref, mask_ref, ctx_ref, attn_ref, red_ref, gm_ref, nhead=nhead, dh=dh)


def mhsa(qkv, mask, *, nhead, want_attn):
    """Fused multi-head self-attention.
    qkv: (B, N, 3D), mask: (H, N, N).
    Returns ctx (B,N,D) and, if want_attn, also sattn (B,H,N,N) f32,
    reduced_attn (B,N,N) f32 (head mean) and gm_flat (B,1,N) f32 (query mean of reduced)."""
    B, N, threeD = qkv.shape
    D = threeD // 3
    dh = D // nhead
    itemsize = jnp.dtype(qkv.dtype).itemsize
    base_bytes = (B * N * threeD + nhead * N * N + B * N * D) * itemsize

    qkv_spec = pl.BlockSpec((1, N, threeD), lambda b: (b, 0, 0))
    mask_spec = pl.BlockSpec((nhead, N, N), lambda b: (0, 0, 0))
    ctx_spec = pl.BlockSpec((1, N, D), lambda b: (b, 0, 0))

    if want_attn:
        out_shape = (jax.ShapeDtypeStruct((B, N, D), qkv.dtype),
                     jax.ShapeDtypeStruct((B, nhead, N, N), jnp.float32),
                     jax.ShapeDtypeStruct((B, N, N), jnp.float32),
                     jax.ShapeDtypeStruct((B, 1, N), jnp.float32))
        out_specs = (ctx_spec,
                     pl.BlockSpec((1, nhead, N, N), lambda b: (b, 0, 0, 0)),
                     pl.BlockSpec((1, N, N), lambda b: (b, 0, 0)),
                     pl.BlockSpec((1, 1, N), lambda b: (b, 0, 0)))
        kernel = functools.partial(_mhsa_last_kernel, nhead=nhead, dh=dh)
        bytes_accessed = base_bytes + (B * nhead * N * N + B * N * N + B * N) * 4
    else:
        out_shape = jax.ShapeDtypeStruct((B, N, D), qkv.dtype)
        out_specs = ctx_spec
        kernel = functools.partial(_mhsa_kernel, nhead=nhead, dh=dh)
        bytes_accessed = base_bytes

    cost = pl.CostEstimate(flops=4 * B * nhead * N * N * dh,
                           transcendentals=B * nhead * N * N,
                           bytes_accessed=bytes_accessed)
    return pl.pallas_call(
        kernel,
        out_shape=out_shape,
        grid=(B,),
        in_specs=[qkv_spec, mask_spec],
        out_specs=out_specs,
        compiler_params=pltpu.CompilerParams(dimension_semantics=("parallel",)),
        cost_estimate=cost,
    )(qkv, mask)


# ----------------------------------- model -----------------------------------

def init_params(key, *, in_ch, hidden_dim, nhead, n_layers, nclass, grid_l, patch, dff):
    assert hidden_dim % nhead == 0
    N = grid_l * grid_l
    P = patch
    ks = iter(jax.random.split(key, 8 + 6 * n_layers))
    s = 0.02
    params = {
        'patch_w': s * jax.random.normal(next(ks), (in_ch * P * P, hidden_dim), jnp.float32),
        'patch_b': jnp.zeros((hidden_dim,), jnp.float32),
        'pos':     s * jax.random.normal(next(ks), (N, hidden_dim), jnp.float32),
        'mask':    s * jax.random.normal(next(ks), (nhead, N, N), jnp.float32),
        'cls_w':   s * jax.random.normal(next(ks), (hidden_dim, nclass), jnp.float32),
        'cls_b':   jnp.zeros((nclass,), jnp.float32),
        'layers':  [],
    }
    for _ in range(n_layers):
        layer = {
            # fused [Wq | Wk | Wv] projection (heads contiguous within each chunk)
            'wqkv': s * jax.random.normal(next(ks), (hidden_dim, 3 * hidden_dim), jnp.float32),
            'bqkv': jnp.zeros((3 * hidden_dim,), jnp.float32),
            'wo':   s * jax.random.normal(next(ks), (hidden_dim, hidden_dim), jnp.float32),
            'bo':   jnp.zeros((hidden_dim,), jnp.float32),
            'w1':   s * jax.random.normal(next(ks), (hidden_dim, dff), jnp.float32),
            'b1':   jnp.zeros((dff,), jnp.float32),
            'w2':   s * jax.random.normal(next(ks), (dff, hidden_dim), jnp.float32),
            'b2':   jnp.zeros((hidden_dim,), jnp.float32),
            'ln1_g': jnp.ones((hidden_dim,), jnp.float32),
            'ln1_b': jnp.zeros((hidden_dim,), jnp.float32),
            'ln2_g': jnp.ones((hidden_dim,), jnp.float32),
            'ln2_b': jnp.zeros((hidden_dim,), jnp.float32),
        }
        params['layers'].append(layer)
    return params


def arvit_forward(params, x_nchw, *, nhead, grid_l, gm_patch):
    B, C, H, W = x_nchw.shape
    assert H % grid_l == 0 and W % grid_l == 0
    P = H // grid_l
    N = grid_l * grid_l
    D = params['pos'].shape[-1]
    assert D % nhead == 0
    assert gm_patch * gm_patch == N

    # --- patch embedding: Conv2d(kernel=stride=P) as a fused Pallas matmul ---
    # (C, P, P) flattening order matches the Conv2d weight layout; patchify transpose stays
    # in XLA (pure data movement), projection + bias + pos-embedding are fused in-kernel.
    xg = x_nchw.reshape(B, C, grid_l, P, grid_l, P)
    xg = jnp.transpose(xg, (0, 2, 4, 1, 3, 5)).reshape(B, N, C * P * P)
    tok = patch_embed(xg, params['patch_w'], params['patch_b'], params['pos'])  # (B, N, D)

    n_layers = len(params['layers'])
    sattn = reduced = gm_flat = None
    for li, layer in enumerate(params['layers']):
        last = (li == n_layers - 1)
        xf = tok.reshape(B * N, D)

        # fused QKV projection (single matmul, single kernel launch)
        qkv = matmul_fused(xf, layer['wqkv'], layer['bqkv']).reshape(B, N, 3 * D)

        if last:
            ctx, sattn, reduced, gm_flat = mhsa(qkv, params['mask'], nhead=nhead,
                                                want_attn=True)
        else:
            ctx = mhsa(qkv, params['mask'], nhead=nhead, want_attn=False)

        # out-projection + residual + LayerNorm1 fused
        tok1 = matmul_fused(ctx.reshape(B * N, D), layer['wo'], layer['bo'],
                            residual=xf, ln_gamma=layer['ln1_g'], ln_beta=layer['ln1_b'])
        # FFN: bias+ReLU fused into the first matmul; bias+residual+LayerNorm2 into the second
        hdd = matmul_fused(tok1, layer['w1'], layer['b1'], activation='relu')
        tok = matmul_fused(hdd, layer['w2'], layer['b2'],
                           residual=tok1, ln_gamma=layer['ln2_g'],
                           ln_beta=layer['ln2_b']).reshape(B, N, D)

    pooled = jnp.mean(tok, axis=1)                               # (B, D)
    logits = matmul_fused(pooled, params['cls_w'], params['cls_b'])
    gm = gm_flat.reshape(B, gm_patch, gm_patch)                  # computed in-kernel
    return logits, reduced, sattn, gm


def sam_forward(params, inputs, *, nhead, grid_l, gm_patch):
    input0 = inputs[0] if isinstance(inputs, tuple) else inputs
    x, reduced_attn, sattn, gm = arvit_forward(
        params, input0, nhead=nhead, grid_l=grid_l, gm_patch=gm_patch)
    return [x, reduced_attn, sattn, gm]


# --------------------------------- demo -----------------------------------

if __name__ == "__main__":
    # Small shapes consistent with the SAM/ARViT constructor semantics:
    #   enc_Layers=2, nhead=4, nclass=4, hidden_dim=64, H=W=32, grid_l=4, gm_patch=4
    B, C, H, W = 2, 3, 32, 32
    enc_layers, nhead, nclass = 2, 4, 4
    hidden_dim, grid_l, gm_patch, dff = 64, 4, 4, 128
    patch = H // grid_l

    key = jax.random.PRNGKey(0)
    kx, kp = jax.random.split(key)
    x = jax.random.normal(kx, (B, C, H, W), jnp.float32)
    params = init_params(kp, in_ch=C, hidden_dim=hidden_dim, nhead=nhead,
                         n_layers=enc_layers, nclass=nclass, grid_l=grid_l,
                         patch=patch, dff=dff)

    fwd = jax.jit(functools.partial(sam_forward, nhead=nhead,
                                    grid_l=grid_l, gm_patch=gm_patch))
    logits, reduced_attn, sattn, gm = fwd(params, x)
    jax.block_until_ready((logits, reduced_attn, sattn, gm))

    N = grid_l * grid_l
    assert logits.shape == (B, nclass)
    assert reduced_attn.shape == (B, N, N)
    assert sattn.shape == (B, nhead, N, N)
    assert gm.shape == (B, gm_patch, gm_patch)
    print("KERNEL_OK")
</pallas_src>

<mosaic_0001>
module attributes {stable_mosaic.version = 11 : i64} {
  func.func @_patch_embed_kernel(%arg0: i32, %arg1: memref<1x16x192xf32, #tpu.memory_space<vmem>>, %arg2: memref<192x64xf32, #tpu.memory_space<vmem>>, %arg3: memref<1x64xf32, #tpu.memory_space<vmem>>, %arg4: memref<16x64xf32, #tpu.memory_space<vmem>>, %arg5: memref<1x16x64xf32, #tpu.memory_space<vmem>>) attributes {dimension_semantics = [#tpu.dimension_semantics<parallel>], iteration_bounds = array<i64: 2>, scalar_prefetch = 0 : i64, scratch_operands = 0 : i64, tpu.core_type = #tpu.core_type<tc>, window_params = [{transform_indices = @transform_0, window_bounds = array<i64: 1, 16, 192>}, {pipeline_mode = #tpu.pipeline_mode<synchronous>, transform_indices = @transform_1, window_bounds = array<i64: 192, 64>}, {pipeline_mode = #tpu.pipeline_mode<synchronous>, transform_indices = @transform_2, window_bounds = array<i64: 1, 64>}, {pipeline_mode = #tpu.pipeline_mode<synchronous>, transform_indices = @transform_3, window_bounds = array<i64: 16, 64>}, {transform_indices = @transform_4, window_bounds = array<i64: 1, 16, 64>}]} {
    %c0 = arith.constant 0 : index
    %c0_0 = arith.constant 0 : index
    %c0_1 = arith.constant 0 : index
    %0 = vector.load %arg1[%c0, %c0_0, %c0_1] : memref<1x16x192xf32, #tpu.memory_space<vmem>>, vector<1x16x192xf32>
    %1 = vector.shape_cast %0 : vector<1x16x192xf32> to vector<16x192xf32>
    %c0_2 = arith.constant 0 : index
    %c0_3 = arith.constant 0 : index
    %2 = vector.load %arg2[%c0_2, %c0_3] : memref<192x64xf32, #tpu.memory_space<vmem>>, vector<192x64xf32>
    %cst = arith.constant dense<0.000000e+00> : vector<16x64xf32>
    %3 = tpu.matmul %1, %2, %cst {dimension_numbers = #tpu.dot_dimension_numbers<[1], [0], [0], [1], [0, 0, 1, 1], [], []>} : vector<16x192xf32>, vector<192x64xf32>, vector<16x64xf32> -> vector<16x64xf32>
    %c0_4 = arith.constant 0 : index
    %c0_5 = arith.constant 0 : index
    %4 = vector.load %arg3[%c0_4, %c0_5] : memref<1x64xf32, #tpu.memory_space<vmem>>, vector<1x64xf32>
    %5 = vector.broadcast %4 : vector<1x64xf32> to vector<16x64xf32>
    %6 = arith.addf %3, %5 : vector<16x64xf32>
    %c0_6 = arith.constant 0 : index
    %c0_7 = arith.constant 0 : index
    %7 = vector.load %arg4[%c0_6, %c0_7] : memref<16x64xf32, #tpu.memory_space<vmem>>, vector<16x64xf32>
    %8 = arith.addf %6, %7 : vector<16x64xf32>
    %c0_8 = arith.constant 0 : index
    %c0_9 = arith.constant 0 : index
    %c0_10 = arith.constant 0 : index
    %9 = vector.load %arg5[%c0_8, %c0_9, %c0_10] : memref<1x16x64xf32, #tpu.memory_space<vmem>>, vector<1x16x64xf32>
    %10 = vector.shape_cast %9 : vector<1x16x64xf32> to vector<16x64xf32>
    %11 = vector.shape_cast %8 : vector<16x64xf32> to vector<1x16x64xf32>
    tpu.vector_store %arg5[%c0_8, %c0_9, %c0_10], %11 {strides = array<i32>} : memref<1x16x64xf32, #tpu.memory_space<vmem>>, vector<1x16x64xf32>,
    return
  }
  func.func @transform_0(%arg0: i32) -> (i32, i32, i32) {
    %c0_i32 = arith.constant 0 : i32
    %c0_i32_0 = arith.constant 0 : i32
    %c0_i32_1 = arith.constant 0 : i32
    return %arg0, %c0_i32, %c0_i32_0 : i32, i32, i32
  }
  func.func @transform_1(%arg0: i32) -> (i32, i32) {
    %c0_i32 = arith.constant 0 : i32
    %c0_i32_0 = arith.constant 0 : i32
    %c0_i32_1 = arith.constant 0 : i32
    return %c0_i32, %c0_i32_0 : i32, i32
  }
  func.func @transform_2(%arg0: i32) -> (i32, i32) {
    %c0_i32 = arith.constant 0 : i32
    %c0_i32_0 = arith.constant 0 : i32
    %c0_i32_1 = arith.constant 0 : i32
    return %c0_i32, %c0_i32_0 : i32, i32
  }
  func.func @transform_3(%arg0: i32) -> (i32, i32) {
    %c0_i32 = arith.constant 0 : i32
    %c0_i32_0 = arith.constant 0 : i32
    %c0_i32_1 = arith.constant 0 : i32
    return %c0_i32, %c0_i32_0 : i32, i32
  }
  func.func @transform_4(%arg0: i32) -> (i32, i32, i32) {
    %c0_i32 = arith.constant 0 : i32
    %c0_i32_0 = arith.constant 0 : i32
    %c0_i32_1 = arith.constant 0 : i32
    return %arg0, %c0_i32, %c0_i32_0 : i32, i32, i32
  }
}

module attributes {stable_mosaic.version = 11 : i64} {
  func.func @_mm_kernel(%arg0: i32, %arg1: i32, %arg2: i32, %arg3: memref<32x64xf32, #tpu.memory_space<vmem>>, %arg4: memref<64x192xf32, #tpu.memory_space<vmem>>, %arg5: memref<1x192xf32, #tpu.memory_space<vmem>>, %arg6: memref<32x192xf32, #tpu.memory_space<vmem>>, %arg7: memref<32x192xf32, #tpu.memory_space<vmem>>) attributes {dimension_semantics = [#tpu.dimension_semantics<parallel>, #tpu.dimension_semantics<parallel>, #tpu.dimension_semantics<arbitrary>], iteration_bounds = array<i64: 1, 1, 1>, scalar_prefetch = 0 : i64, scratch_operands = 1 : i64, tpu.core_type = #tpu.core_type<tc>, window_params = [{transform_indices = @transform_0, window_bounds = array<i64: 32, 64>}, {transform_indices = @transform_1, window_bounds = array<i64: 64, 192>}, {transform_indices = @transform_2, window_bounds = array<i64: 1, 192>}, {transform_indices = @transform_3, window_bounds = array<i64: 32, 192>}]} {
    %c0_i32 = arith.constant 0 : i32
    %0 = arith.cmpi eq, %arg2, %c0_i32 : i32
    %1 = arith.extui %0 : i1 to i32
    %c0_i32_0 = arith.constant 0 : i32
    %2 = arith.cmpi ne, %1, %c0_i32_0 : i32
    scf.if %2 {
      %cst_10 = arith.constant 0.000000e+00 : f32
      %12 = vector.broadcast %cst_10 : f32 to vector<32x192xf32>
      %c0_11 = arith.constant 0 : index
      %c0_12 = arith.constant 0 : index
      %13 = vector.load %arg7[%c0_11, %c0_12] : memref<32x192xf32, #tpu.memory_space<vmem>>, vector<32x192xf32>
      tpu.vector_store %arg7[%c0_11, %c0_12], %12 {strides = array<i32>} : memref<32x192xf32, #tpu.memory_space<vmem>>, vector<32x192xf32>,
    } else {
    }
    %c0 = arith.constant 0 : index
    %c0_1 = arith.constant 0 : index
    %3 = vector.load %arg7[%c0, %c0_1] : memref<32x192xf32, #tpu.memory_space<vmem>>, vector<32x192xf32>
    %c0_2 = arith.constant 0 : index
    %c0_3 = arith.constant 0 : index
    %4 = vector.load %arg3[%c0_2, %c0_3] : memref<32x64xf32, #tpu.memory_space<vmem>>, vector<32x64xf32>
    %c0_4 = arith.constant 0 : index
    %c0_5 = arith.constant 0 : index
    %5 = vector.load %arg4[%c0_4, %c0_5] : memref<64x192xf32, #tpu.memory_space<vmem>>, vector<64x192xf32>
    %cst = arith.constant dense<0.000000e+00> : vector<32x192xf32>
    %6 = tpu.matmul %4, %5, %cst {dimension_numbers = #tpu.dot_dimension_numbers<[1], [0], [0], [1], [0, 0, 1, 1], [], []>} : vector<32x64xf32>, vector<64x192xf32>, vector<32x192xf32> -> vector<32x192xf32>
    %7 = arith.addf %3, %6 : vector<32x192xf32>
    %c0_6 = arith.constant 0 : index
    %c0_7 = arith.constant 0 : index
    %8 = vector.load %arg7[%c0_6, %c0_7] : memref<32x192xf32, #tpu.memory_space<vmem>>, vector<32x192xf32>
    tpu.vector_store %arg7[%c0_6, %c0_7], %7 {strides = array<i32>} : memref<32x192xf32, #tpu.memory_space<vmem>>, vector<32x192xf32>,
    %c0_i32_8 = arith.constant 0 : i32
    %9 = arith.cmpi eq, %arg2, %c0_i32_8 : i32
    %10 = arith.extui %9 : i1 to i32
    %c0_i32_9 = arith.constant 0 : i32
    %11 = arith.cmpi ne, %10, %c0_i32_9 : i32
    scf.if %11 {
      %c0_10 = arith.constant 0 : index
      %c0_11 = arith.constant 0 : index
      %12 = vector.load %arg7[%c0_10, %c0_11] : memref<32x192xf32, #tpu.memory_space<vmem>>, vector<32x192xf32>
      %c0_12 = arith.constant 0 : index
      %c0_13 = arith.constant 0 : index
      %13 = vector.load %arg5[%c0_12, %c0_13] : memref<1x192xf32, #tpu.memory_space<vmem>>, vector<1x192xf32>
      %14 = vector.broadcast %13 : vector<1x192xf32> to vector<32x192xf32>
      %15 = arith.addf %12, %14 : vector<32x192xf32>
      %c0_14 = arith.constant 0 : index
      %c0_15 = arith.constant 0 : index
      %16 = vector.load %arg6[%c0_14, %c0_15] : memref<32x192xf32, #tpu.memory_space<vmem>>, vector<32x192xf32>
      tpu.vector_store %arg6[%c0_14, %c0_15], %15 {strides = array<i32>} : memref<32x192xf32, #tpu.memory_space<vmem>>, vector<32x192xf32>,
    } else {
    }
    return
  }
  func.func @transform_0(%arg0: i32, %arg1: i32, %arg2: i32) -> (i32, i32) {
    %c0_i32 = arith.constant 0 : i32
    return %arg0, %arg2 : i32, i32
  }
  func.func @transform_1(%arg0: i32, %arg1: i32, %arg2: i32) -> (i32, i32) {
    %c0_i32 = arith.constant 0 : i32
    return %arg2, %arg1 : i32, i32
  }
  func.func @transform_2(%arg0: i32, %arg1: i32, %arg2: i32) -> (i32, i32) {
    %c0_i32 = arith.constant 0 : i32
    %c0_i32_0 = arith.constant 0 : i32
    return %c0_i32, %arg1 : i32, i32
  }
  func.func @transform_3(%arg0: i32, %arg1: i32, %arg2: i32) -> (i32, i32) {
    %c0_i32 = arith.constant 0 : i32
    return %arg0, %arg1 : i32, i32
  }
}

module attributes {stable_mosaic.version = 11 : i64} {
  func.func @_mhsa_kernel(%arg0: i32, %arg1: memref<1x16x192xf32, #tpu.memory_space<vmem>>, %arg2: memref<4x16x16xf32, #tpu.memory_space<vmem>>, %arg3: memref<1x16x64xf32, #tpu.memory_space<vmem>>) attributes {dimension_semantics = [#tpu.dimension_semantics<parallel>], iteration_bounds = array<i64: 2>, scalar_prefetch = 0 : i64, scratch_operands = 0 : i64, tpu.core_type = #tpu.core_type<tc>, window_params = [{transform_indices = @transform_0, window_bounds = array<i64: 1, 16, 192>}, {pipeline_mode = #tpu.pipeline_mode<synchronous>, transform_indices = @transform_1, window_bounds = array<i64: 4, 16, 16>}, {transform_indices = @transform_2, window_bounds = array<i64: 1, 16, 64>}]} {
    %c0 = arith.constant 0 : index
    %c0_0 = arith.constant 0 : index
    %c0_1 = arith.constant 0 : index
    %0 = vector.load %arg1[%c0, %c0_0, %c0_1] : memref<1x16x192xf32, #tpu.memory_space<vmem>>, vector<1x16x192xf32>
    %1 = vector.shape_cast %0 : vector<1x16x192xf32> to vector<16x192xf32>
    %2 = vector.extract_strided_slice %1 {offsets = [0, 0], sizes = [16, 16], strides = [1, 1]} : vector<16x192xf32> to vector<16x16xf32>
    %3 = vector.extract_strided_slice %1 {offsets = [0, 64], sizes = [16, 16], strides = [1, 1]} : vector<16x192xf32> to vector<16x16xf32>
    %4 = vector.extract_strided_slice %1 {offsets = [0, 128], sizes = [16, 16], strides = [1, 1]} : vector<16x192xf32> to vector<16x16xf32>
    %cst = arith.constant dense<0.000000e+00> : vector<16x16xf32>
    %5 = tpu.matmul %2, %3, %cst {dimension_numbers = #tpu.dot_dimension_numbers<[1], [1], [0], [0], [0, 0, 1, 0], [], []>} : vector<16x16xf32>, vector<16x16xf32>, vector<16x16xf32> -> vector<16x16xf32>
    %cst_2 = arith.constant 2.500000e-01 : f32
    %6 = vector.broadcast %cst_2 : f32 to vector<16x16xf32>
    %7 = arith.mulf %5, %6 : vector<16x16xf32>
    %c0_3 = arith.constant 0 : index
    %c0_4 = arith.constant 0 : index
    %c0_5 = arith.constant 0 : index
    %8 = vector.load %arg2[%c0_3, %c0_4, %c0_5] : memref<4x16x16xf32, #tpu.memory_space<vmem>>, vector<1x16x16xf32>
    %9 = vector.shape_cast %8 : vector<1x16x16xf32> to vector<16x16xf32>
    %10 = arith.addf %7, %9 : vector<16x16xf32>
    %cst_6 = arith.constant dense<0xFF800000> : vector<16xf32>
    %11 = vector.multi_reduction <maximumf>, %10, %cst_6 [1] : vector<16x16xf32> to vector<16xf32>
    %12 = vector.shape_cast %11 : vector<16xf32> to vector<16x1xf32>
    %13 = vector.broadcast %12 : vector<16x1xf32> to vector<16x16xf32>
    %14 = arith.subf %10, %13 : vector<16x16xf32>
    %15 = math.exp %14 : vector<16x16xf32>
    %cst_7 = arith.constant dense<0.000000e+00> : vector<16xf32>
    %16 = vector.multi_reduction <add>, %15, %cst_7 [1] : vector<16x16xf32> to vector<16xf32>
    %17 = vector.shape_cast %16 : vector<16xf32> to vector<16x1xf32>
    %18 = tpu.reciprocal %17 {approx = true} : vector<16x1xf32> -> vector<16x1xf32>
    %19 = vector.broadcast %18 : vector<16x1xf32> to vector<16x16xf32>
    %20 = arith.mulf %15, %19 : vector<16x16xf32>
    %cst_8 = arith.constant dense<0.000000e+00> : vector<16x16xf32>
    %21 = tpu.matmul %20, %4, %cst_8 {dimension_numbers = #tpu.dot_dimension_numbers<[1], [0], [0], [1], [0, 0, 1, 1], [], []>} : vector<16x16xf32>, vector<16x16xf32>, vector<16x16xf32> -> vector<16x16xf32>
    %22 = vector.extract_strided_slice %1 {offsets = [0, 16], sizes = [16, 16], strides = [1, 1]} : vector<16x192xf32> to vector<16x16xf32>
    %23 = vector.extract_strided_slice %1 {offsets = [0, 80], sizes = [16, 16], strides = [1, 1]} : vector<16x192xf32> to vector<16x16xf32>
    %24 = vector.extract_strided_slice %1 {offsets = [0, 144], sizes = [16, 16], strides = [1, 1]} : vector<16x192xf32> to vector<16x16xf32>
    %cst_9 = arith.constant dense<0.000000e+00> : vector<16x16xf32>
    %25 = tpu.matmul %22, %23, %cst_9 {dimension_numbers = #tpu.dot_dimension_numbers<[1], [1], [0], [0], [0, 0, 1, 0], [], []>} : vector<16x16xf32>, vector<16x16xf32>, vector<16x16xf32> -> vector<16x16xf32>
    %cst_10 = arith.constant 2.500000e-01 : f32
    %26 = vector.broadcast %cst_10 : f32 to vector<16x16xf32>
    %27 = arith.mulf %25, %26 : vector<16x16xf32>
    %c1 = arith.constant 1 : index
    %c0_11 = arith.constant 0 : index
    %c0_12 = arith.constant 0 : index
    %28 = vector.load %arg2[%c1, %c0_11, %c0_12] : memref<4x16x16xf32, #tpu.memory_space<vmem>>, vector<1x16x16xf32>
    %29 = vector.shape_cast %28 : vector<1x16x16xf32> to vector<16x16xf32>
    %30 = arith.addf %27, %29 : vector<16x16xf32>
    %cst_13 = arith.constant dense<0xFF800000> : vector<16xf32>
    %31 = vector.multi_reduction <maximumf>, %30, %cst_13 [1] : vector<16x16xf32> to vector<16xf32>
    %32 = vector.shape_cast %31 : vector<16xf32> to vector<16x1xf32>
    %33 = vector.broadcast %32 : vector<16x1xf32> to vector<16x16xf32>
    %34 = arith.subf %30, %33 : vector<16x16xf32>
    %35 = math.exp %34 : vector<16x16xf32>
    %cst_14 = arith.constant dense<0.000000e+00> : vector<16xf32>
    %36 = vector.multi_reduction <add>, %35, %cst_14 [1] : vector<16x16xf32> to vector<16xf32>
    %37 = vector.shape_cast %36 : vector<16xf32> to vector<16x1xf32>
    %38 = tpu.reciprocal %37 {approx = true} : vector<16x1xf32> -> vector<16x1xf32>
    %39 = vector.broadcast %38 : vector<16x1xf32> to vector<16x16xf32>
    %40 = arith.mulf %35, %39 : vector<16x16xf32>
    %cst_15 = arith.constant dense<0.000000e+00> : vector<16x16xf32>
    %41 = tpu.matmul %40, %24, %cst_15 {dimension_numbers = #tpu.dot_dimension_numbers<[1], [0], [0], [1], [0, 0, 1, 1], [], []>} : vector<16x16xf32>, vector<16x16xf32>, vector<16x16xf32> -> vector<16x16xf32>
    %42 = vector.extract_strided_slice %1 {offsets = [0, 32], sizes = [16, 16], strides = [1, 1]} : vector<16x192xf32> to vector<16x16xf32>
    %43 = vector.extract_strided_slice %1 {offsets = [0, 96], sizes = [16, 16], strides = [1, 1]} : vector<16x192xf32> to vector<16x16xf32>
    %44 = vector.extract_strided_slice %1 {offsets = [0, 160], sizes = [16, 16], strides = [1, 1]} : vector<16x192xf32> to vector<16x16xf32>
    %cst_16 = arith.constant dense<0.000000e+00> : vector<16x16xf32>
    %45 = tpu.matmul %42, %43, %cst_16 {dimension_numbers = #tpu.dot_dimension_numbers<[1], [1], [0], [0], [0, 0, 1, 0], [], []>} : vector<16x16xf32>, vector<16x16xf32>, vector<16x16xf32> -> vector<16x16xf32>
    %cst_17 = arith.constant 2.500000e-01 : f32
    %46 = vector.broadcast %cst_17 : f32 to vector<16x16xf32>
    %47 = arith.mulf %45, %46 : vector<16x16xf32>
    %c2 = arith.constant 2 : index
    %c0_18 = arith.constant 0 : index
    %c0_19 = arith.constant 0 : index
    %48 = vector.load %arg2[%c2, %c0_18, %c0_19] : memref<4x16x16xf32, #tpu.memory_space<vmem>>, vector<1x16x16xf32>
    %49 = vector.shape_cast %48 : vector<1x16x16xf32> to vector<16x16xf32>
    %50 = arith.addf %47, %49 : vector<16x16xf32>
    %cst_20 = arith.constant dense<0xFF800000> : vector<16xf32>
    %51 = vector.multi_reduction <maximumf>, %50, %cst_20 [1] : vector<16x16xf32> to vector<16xf32>
    %52 = vector.shape_cast %51 : vector<16xf32> to vector<16x1xf32>
    %53 = vector.broadcast %52 : vector<16x1xf32> to vector<16x16xf32>
    %54 = arith.subf %50, %53 : vector<16x16xf32>
    %55 = math.exp %54 : vector<16x16xf32>
    %cst_21 = arith.constant dense<0.000000e+00> : vector<16xf32>
    %56 = vector.multi_reduction <add>, %55, %cst_21 [1] : vector<16x16xf32> to vector<16xf32>
    %57 = vector.shape_cast %56 : vector<16xf32> to vector<16x1xf32>
    %58 = tpu.reciprocal %57 {approx = true} : vector<16x1xf32> -> vector<16x1xf32>
    %59 = vector.broadcast %58 : vector<16x1xf32> to vector<16x16xf32>
    %60 = arith.mulf %55, %59 : vector<16x16xf32>
    %cst_22 = arith.constant dense<0.000000e+00> : vector<16x16xf32>
    %61 = tpu.matmul %60, %44, %cst_22 {dimension_numbers = #tpu.dot_dimension_numbers<[1], [0], [0], [1], [0, 0, 1, 1], [], []>} : vector<16x16xf32>, vector<16x16xf32>, vector<16x16xf32> -> vector<16x16xf32>
    %62 = vector.extract_strided_slice %1 {offsets = [0, 48], sizes = [16, 16], strides = [1, 1]} : vector<16x192xf32> to vector<16x16xf32>
    %63 = vector.extract_strided_slice %1 {offsets = [0, 112], sizes = [16, 16], strides = [1, 1]} : vector<16x192xf32> to vector<16x16xf32>
    %64 = vector.extract_strided_slice %1 {offsets = [0, 176], sizes = [16, 16], strides = [1, 1]} : vector<16x192xf32> to vector<16x16xf32>
    %cst_23 = arith.constant dense<0.000000e+00> : vector<16x16xf32>
    %65 = tpu.matmul %62, %63, %cst_23 {dimension_numbers = #tpu.dot_dimension_numbers<[1], [1], [0], [0], [0, 0, 1, 0], [], []>} : vector<16x16xf32>, vector<16x16xf32>, vector<16x16xf32> -> vector<16x16xf32>
    %cst_24 = arith.constant 2.500000e-01 : f32
    %66 = vector.broadcast %cst_24 : f32 to vector<16x16xf32>
    %67 = arith.mulf %65, %66 : vector<16x16xf32>
    %c3 = arith.constant 3 : index
    %c0_25 = arith.constant 0 : index
    %c0_26 = arith.constant 0 : index
    %68 = vector.load %arg2[%c3, %c0_25, %c0_26] : memref<4x16x16xf32, #tpu.memory_space<vmem>>, vector<1x16x16xf32>
    %69 = vector.shape_cast %68 : vector<1x16x16xf32> to vector<16x16xf32>
    %70 = arith.addf %67, %69 : vector<16x16xf32>
    %cst_27 = arith.constant dense<0xFF800000> : vector<16xf32>
    %71 = vector.multi_reduction <maximumf>, %70, %cst_27 [1] : vector<16x16xf32> to vector<16xf32>
    %72 = vector.shape_cast %71 : vector<16xf32> to vector<16x1xf32>
    %73 = vector.broadcast %72 : vector<16x1xf32> to vector<16x16xf32>
    %74 = arith.subf %70, %73 : vector<16x16xf32>
    %75 = math.exp %74 : vector<16x16xf32>
    %cst_28 = arith.constant dense<0.000000e+00> : vector<16xf32>
    %76 = vector.multi_reduction <add>, %75, %cst_28 [1] : vector<16x16xf32> to vector<16xf32>
    %77 = vector.shape_cast %76 : vector<16xf32> to vector<16x1xf32>
    %78 = tpu.reciprocal %77 {approx = true} : vector<16x1xf32> -> vector<16x1xf32>
    %79 = vector.broadcast %78 : vector<16x1xf32> to vector<16x16xf32>
    %80 = arith.mulf %75, %79 : vector<16x16xf32>
    %cst_29 = arith.constant dense<0.000000e+00> : vector<16x16xf32>
    %81 = tpu.matmul %80, %64, %cst_29 {dimension_numbers = #tpu.dot_dimension_numbers<[1], [0], [0], [1], [0, 0, 1, 1], [], []>} : vector<16x16xf32>, vector<16x16xf32>, vector<16x16xf32> -> vector<16x16xf32>
    %82 = tpu.concatenate %21, %41, %61, %81 in 1 : vector<16x16xf32>, vector<16x16xf32>, vector<16x16xf32>, vector<16x16xf32> -> vector<16x64xf32>
    %c0_30 = arith.constant 0 : index
    %c0_31 = arith.constant 0 : index
    %c0_32 = arith.constant 0 : index
    %83 = vector.load %arg3[%c0_30, %c0_31, %c0_32] : memref<1x16x64xf32, #tpu.memory_space<vmem>>, vector<1x16x64xf32>
    %84 = vector.shape_cast %83 : vector<1x16x64xf32> to vector<16x64xf32>
    %85 = vector.shape_cast %82 : vector<16x64xf32> to vector<1x16x64xf32>
    tpu.vector_store %arg3[%c0_30, %c0_31, %c0_32], %85 {strides = array<i32>} : memref<1x16x64xf32, #tpu.memory_space<vmem>>, vector<1x16x64xf32>,
    return
  }
  func.func @transform_0(%arg0: i32) -> (i32, i32, i32) {
    %c0_i32 = arith.constant 0 : i32
    %c0_i32_0 = arith.constant 0 : i32
    %c0_i32_1 = arith.constant 0 : i32
    return %arg0, %c0_i32, %c0_i32_0 : i32, i32, i32
  }
  func.func @transform_1(%arg0: i32) -> (i32, i32, i32) {
    %c0_i32 = arith.constant 0 : i32
    %c0_i32_0 = arith.constant 0 : i32
    %c0_i32_1 = arith.constant 0 : i32
    %c0_i32_2 = arith.constant 0 : i32
    return %c0_i32, %c0_i32_0, %c0_i32_1 : i32, i32, i32
  }
  func.func @transform_2(%arg0: i32) -> (i32, i32, i32) {
    %c0_i32 = arith.constant 0 : i32
    %c0_i32_0 = arith.constant 0 : i32
    %c0_i32_1 = arith.constant 0 : i32
    return %arg0, %c0_i32, %c0_i32_0 : i32, i32, i32
  }
}

module attributes {stable_mosaic.version = 11 : i64} {
  func.func @_mm_res_ln_kernel(%arg0: i32, %arg1: i32, %arg2: i32, %arg3: memref<32x64xf32, #tpu.memory_space<vmem>>, %arg4: memref<64x64xf32, #tpu.memory_space<vmem>>, %arg5: memref<1x64xf32, #tpu.memory_space<vmem>>, %arg6: memref<32x64xf32, #tpu.memory_space<vmem>>, %arg7: memref<1x64xf32, #tpu.memory_space<vmem>>, %arg8: memref<1x64xf32, #tpu.memory_space<vmem>>, %arg9: memref<32x64xf32, #tpu.memory_space<vmem>>, %arg10: memref<32x64xf32, #tpu.memory_space<vmem>>) attributes {dimension_semantics = [#tpu.dimension_semantics<parallel>, #tpu.dimension_semantics<parallel>, #tpu.dimension_semantics<arbitrary>], iteration_bounds = array<i64: 1, 1, 1>, scalar_prefetch = 0 : i64, scratch_operands = 1 : i64, tpu.core_type = #tpu.core_type<tc>, window_params = [{transform_indices = @transform_0, window_bounds = array<i64: 32, 64>}, {transform_indices = @transform_1, window_bounds = array<i64: 64, 64>}, {transform_indices = @transform_2, window_bounds = array<i64: 1, 64>}, {transform_indices = @transform_3, window_bounds = array<i64: 32, 64>}, {transform_indices = @transform_4, window_bounds = array<i64: 1, 64>}, {transform_indices = @transform_5, window_bounds = array<i64: 1, 64>}, {transform_indices = @transform_6, window_bounds = array<i64: 32, 64>}]} {
    %c0_i32 = arith.constant 0 : i32
    %0 = arith.cmpi eq, %arg2, %c0_i32 : i32
    %1 = arith.extui %0 : i1 to i32
    %c0_i32_0 = arith.constant 0 : i32
    %2 = arith.cmpi ne, %1, %c0_i32_0 : i32
    scf.if %2 {
      %cst_10 = arith.constant 0.000000e+00 : f32
      %12 = vector.broadcast %cst_10 : f32 to vector<32x64xf32>
      %c0_11 = arith.constant 0 : index
      %c0_12 = arith.constant 0 : index
      %13 = vector.load %arg10[%c0_11, %c0_12] : memref<32x64xf32, #tpu.memory_space<vmem>>, vector<32x64xf32>
      tpu.vector_store %arg10[%c0_11, %c0_12], %12 {strides = array<i32>} : memref<32x64xf32, #tpu.memory_space<vmem>>, vector<32x64xf32>,
    } else {
    }
    %c0 = arith.constant 0 : index
    %c0_1 = arith.constant 0 : index
    %3 = vector.load %arg10[%c0, %c0_1] : memref<32x64xf32, #tpu.memory_space<vmem>>, vector<32x64xf32>
    %c0_2 = arith.constant 0 : index
    %c0_3 = arith.constant 0 : index
    %4 = vector.load %arg3[%c0_2, %c0_3] : memref<32x64xf32, #tpu.memory_space<vmem>>, vector<32x64xf32>
    %c0_4 = arith.constant 0 : index
    %c0_5 = arith.constant 0 : index
    %5 = vector.load %arg4[%c0_4, %c0_5] : memref<64x64xf32, #tpu.memory_space<vmem>>, vector<64x64xf32>
    %cst = arith.constant dense<0.000000e+00> : vector<32x64xf32>
    %6 = tpu.matmul %4, %5, %cst {dimension_numbers = #tpu.dot_dimension_numbers<[1], [0], [0], [1], [0, 0, 1, 1], [], []>} : vector<32x64xf32>, vector<64x64xf32>, vector<32x64xf32> -> vector<32x64xf32>
    %7 = arith.addf %3, %6 : vector<32x64xf32>
    %c0_6 = arith.constant 0 : index
    %c0_7 = arith.constant 0 : index
    %8 = vector.load %arg10[%c0_6, %c0_7] : memref<32x64xf32, #tpu.memory_space<vmem>>, vector<32x64xf32>
    tpu.vector_store %arg10[%c0_6, %c0_7], %7 {strides = array<i32>} : memref<32x64xf32, #tpu.memory_space<vmem>>, vector<32x64xf32>,
    %c0_i32_8 = arith.constant 0 : i32
    %9 = arith.cmpi eq, %arg2, %c0_i32_8 : i32
    %10 = arith.extui %9 : i1 to i32
    %c0_i32_9 = arith.constant 0 : i32
    %11 = arith.cmpi ne, %10, %c0_i32_9 : i32
    scf.if %11 {
      %c0_10 = arith.constant 0 : index
      %c0_11 = arith.constant 0 : index
      %12 = vector.load %arg10[%c0_10, %c0_11] : memref<32x64xf32, #tpu.memory_space<vmem>>, vector<32x64xf32>
      %c0_12 = arith.constant 0 : index
      %c0_13 = arith.constant 0 : index
      %13 = vector.load %arg5[%c0_12, %c0_13] : memref<1x64xf32, #tpu.memory_space<vmem>>, vector<1x64xf32>
      %14 = vector.broadcast %13 : vector<1x64xf32> to vector<32x64xf32>
      %15 = arith.addf %12, %14 : vector<32x64xf32>
      %c0_14 = arith.constant 0 : index
      %c0_15 = arith.constant 0 : index
      %16 = vector.load %arg6[%c0_14, %c0_15] : memref<32x64xf32, #tpu.memory_space<vmem>>, vector<32x64xf32>
      %17 = arith.addf %15, %16 : vector<32x64xf32>
      %cst_16 = arith.constant dense<0.000000e+00> : vector<32xf32>
      %18 = vector.multi_reduction <add>, %17, %cst_16 [1] : vector<32x64xf32> to vector<32xf32>
      %19 = vector.shape_cast %18 : vector<32xf32> to vector<32x1xf32>
      %cst_17 = arith.constant 6.400000e+01 : f32
      %20 = vector.broadcast %cst_17 : f32 to vector<32x1xf32>
      %21 = arith.divf %19, %20 : vector<32x1xf32>
      %22 = vector.broadcast %21 : vector<32x1xf32> to vector<32x64xf32>
      %23 = arith.subf %17, %22 : vector<32x64xf32>
      %24 = arith.mulf %23, %23 : vector<32x64xf32>
      %cst_18 = arith.constant dense<0.000000e+00> : vector<32xf32>
      %25 = vector.multi_reduction <add>, %24, %cst_18 [1] : vector<32x64xf32> to vector<32xf32>
      %26 = vector.shape_cast %25 : vector<32xf32> to vector<32x1xf32>
      %cst_19 = arith.constant 6.400000e+01 : f32
      %27 = vector.broadcast %cst_19 : f32 to vector<32x1xf32>
      %28 = arith.divf %26, %27 : vector<32x1xf32>
      %29 = vector.broadcast %21 : vector<32x1xf32> to vector<32x64xf32>
      %30 = arith.subf %17, %29 : vector<32x64xf32>
      %cst_20 = arith.constant 9.99999974E-6 : f32
      %31 = vector.broadcast %cst_20 : f32 to vector<32x1xf32>
      %32 = arith.addf %28, %31 : vector<32x1xf32>
      %33 = math.rsqrt %32 : vector<32x1xf32>
      %34 = vector.broadcast %33 : vector<32x1xf32> to vector<32x64xf32>
      %35 = arith.mulf %30, %34 : vector<32x64xf32>
      %c0_21 = arith.constant 0 : index
      %c0_22 = arith.constant 0 : index
      %36 = vector.load %arg7[%c0_21, %c0_22] : memref<1x64xf32, #tpu.memory_space<vmem>>, vector<1x64xf32>
      %37 = vector.broadcast %36 : vector<1x64xf32> to vector<32x64xf32>
      %38 = arith.mulf %35, %37 : vector<32x64xf32>
      %c0_23 = arith.constant 0 : index
      %c0_24 = arith.constant 0 : index
      %39 = vector.load %arg8[%c0_23, %c0_24] : memref<1x64xf32, #tpu.memory_space<vmem>>, vector<1x64xf32>
      %40 = vector.broadcast %39 : vector<1x64xf32> to vector<32x64xf32>
      %41 = arith.addf %38, %40 : vector<32x64xf32>
      %c0_25 = arith.constant 0 : index
      %c0_26 = arith.constant 0 : index
      %42 = vector.load %arg9[%c0_25, %c0_26] : memref<32x64xf32, #tpu.memory_space<vmem>>, vector<32x64xf32>
      tpu.vector_store %arg9[%c0_25, %c0_26], %41 {strides = array<i32>} : memref<32x64xf32, #tpu.memory_space<vmem>>, vector<32x64xf32>,
    } else {
    }
    return
  }
  func.func @transform_0(%arg0: i32, %arg1: i32, %arg2: i32) -> (i32, i32) {
    %c0_i32 = arith.constant 0 : i32
    return %arg0, %arg2 : i32, i32
  }
  func.func @transform_1(%arg0: i32, %arg1: i32, %arg2: i32) -> (i32, i32) {
    %c0_i32 = arith.constant 0 : i32
    return %arg2, %arg1 : i32, i32
  }
  func.func @transform_2(%arg0: i32, %arg1: i32, %arg2: i32) -> (i32, i32) {
    %c0_i32 = arith.constant 0 : i32
    %c0_i32_0 = arith.constant 0 : i32
    return %c0_i32, %arg1 : i32, i32
  }
  func.func @transform_3(%arg0: i32, %arg1: i32, %arg2: i32) -> (i32, i32) {
    %c0_i32 = arith.constant 0 : i32
    return %arg0, %arg1 : i32, i32
  }
  func.func @transform_4(%arg0: i32, %arg1: i32, %arg2: i32) -> (i32, i32) {
    %c0_i32 = arith.constant 0 : i32
    %c0_i32_0 = arith.constant 0 : i32
    return %c0_i32, %arg1 : i32, i32
  }
  func.func @transform_5(%arg0: i32, %arg1: i32, %arg2: i32) -> (i32, i32) {
    %c0_i32 = arith.constant 0 : i32
    %c0_i32_0 = arith.constant 0 : i32
    return %c0_i32, %arg1 : i32, i32
  }
  func.func @transform_6(%arg0: i32, %arg1: i32, %arg2: i32) -> (i32, i32) {
    %c0_i32 = arith.constant 0 : i32
    return %arg0, %arg1 : i32, i32
  }
}

module attributes {stable_mosaic.version = 11 : i64} {
  func.func @_mm_kernel(%arg0: i32, %arg1: i32, %arg2: i32, %arg3: memref<32x64xf32, #tpu.memory_space<vmem>>, %arg4: memref<64x128xf32, #tpu.memory_space<vmem>>, %arg5: memref<1x128xf32, #tpu.memory_space<vmem>>, %arg6: memref<32x128xf32, #tpu.memory_space<vmem>>, %arg7: memref<32x128xf32, #tpu.memory_space<vmem>>) attributes {dimension_semantics = [#tpu.dimension_semantics<parallel>, #tpu.dimension_semantics<parallel>, #tpu.dimension_semantics<arbitrary>], iteration_bounds = array<i64: 1, 1, 1>, scalar_prefetch = 0 : i64, scratch_operands = 1 : i64, tpu.core_type = #tpu.core_type<tc>, window_params = [{transform_indices = @transform_0, window_bounds = array<i64: 32, 64>}, {transform_indices = @transform_1, window_bounds = array<i64: 64, 128>}, {transform_indices = @transform_2, window_bounds = array<i64: 1, 128>}, {transform_indices = @transform_3, window_bounds = array<i64: 32, 128>}]} {
    %c0_i32 = arith.constant 0 : i32
    %0 = arith.cmpi eq, %arg2, %c0_i32 : i32
    %1 = arith.extui %0 : i1 to i32
    %c0_i32_0 = arith.constant 0 : i32
    %2 = arith.cmpi ne, %1, %c0_i32_0 : i32
    scf.if %2 {
      %cst_10 = arith.constant 0.000000e+00 : f32
      %12 = vector.broadcast %cst_10 : f32 to vector<32x128xf32>
      %c0_11 = arith.constant 0 : index
      %c0_12 = arith.constant 0 : index
      %13 = vector.load %arg7[%c0_11, %c0_12] : memref<32x128xf32, #tpu.memory_space<vmem>>, vector<32x128xf32>
      tpu.vector_store %arg7[%c0_11, %c0_12], %12 {strides = array<i32>} : memref<32x128xf32, #tpu.memory_space<vmem>>, vector<32x128xf32>,
    } else {
    }
    %c0 = arith.constant 0 : index
    %c0_1 = arith.constant 0 : index
    %3 = vector.load %arg7[%c0, %c0_1] : memref<32x128xf32, #tpu.memory_space<vmem>>, vector<32x128xf32>
    %c0_2 = arith.constant 0 : index
    %c0_3 = arith.constant 0 : index
    %4 = vector.load %arg3[%c0_2, %c0_3] : memref<32x64xf32, #tpu.memory_space<vmem>>, vector<32x64xf32>
    %c0_4 = arith.constant 0 : index
    %c0_5 = arith.constant 0 : index
    %5 = vector.load %arg4[%c0_4, %c0_5] : memref<64x128xf32, #tpu.memory_space<vmem>>, vector<64x128xf32>
    %cst = arith.constant dense<0.000000e+00> : vector<32x128xf32>
    %6 = tpu.matmul %4, %5, %cst {dimension_numbers = #tpu.dot_dimension_numbers<[1], [0], [0], [1], [0, 0, 1, 1], [], []>} : vector<32x64xf32>, vector<64x128xf32>, vector<32x128xf32> -> vector<32x128xf32>
    %7 = arith.addf %3, %6 : vector<32x128xf32>
    %c0_6 = arith.constant 0 : index
    %c0_7 = arith.constant 0 : index
    %8 = vector.load %arg7[%c0_6, %c0_7] : memref<32x128xf32, #tpu.memory_space<vmem>>, vector<32x128xf32>
    tpu.vector_store %arg7[%c0_6, %c0_7], %7 {strides = array<i32>} : memref<32x128xf32, #tpu.memory_space<vmem>>, vector<32x128xf32>,
    %c0_i32_8 = arith.constant 0 : i32
    %9 = arith.cmpi eq, %arg2, %c0_i32_8 : i32
    %10 = arith.extui %9 : i1 to i32
    %c0_i32_9 = arith.constant 0 : i32
    %11 = arith.cmpi ne, %10, %c0_i32_9 : i32
    scf.if %11 {
      %c0_10 = arith.constant 0 : index
      %c0_11 = arith.constant 0 : index
      %12 = vector.load %arg7[%c0_10, %c0_11] : memref<32x128xf32, #tpu.memory_space<vmem>>, vector<32x128xf32>
      %c0_12 = arith.constant 0 : index
      %c0_13 = arith.constant 0 : index
      %13 = vector.load %arg5[%c0_12, %c0_13] : memref<1x128xf32, #tpu.memory_space<vmem>>, vector<1x128xf32>
      %14 = vector.broadcast %13 : vector<1x128xf32> to vector<32x128xf32>
      %15 = arith.addf %12, %14 : vector<32x128xf32>
      %cst_14 = arith.constant 0.000000e+00 : f32
      %16 = vector.broadcast %cst_14 : f32 to vector<32x128xf32>
      %17 = arith.maximumf %15, %16 : vector<32x128xf32>
      %c0_15 = arith.constant 0 : index
      %c0_16 = arith.constant 0 : index
      %18 = vector.load %arg6[%c0_15, %c0_16] : memref<32x128xf32, #tpu.memory_space<vmem>>, vector<32x128xf32>
      tpu.vector_store %arg6[%c0_15, %c0_16], %17 {strides = array<i32>} : memref<32x128xf32, #tpu.memory_space<vmem>>, vector<32x128xf32>,
    } else {
    }
    return
  }
  func.func @transform_0(%arg0: i32, %arg1: i32, %arg2: i32) -> (i32, i32) {
    %c0_i32 = arith.constant 0 : i32
    return %arg0, %arg2 : i32, i32
  }
  func.func @transform_1(%arg0: i32, %arg1: i32, %arg2: i32) -> (i32, i32) {
    %c0_i32 = arith.constant 0 : i32
    return %arg2, %arg1 : i32, i32
  }
  func.func @transform_2(%arg0: i32, %arg1: i32, %arg2: i32) -> (i32, i32) {
    %c0_i32 = arith.constant 0 : i32
    %c0_i32_0 = arith.constant 0 : i32
    return %c0_i32, %arg1 : i32, i32
  }
  func.func @transform_3(%arg0: i32, %arg1: i32, %arg2: i32) -> (i32, i32) {
    %c0_i32 = arith.constant 0 : i32
    return %arg0, %arg1 : i32, i32
  }
}

module attributes {stable_mosaic.version = 11 : i64} {
  func.func @_mhsa_last_kernel(%arg0: i32, %arg1: memref<1x16x192xf32, #tpu.memory_space<vmem>>, %arg2: memref<4x16x16xf32, #tpu.memory_space<vmem>>, %arg3: memref<1x16x64xf32, #tpu.memory_space<vmem>>, %arg4: memref<1x4x16x16xf32, #tpu.memory_space<vmem>>, %arg5: memref<1x16x16xf32, #tpu.memory_space<vmem>>, %arg6: memref<1x1x16xf32, #tpu.memory_space<vmem>>) attributes {dimension_semantics = [#tpu.dimension_semantics<parallel>], iteration_bounds = array<i64: 2>, scalar_prefetch = 0 : i64, scratch_operands = 0 : i64, tpu.core_type = #tpu.core_type<tc>, window_params = [{transform_indices = @transform_0, window_bounds = array<i64: 1, 16, 192>}, {pipeline_mode = #tpu.pipeline_mode<synchronous>, transform_indices = @transform_1, window_bounds = array<i64: 4, 16, 16>}, {transform_indices = @transform_2, window_bounds = array<i64: 1, 16, 64>}, {transform_indices = @transform_3, window_bounds = array<i64: 1, 4, 16, 16>}, {transform_indices = @transform_4, window_bounds = array<i64: 1, 16, 16>}, {transform_indices = @transform_5, window_bounds = array<i64: 1, 1, 16>}]} {
    %c0 = arith.constant 0 : index
    %c0_0 = arith.constant 0 : index
    %c0_1 = arith.constant 0 : index
    %0 = vector.load %arg1[%c0, %c0_0, %c0_1] : memref<1x16x192xf32, #tpu.memory_space<vmem>>, vector<1x16x192xf32>
    %1 = vector.shape_cast %0 : vector<1x16x192xf32> to vector<16x192xf32>
    %2 = vector.extract_strided_slice %1 {offsets = [0, 0], sizes = [16, 16], strides = [1, 1]} : vector<16x192xf32> to vector<16x16xf32>
    %3 = vector.extract_strided_slice %1 {offsets = [0, 64], sizes = [16, 16], strides = [1, 1]} : vector<16x192xf32> to vector<16x16xf32>
    %4 = vector.extract_strided_slice %1 {offsets = [0, 128], sizes = [16, 16], strides = [1, 1]} : vector<16x192xf32> to vector<16x16xf32>
    %cst = arith.constant dense<0.000000e+00> : vector<16x16xf32>
    %5 = tpu.matmul %2, %3, %cst {dimension_numbers = #tpu.dot_dimension_numbers<[1], [1], [0], [0], [0, 0, 1, 0], [], []>} : vector<16x16xf32>, vector<16x16xf32>, vector<16x16xf32> -> vector<16x16xf32>
    %cst_2 = arith.constant 2.500000e-01 : f32
    %6 = vector.broadcast %cst_2 : f32 to vector<16x16xf32>
    %7 = arith.mulf %5, %6 : vector<16x16xf32>
    %c0_3 = arith.constant 0 : index
    %c0_4 = arith.constant 0 : index
    %c0_5 = arith.constant 0 : index
    %8 = vector.load %arg2[%c0_3, %c0_4, %c0_5] : memref<4x16x16xf32, #tpu.memory_space<vmem>>, vector<1x16x16xf32>
    %9 = vector.shape_cast %8 : vector<1x16x16xf32> to vector<16x16xf32>
    %10 = arith.addf %7, %9 : vector<16x16xf32>
    %cst_6 = arith.constant dense<0xFF800000> : vector<16xf32>
    %11 = vector.multi_reduction <maximumf>, %10, %cst_6 [1] : vector<16x16xf32> to vector<16xf32>
    %12 = vector.shape_cast %11 : vector<16xf32> to vector<16x1xf32>
    %13 = vector.broadcast %12 : vector<16x1xf32> to vector<16x16xf32>
    %14 = arith.subf %10, %13 : vector<16x16xf32>
    %15 = math.exp %14 : vector<16x16xf32>
    %cst_7 = arith.constant dense<0.000000e+00> : vector<16xf32>
    %16 = vector.multi_reduction <add>, %15, %cst_7 [1] : vector<16x16xf32> to vector<16xf32>
    %17 = vector.shape_cast %16 : vector<16xf32> to vector<16x1xf32>
    %18 = tpu.reciprocal %17 {approx = true} : vector<16x1xf32> -> vector<16x1xf32>
    %19 = vector.broadcast %18 : vector<16x1xf32> to vector<16x16xf32>
    %20 = arith.mulf %15, %19 : vector<16x16xf32>
    %cst_8 = arith.constant dense<0.000000e+00> : vector<16x16xf32>
    %21 = tpu.matmul %20, %4, %cst_8 {dimension_numbers = #tpu.dot_dimension_numbers<[1], [0], [0], [1], [0, 0, 1, 1], [], []>} : vector<16x16xf32>, vector<16x16xf32>, vector<16x16xf32> -> vector<16x16xf32>
    %c0_9 = arith.constant 0 : index
    %c0_10 = arith.constant 0 : index
    %c0_11 = arith.constant 0 : index
    %c0_12 = arith.constant 0 : index
    %22 = vector.load %arg4[%c0_9, %c0_10, %c0_11, %c0_12] : memref<1x4x16x16xf32, #tpu.memory_space<vmem>>, vector<1x1x16x16xf32>
    %23 = vector.shape_cast %22 : vector<1x1x16x16xf32> to vector<16x16xf32>
    %24 = vector.shape_cast %20 : vector<16x16xf32> to vector<1x1x16x16xf32>
    tpu.vector_store %arg4[%c0_9, %c0_10, %c0_11, %c0_12], %24 {strides = array<i32>} : memref<1x4x16x16xf32, #tpu.memory_space<vmem>>, vector<1x1x16x16xf32>,
    %25 = vector.extract_strided_slice %1 {offsets = [0, 16], sizes = [16, 16], strides = [1, 1]} : vector<16x192xf32> to vector<16x16xf32>
    %26 = vector.extract_strided_slice %1 {offsets = [0, 80], sizes = [16, 16], strides = [1, 1]} : vector<16x192xf32> to vector<16x16xf32>
    %27 = vector.extract_strided_slice %1 {offsets = [0, 144], sizes = [16, 16], strides = [1, 1]} : vector<16x192xf32> to vector<16x16xf32>
    %cst_13 = arith.constant dense<0.000000e+00> : vector<16x16xf32>
    %28 = tpu.matmul %25, %26, %cst_13 {dimension_numbers = #tpu.dot_dimension_numbers<[1], [1], [0], [0], [0, 0, 1, 0], [], []>} : vector<16x16xf32>, vector<16x16xf32>, vector<16x16xf32> -> vector<16x16xf32>
    %cst_14 = arith.constant 2.500000e-01 : f32
    %29 = vector.broadcast %cst_14 : f32 to vector<16x16xf32>
    %30 = arith.mulf %28, %29 : vector<16x16xf32>
    %c1 = arith.constant 1 : index
    %c0_15 = arith.constant 0 : index
    %c0_16 = arith.constant 0 : index
    %31 = vector.load %arg2[%c1, %c0_15, %c0_16] : memref<4x16x16xf32, #tpu.memory_space<vmem>>, vector<1x16x16xf32>
    %32 = vector.shape_cast %31 : vector<1x16x16xf32> to vector<16x16xf32>
    %33 = arith.addf %30, %32 : vector<16x16xf32>
    %cst_17 = arith.constant dense<0xFF800000> : vector<16xf32>
    %34 = vector.multi_reduction <maximumf>, %33, %cst_17 [1] : vector<16x16xf32> to vector<16xf32>
    %35 = vector.shape_cast %34 : vector<16xf32> to vector<16x1xf32>
    %36 = vector.broadcast %35 : vector<16x1xf32> to vector<16x16xf32>
    %37 = arith.subf %33, %36 : vector<16x16xf32>
    %38 = math.exp %37 : vector<16x16xf32>
    %cst_18 = arith.constant dense<0.000000e+00> : vector<16xf32>
    %39 = vector.multi_reduction <add>, %38, %cst_18 [1] : vector<16x16xf32> to vector<16xf32>
    %40 = vector.shape_cast %39 : vector<16xf32> to vector<16x1xf32>
    %41 = tpu.reciprocal %40 {approx = true} : vector<16x1xf32> -> vector<16x1xf32>
    %42 = vector.broadcast %41 : vector<16x1xf32> to vector<16x16xf32>
    %43 = arith.mulf %38, %42 : vector<16x16xf32>
    %cst_19 = arith.constant dense<0.000000e+00> : vector<16x16xf32>
    %44 = tpu.matmul %43, %27, %cst_19 {dimension_numbers = #tpu.dot_dimension_numbers<[1], [0], [0], [1], [0, 0, 1, 1], [], []>} : vector<16x16xf32>, vector<16x16xf32>, vector<16x16xf32> -> vector<16x16xf32>
    %c0_20 = arith.constant 0 : index
    %c1_21 = arith.constant 1 : index
    %c0_22 = arith.constant 0 : index
    %c0_23 = arith.constant 0 : index
    %45 = vector.load %arg4[%c0_20, %c1_21, %c0_22, %c0_23] : memref<1x4x16x16xf32, #tpu.memory_space<vmem>>, vector<1x1x16x16xf32>
    %46 = vector.shape_cast %45 : vector<1x1x16x16xf32> to vector<16x16xf32>
    %47 = vector.shape_cast %43 : vector<16x16xf32> to vector<1x1x16x16xf32>
    tpu.vector_store %arg4[%c0_20, %c1_21, %c0_22, %c0_23], %47 {strides = array<i32>} : memref<1x4x16x16xf32, #tpu.memory_space<vmem>>, vector<1x1x16x16xf32>,
    %48 = arith.addf %20, %43 : vector<16x16xf32>
    %49 = vector.extract_strided_slice %1 {offsets = [0, 32], sizes = [16, 16], strides = [1, 1]} : vector<16x192xf32> to vector<16x16xf32>
    %50 = vector.extract_strided_slice %1 {offsets = [0, 96], sizes = [16, 16], strides = [1, 1]} : vector<16x192xf32> to vector<16x16xf32>
    %51 = vector.extract_strided_slice %1 {offsets = [0, 160], sizes = [16, 16], strides = [1, 1]} : vector<16x192xf32> to vector<16x16xf32>
    %cst_24 = arith.constant dense<0.000000e+00> : vector<16x16xf32>
    %52 = tpu.matmul %49, %50, %cst_24 {dimension_numbers = #tpu.dot_dimension_numbers<[1], [1], [0], [0], [0, 0, 1, 0], [], []>} : vector<16x16xf32>, vector<16x16xf32>, vector<16x16xf32> -> vector<16x16xf32>
    %cst_25 = arith.constant 2.500000e-01 : f32
    %53 = vector.broadcast %cst_25 : f32 to vector<16x16xf32>
    %54 = arith.mulf %52, %53 : vector<16x16xf32>
    %c2 = arith.constant 2 : index
    %c0_26 = arith.constant 0 : index
    %c0_27 = arith.constant 0 : index
    %55 = vector.load %arg2[%c2, %c0_26, %c0_27] : memref<4x16x16xf32, #tpu.memory_space<vmem>>, vector<1x16x16xf32>
    %56 = vector.shape_cast %55 : vector<1x16x16xf32> to vector<16x16xf32>
    %57 = arith.addf %54, %56 : vector<16x16xf32>
    %cst_28 = arith.constant dense<0xFF800000> : vector<16xf32>
    %58 = vector.multi_reduction <maximumf>, %57, %cst_28 [1] : vector<16x16xf32> to vector<16xf32>
    %59 = vector.shape_cast %58 : vector<16xf32> to vector<16x1xf32>
    %60 = vector.broadcast %59 : vector<16x1xf32> to vector<16x16xf32>
    %61 = arith.subf %57, %60 : vector<16x16xf32>
    %62 = math.exp %61 : vector<16x16xf32>
    %cst_29 = arith.constant dense<0.000000e+00> : vector<16xf32>
    %63 = vector.multi_reduction <add>, %62, %cst_29 [1] : vector<16x16xf32> to vector<16xf32>
    %64 = vector.shape_cast %63 : vector<16xf32> to vector<16x1xf32>
    %65 = tpu.reciprocal %64 {approx = true} : vector<16x1xf32> -> vector<16x1xf32>
    %66 = vector.broadcast %65 : vector<16x1xf32> to vector<16x16xf32>
    %67 = arith.mulf %62, %66 : vector<16x16xf32>
    %cst_30 = arith.constant dense<0.000000e+00> : vector<16x16xf32>
    %68 = tpu.matmul %67, %51, %cst_30 {dimension_numbers = #tpu.dot_dimension_numbers<[1], [0], [0], [1], [0, 0, 1, 1], [], []>} : vector<16x16xf32>, vector<16x16xf32>, vector<16x16xf32> -> vector<16x16xf32>
    %c0_31 = arith.constant 0 : index
    %c2_32 = arith.constant 2 : index
    %c0_33 = arith.constant 0 : index
    %c0_34 = arith.constant 0 : index
    %69 = vector.load %arg4[%c0_31, %c2_32, %c0_33, %c0_34] : memref<1x4x16x16xf32, #tpu.memory_space<vmem>>, vector<1x1x16x16xf32>
    %70 = vector.shape_cast %69 : vector<1x1x16x16xf32> to vector<16x16xf32>
    %71 = vector.shape_cast %67 : vector<16x16xf32> to vector<1x1x16x16xf32>
    tpu.vector_store %arg4[%c0_31, %c2_32, %c0_33, %c0_34], %71 {strides = array<i32>} : memref<1x4x16x16xf32, #tpu.memory_space<vmem>>, vector<1x1x16x16xf32>,
    %72 = arith.addf %48, %67 : vector<16x16xf32>
    %73 = vector.extract_strided_slice %1 {offsets = [0, 48], sizes = [16, 16], strides = [1, 1]} : vector<16x192xf32> to vector<16x16xf32>
    %74 = vector.extract_strided_slice %1 {offsets = [0, 112], sizes = [16, 16], strides = [1, 1]} : vector<16x192xf32> to vector<16x16xf32>
    %75 = vector.extract_strided_slice %1 {offsets = [0, 176], sizes = [16, 16], strides = [1, 1]} : vector<16x192xf32> to vector<16x16xf32>
    %cst_35 = arith.constant dense<0.000000e+00> : vector<16x16xf32>
    %76 = tpu.matmul %73, %74, %cst_35 {dimension_numbers = #tpu.dot_dimension_numbers<[1], [1], [0], [0], [0, 0, 1, 0], [], []>} : vector<16x16xf32>, vector<16x16xf32>, vector<16x16xf32> -> vector<16x16xf32>
    %cst_36 = arith.constant 2.500000e-01 : f32
    %77 = vector.broadcast %cst_36 : f32 to vector<16x16xf32>
    %78 = arith.mulf %76, %77 : vector<16x16xf32>
    %c3 = arith.constant 3 : index
    %c0_37 = arith.constant 0 : index
    %c0_38 = arith.constant 0 : index
    %79 = vector.load %arg2[%c3, %c0_37, %c0_38] : memref<4x16x16xf32, #tpu.memory_space<vmem>>, vector<1x16x16xf32>
    %80 = vector.shape_cast %79 : vector<1x16x16xf32> to vector<16x16xf32>
    %81 = arith.addf %78, %80 : vector<16x16xf32>
    %cst_39 = arith.constant dense<0xFF800000> : vector<16xf32>
    %82 = vector.multi_reduction <maximumf>, %81, %cst_39 [1] : vector<16x16xf32> to vector<16xf32>
    %83 = vector.shape_cast %82 : vector<16xf32> to vector<16x1xf32>
    %84 = vector.broadcast %83 : vector<16x1xf32> to vector<16x16xf32>
    %85 = arith.subf %81, %84 : vector<16x16xf32>
    %86 = math.exp %85 : vector<16x16xf32>
    %cst_40 = arith.constant dense<0.000000e+00> : vector<16xf32>
    %87 = vector.multi_reduction <add>, %86, %cst_40 [1] : vector<16x16xf32> to vector<16xf32>
    %88 = vector.shape_cast %87 : vector<16xf32> to vector<16x1xf32>
    %89 = tpu.reciprocal %88 {approx = true} : vector<16x1xf32> -> vector<16x1xf32>
    %90 = vector.broadcast %89 : vector<16x1xf32> to vector<16x16xf32>
    %91 = arith.mulf %86, %90 : vector<16x16xf32>
    %cst_41 = arith.constant dense<0.000000e+00> : vector<16x16xf32>
    %92 = tpu.matmul %91, %75, %cst_41 {dimension_numbers = #tpu.dot_dimension_numbers<[1], [0], [0], [1], [0, 0, 1, 1], [], []>} : vector<16x16xf32>, vector<16x16xf32>, vector<16x16xf32> -> vector<16x16xf32>
    %c0_42 = arith.constant 0 : index
    %c3_43 = arith.constant 3 : index
    %c0_44 = arith.constant 0 : index
    %c0_45 = arith.constant 0 : index
    %93 = vector.load %arg4[%c0_42, %c3_43, %c0_44, %c0_45] : memref<1x4x16x16xf32, #tpu.memory_space<vmem>>, vector<1x1x16x16xf32>
    %94 = vector.shape_cast %93 : vector<1x1x16x16xf32> to vector<16x16xf32>
    %95 = vector.shape_cast %91 : vector<16x16xf32> to vector<1x1x16x16xf32>
    tpu.vector_store %arg4[%c0_42, %c3_43, %c0_44, %c0_45], %95 {strides = array<i32>} : memref<1x4x16x16xf32, #tpu.memory_space<vmem>>, vector<1x1x16x16xf32>,
    %96 = arith.addf %72, %91 : vector<16x16xf32>
    %97 = tpu.concatenate %21, %44, %68, %92 in 1 : vector<16x16xf32>, vector<16x16xf32>, vector<16x16xf32>, vector<16x16xf32> -> vector<16x64xf32>
    %c0_46 = arith.constant 0 : index
    %c0_47 = arith.constant 0 : index
    %c0_48 = arith.constant 0 : index
    %98 = vector.load %arg3[%c0_46, %c0_47, %c0_48] : memref<1x16x64xf32, #tpu.memory_space<vmem>>, vector<1x16x64xf32>
    %99 = vector.shape_cast %98 : vector<1x16x64xf32> to vector<16x64xf32>
    %100 = vector.shape_cast %97 : vector<16x64xf32> to vector<1x16x64xf32>
    tpu.vector_store %arg3[%c0_46, %c0_47, %c0_48], %100 {strides = array<i32>} : memref<1x16x64xf32, #tpu.memory_space<vmem>>, vector<1x16x64xf32>,
    %cst_49 = arith.constant 2.500000e-01 : f32
    %101 = vector.broadcast %cst_49 : f32 to vector<16x16xf32>
    %102 = arith.mulf %96, %101 : vector<16x16xf32>
    %c0_50 = arith.constant 0 : index
    %c0_51 = arith.constant 0 : index
    %c0_52 = arith.constant 0 : index
    %103 = vector.load %arg5[%c0_50, %c0_51, %c0_52] : memref<1x16x16xf32, #tpu.memory_space<vmem>>, vector<1x16x16xf32>
    %104 = vector.shape_cast %103 : vector<1x16x16xf32> to vector<16x16xf32>
    %105 = vector.shape_cast %102 : vector<16x16xf32> to vector<1x16x16xf32>
    tpu.vector_store %arg5[%c0_50, %c0_51, %c0_52], %105 {strides = array<i32>} : memref<1x16x16xf32, #tpu.memory_space<vmem>>, vector<1x16x16xf32>,
    %cst_53 = arith.constant dense<0.000000e+00> : vector<16xf32>
    %106 = vector.multi_reduction <add>, %102, %cst_53 [0] : vector<16x16xf32> to vector<16xf32>
    %107 = vector.shape_cast %106 : vector<16xf32> to vector<1x16xf32>
    %cst_54 = arith.constant 1.600000e+01 : f32
    %108 = vector.broadcast %cst_54 : f32 to vector<1x16xf32>
    %109 = arith.divf %107, %108 : vector<1x16xf32>
    %c0_55 = arith.constant 0 : index
    %c0_56 = arith.constant 0 : index
    %c0_57 = arith.constant 0 : index
    %110 = vector.load %arg6[%c0_55, %c0_56, %c0_57] : memref<1x1x16xf32, #tpu.memory_space<vmem>>, vector<1x1x16xf32>
    %111 = vector.shape_cast %110 : vector<1x1x16xf32> to vector<1x16xf32>
    %112 = vector.shape_cast %109 : vector<1x16xf32> to vector<1x1x16xf32>
    tpu.vector_store %arg6[%c0_55, %c0_56, %c0_57], %112 {strides = array<i32>} : memref<1x1x16xf32, #tpu.memory_space<vmem>>, vector<1x1x16xf32>,
    return
  }
  func.func @transform_0(%arg0: i32) -> (i32, i32, i32) {
    %c0_i32 = arith.constant 0 : i32
    %c0_i32_0 = arith.constant 0 : i32
    %c0_i32_1 = arith.constant 0 : i32
    return %arg0, %c0_i32, %c0_i32_0 : i32, i32, i32
  }
  func.func @transform_1(%arg0: i32) -> (i32, i32, i32) {
    %c0_i32 = arith.constant 0 : i32
    %c0_i32_0 = arith.constant 0 : i32
    %c0_i32_1 = arith.constant 0 : i32
    %c0_i32_2 = arith.constant 0 : i32
    return %c0_i32, %c0_i32_0, %c0_i32_1 : i32, i32, i32
  }
  func.func @transform_2(%arg0: i32) -> (i32, i32, i32) {
    %c0_i32 = arith.constant 0 : i32
    %c0_i32_0 = arith.constant 0 : i32
    %c0_i32_1 = arith.constant 0 : i32
    return %arg0, %c0_i32, %c0_i32_0 : i32, i32, i32
  }
  func.func @transform_3(%arg0: i32) -> (i32, i32, i32, i32) {
    %c0_i32 = arith.constant 0 : i32
    %c0_i32_0 = arith.constant 0 : i32
    %c0_i32_1 = arith.constant 0 : i32
    %c0_i32_2 = arith.constant 0 : i32
    return %arg0, %c0_i32, %c0_i32_0, %c0_i32_1 : i32, i32, i32, i32
  }
  func.func @transform_4(%arg0: i32) -> (i32, i32, i32) {
    %c0_i32 = arith.constant 0 : i32
    %c0_i32_0 = arith.constant 0 : i32
    %c0_i32_1 = arith.constant 0 : i32
    return %arg0, %c0_i32, %c0_i32_0 : i32, i32, i32
  }
  func.func @transform_5(%arg0: i32) -> (i32, i32, i32) {
    %c0_i32 = arith.constant 0 : i32
    %c0_i32_0 = arith.constant 0 : i32
    %c0_i32_1 = arith.constant 0 : i32
    return %arg0, %c0_i32, %c0_i32_0 : i32, i32, i32
  }
}

module attributes {stable_mosaic.version = 11 : i64} {
  func.func @_mm_res_ln_kernel(%arg0: i32, %arg1: i32, %arg2: i32, %arg3: memref<32x128xf32, #tpu.memory_space<vmem>>, %arg4: memref<128x64xf32, #tpu.memory_space<vmem>>, %arg5: memref<1x64xf32, #tpu.memory_space<vmem>>, %arg6: memref<32x64xf32, #tpu.memory_space<vmem>>, %arg7: memref<1x64xf32, #tpu.memory_space<vmem>>, %arg8: memref<1x64xf32, #tpu.memory_space<vmem>>, %arg9: memref<32x64xf32, #tpu.memory_space<vmem>>, %arg10: memref<32x64xf32, #tpu.memory_space<vmem>>) attributes {dimension_semantics = [#tpu.dimension_semantics<parallel>, #tpu.dimension_semantics<parallel>, #tpu.dimension_semantics<arbitrary>], iteration_bounds = array<i64: 1, 1, 1>, scalar_prefetch = 0 : i64, scratch_operands = 1 : i64, tpu.core_type = #tpu.core_type<tc>, window_params = [{transform_indices = @transform_0, window_bounds = array<i64: 32, 128>}, {transform_indices = @transform_1, window_bounds = array<i64: 128, 64>}, {transform_indices = @transform_2, window_bounds = array<i64: 1, 64>}, {transform_indices = @transform_3, window_bounds = array<i64: 32, 64>}, {transform_indices = @transform_4, window_bounds = array<i64: 1, 64>}, {transform_indices = @transform_5, window_bounds = array<i64: 1, 64>}, {transform_indices = @transform_6, window_bounds = array<i64: 32, 64>}]} {
    %c0_i32 = arith.constant 0 : i32
    %0 = arith.cmpi eq, %arg2, %c0_i32 : i32
    %1 = arith.extui %0 : i1 to i32
    %c0_i32_0 = arith.constant 0 : i32
    %2 = arith.cmpi ne, %1, %c0_i32_0 : i32
    scf.if %2 {
      %cst_10 = arith.constant 0.000000e+00 : f32
      %12 = vector.broadcast %cst_10 : f32 to vector<32x64xf32>
      %c0_11 = arith.constant 0 : index
      %c0_12 = arith.constant 0 : index
      %13 = vector.load %arg10[%c0_11, %c0_12] : memref<32x64xf32, #tpu.memory_space<vmem>>, vector<32x64xf32>
      tpu.vector_store %arg10[%c0_11, %c0_12], %12 {strides = array<i32>} : memref<32x64xf32, #tpu.memory_space<vmem>>, vector<32x64xf32>,
    } else {
    }
    %c0 = arith.constant 0 : index
    %c0_1 = arith.constant 0 : index
    %3 = vector.load %arg10[%c0, %c0_1] : memref<32x64xf32, #tpu.memory_space<vmem>>, vector<32x64xf32>
    %c0_2 = arith.constant 0 : index
    %c0_3 = arith.constant 0 : index
    %4 = vector.load %arg3[%c0_2, %c0_3] : memref<32x128xf32, #tpu.memory_space<vmem>>, vector<32x128xf32>
    %c0_4 = arith.constant 0 : index
    %c0_5 = arith.constant 0 : index
    %5 = vector.load %arg4[%c0_4, %c0_5] : memref<128x64xf32, #tpu.memory_space<vmem>>, vector<128x64xf32>
    %cst = arith.constant dense<0.000000e+00> : vector<32x64xf32>
    %6 = tpu.matmul %4, %5, %cst {dimension_numbers = #tpu.dot_dimension_numbers<[1], [0], [0], [1], [0, 0, 1, 1], [], []>} : vector<32x128xf32>, vector<128x64xf32>, vector<32x64xf32> -> vector<32x64xf32>
    %7 = arith.addf %3, %6 : vector<32x64xf32>
    %c0_6 = arith.constant 0 : index
    %c0_7 = arith.constant 0 : index
    %8 = vector.load %arg10[%c0_6, %c0_7] : memref<32x64xf32, #tpu.memory_space<vmem>>, vector<32x64xf32>
    tpu.vector_store %arg10[%c0_6, %c0_7], %7 {strides = array<i32>} : memref<32x64xf32, #tpu.memory_space<vmem>>, vector<32x64xf32>,
    %c0_i32_8 = arith.constant 0 : i32
    %9 = arith.cmpi eq, %arg2, %c0_i32_8 : i32
    %10 = arith.extui %9 : i1 to i32
    %c0_i32_9 = arith.constant 0 : i32
    %11 = arith.cmpi ne, %10, %c0_i32_9 : i32
    scf.if %11 {
      %c0_10 = arith.constant 0 : index
      %c0_11 = arith.constant 0 : index
      %12 = vector.load %arg10[%c0_10, %c0_11] : memref<32x64xf32, #tpu.memory_space<vmem>>, vector<32x64xf32>
      %c0_12 = arith.constant 0 : index
      %c0_13 = arith.constant 0 : index
      %13 = vector.load %arg5[%c0_12, %c0_13] : memref<1x64xf32, #tpu.memory_space<vmem>>, vector<1x64xf32>
      %14 = vector.broadcast %13 : vector<1x64xf32> to vector<32x64xf32>
      %15 = arith.addf %12, %14 : vector<32x64xf32>
      %c0_14 = arith.constant 0 : index
      %c0_15 = arith.constant 0 : index
      %16 = vector.load %arg6[%c0_14, %c0_15] : memref<32x64xf32, #tpu.memory_space<vmem>>, vector<32x64xf32>
      %17 = arith.addf %15, %16 : vector<32x64xf32>
      %cst_16 = arith.constant dense<0.000000e+00> : vector<32xf32>
      %18 = vector.multi_reduction <add>, %17, %cst_16 [1] : vector<32x64xf32> to vector<32xf32>
      %19 = vector.shape_cast %18 : vector<32xf32> to vector<32x1xf32>
      %cst_17 = arith.constant 6.400000e+01 : f32
      %20 = vector.broadcast %cst_17 : f32 to vector<32x1xf32>
      %21 = arith.divf %19, %20 : vector<32x1xf32>
      %22 = vector.broadcast %21 : vector<32x1xf32> to vector<32x64xf32>
      %23 = arith.subf %17, %22 : vector<32x64xf32>
      %24 = arith.mulf %23, %23 : vector<32x64xf32>
      %cst_18 = arith.constant dense<0.000000e+00> : vector<32xf32>
      %25 = vector.multi_reduction <add>, %24, %cst_18 [1] : vector<32x64xf32> to vector<32xf32>
      %26 = vector.shape_cast %25 : vector<32xf32> to vector<32x1xf32>
      %cst_19 = arith.constant 6.400000e+01 : f32
      %27 = vector.broadcast %cst_19 : f32 to vector<32x1xf32>
      %28 = arith.divf %26, %27 : vector<32x1xf32>
      %29 = vector.broadcast %21 : vector<32x1xf32> to vector<32x64xf32>
      %30 = arith.subf %17, %29 : vector<32x64xf32>
      %cst_20 = arith.constant 9.99999974E-6 : f32
      %31 = vector.broadcast %cst_20 : f32 to vector<32x1xf32>
      %32 = arith.addf %28, %31 : vector<32x1xf32>
      %33 = math.rsqrt %32 : vector<32x1xf32>
      %34 = vector.broadcast %33 : vector<32x1xf32> to vector<32x64xf32>
      %35 = arith.mulf %30, %34 : vector<32x64xf32>
      %c0_21 = arith.constant 0 : index
      %c0_22 = arith.constant 0 : index
      %36 = vector.load %arg7[%c0_21, %c0_22] : memref<1x64xf32, #tpu.memory_space<vmem>>, vector<1x64xf32>
      %37 = vector.broadcast %36 : vector<1x64xf32> to vector<32x64xf32>
      %38 = arith.mulf %35, %37 : vector<32x64xf32>
      %c0_23 = arith.constant 0 : index
      %c0_24 = arith.constant 0 : index
      %39 = vector.load %arg8[%c0_23, %c0_24] : memref<1x64xf32, #tpu.memory_space<vmem>>, vector<1x64xf32>
      %40 = vector.broadcast %39 : vector<1x64xf32> to vector<32x64xf32>
      %41 = arith.addf %38, %40 : vector<32x64xf32>
      %c0_25 = arith.constant 0 : index
      %c0_26 = arith.constant 0 : index
      %42 = vector.load %arg9[%c0_25, %c0_26] : memref<32x64xf32, #tpu.memory_space<vmem>>, vector<32x64xf32>
      tpu.vector_store %arg9[%c0_25, %c0_26], %41 {strides = array<i32>} : memref<32x64xf32, #tpu.memory_space<vmem>>, vector<32x64xf32>,
    } else {
    }
    return
  }
  func.func @transform_0(%arg0: i32, %arg1: i32, %arg2: i32) -> (i32, i32) {
    %c0_i32 = arith.constant 0 : i32
    return %arg0, %arg2 : i32, i32
  }
  func.func @transform_1(%arg0: i32, %arg1: i32, %arg2: i32) -> (i32, i32) {
    %c0_i32 = arith.constant 0 : i32
    return %arg2, %arg1 : i32, i32
  }
  func.func @transform_2(%arg0: i32, %arg1: i32, %arg2: i32) -> (i32, i32) {
    %c0_i32 = arith.constant 0 : i32
    %c0_i32_0 = arith.constant 0 : i32
    return %c0_i32, %arg1 : i32, i32
  }
  func.func @transform_3(%arg0: i32, %arg1: i32, %arg2: i32) -> (i32, i32) {
    %c0_i32 = arith.constant 0 : i32
    return %arg0, %arg1 : i32, i32
  }
  func.func @transform_4(%arg0: i32, %arg1: i32, %arg2: i32) -> (i32, i32) {
    %c0_i32 = arith.constant 0 : i32
    %c0_i32_0 = arith.constant 0 : i32
    return %c0_i32, %arg1 : i32, i32
  }
  func.func @transform_5(%arg0: i32, %arg1: i32, %arg2: i32) -> (i32, i32) {
    %c0_i32 = arith.constant 0 : i32
    %c0_i32_0 = arith.constant 0 : i32
    return %c0_i32, %arg1 : i32, i32
  }
  func.func @transform_6(%arg0: i32, %arg1: i32, %arg2: i32) -> (i32, i32) {
    %c0_i32 = arith.constant 0 : i32
    return %arg0, %arg1 : i32, i32
  }
}

module attributes {stable_mosaic.version = 11 : i64} {
  func.func @_mm_kernel(%arg0: i32, %arg1: i32, %arg2: i32, %arg3: memref<2x64xf32, #tpu.memory_space<vmem>>, %arg4: memref<64x4xf32, #tpu.memory_space<vmem>>, %arg5: memref<1x4xf32, #tpu.memory_space<vmem>>, %arg6: memref<2x4xf32, #tpu.memory_space<vmem>>, %arg7: memref<2x4xf32, #tpu.memory_space<vmem>>) attributes {dimension_semantics = [#tpu.dimension_semantics<parallel>, #tpu.dimension_semantics<parallel>, #tpu.dimension_semantics<arbitrary>], iteration_bounds = array<i64: 1, 1, 1>, scalar_prefetch = 0 : i64, scratch_operands = 1 : i64, tpu.core_type = #tpu.core_type<tc>, window_params = [{transform_indices = @transform_0, window_bounds = array<i64: 2, 64>}, {transform_indices = @transform_1, window_bounds = array<i64: 64, 4>}, {transform_indices = @transform_2, window_bounds = array<i64: 1, 4>}, {transform_indices = @transform_3, window_bounds = array<i64: 2, 4>}]} {
    %c0_i32 = arith.constant 0 : i32
    %0 = arith.cmpi eq, %arg2, %c0_i32 : i32
    %1 = arith.extui %0 : i1 to i32
    %c0_i32_0 = arith.constant 0 : i32
    %2 = arith.cmpi ne, %1, %c0_i32_0 : i32
    scf.if %2 {
      %cst_10 = arith.constant 0.000000e+00 : f32
      %12 = vector.broadcast %cst_10 : f32 to vector<2x4xf32>
      %c0_11 = arith.constant 0 : index
      %c0_12 = arith.constant 0 : index
      %13 = vector.load %arg7[%c0_11, %c0_12] : memref<2x4xf32, #tpu.memory_space<vmem>>, vector<2x4xf32>
      tpu.vector_store %arg7[%c0_11, %c0_12], %12 {strides = array<i32>} : memref<2x4xf32, #tpu.memory_space<vmem>>, vector<2x4xf32>,
    } else {
    }
    %c0 = arith.constant 0 : index
    %c0_1 = arith.constant 0 : index
    %3 = vector.load %arg7[%c0, %c0_1] : memref<2x4xf32, #tpu.memory_space<vmem>>, vector<2x4xf32>
    %c0_2 = arith.constant 0 : index
    %c0_3 = arith.constant 0 : index
    %4 = vector.load %arg3[%c0_2, %c0_3] : memref<2x64xf32, #tpu.memory_space<vmem>>, vector<2x64xf32>
    %c0_4 = arith.constant 0 : index
    %c0_5 = arith.constant 0 : index
    %5 = vector.load %arg4[%c0_4, %c0_5] : memref<64x4xf32, #tpu.memory_space<vmem>>, vector<64x4xf32>
    %cst = arith.constant dense<0.000000e+00> : vector<2x4xf32>
    %6 = tpu.matmul %4, %5, %cst {dimension_numbers = #tpu.dot_dimension_numbers<[1], [0], [0], [1], [0, 0, 1, 1], [], []>} : vector<2x64xf32>, vector<64x4xf32>, vector<2x4xf32> -> vector<2x4xf32>
    %7 = arith.addf %3, %6 : vector<2x4xf32>
    %c0_6 = arith.constant 0 : index
    %c0_7 = arith.constant 0 : index
    %8 = vector.load %arg7[%c0_6, %c0_7] : memref<2x4xf32, #tpu.memory_space<vmem>>, vector<2x4xf32>
    tpu.vector_store %arg7[%c0_6, %c0_7], %7 {strides = array<i32>} : memref<2x4xf32, #tpu.memory_space<vmem>>, vector<2x4xf32>,
    %c0_i32_8 = arith.constant 0 : i32
    %9 = arith.cmpi eq, %arg2, %c0_i32_8 : i32
    %10 = arith.extui %9 : i1 to i32
    %c0_i32_9 = arith.constant 0 : i32
    %11 = arith.cmpi ne, %10, %c0_i32_9 : i32
    scf.if %11 {
      %c0_10 = arith.constant 0 : index
      %c0_11 = arith.constant 0 : index
      %12 = vector.load %arg7[%c0_10, %c0_11] : memref<2x4xf32, #tpu.memory_space<vmem>>, vector<2x4xf32>
      %c0_12 = arith.constant 0 : index
      %c0_13 = arith.constant 0 : index
      %13 = vector.load %arg5[%c0_12, %c0_13] : memref<1x4xf32, #tpu.memory_space<vmem>>, vector<1x4xf32>
      %14 = vector.broadcast %13 : vector<1x4xf32> to vector<2x4xf32>
      %15 = arith.addf %12, %14 : vector<2x4xf32>
      %c0_14 = arith.constant 0 : index
      %c0_15 = arith.constant 0 : index
      %16 = vector.load %arg6[%c0_14, %c0_15] : memref<2x4xf32, #tpu.memory_space<vmem>>, vector<2x4xf32>
      tpu.vector_store %arg6[%c0_14, %c0_15], %15 {strides = array<i32>} : memref<2x4xf32, #tpu.memory_space<vmem>>, vector<2x4xf32>,
    } else {
    }
    return
  }
  func.func @transform_0(%arg0: i32, %arg1: i32, %arg2: i32) -> (i32, i32) {
    %c0_i32 = arith.constant 0 : i32
    return %arg0, %arg2 : i32, i32
  }
  func.func @transform_1(%arg0: i32, %arg1: i32, %arg2: i32) -> (i32, i32) {
    %c0_i32 = arith.constant 0 : i32
    return %arg2, %arg1 : i32, i32
  }
  func.func @transform_2(%arg0: i32, %arg1: i32, %arg2: i32) -> (i32, i32) {
    %c0_i32 = arith.constant 0 : i32
    %c0_i32_0 = arith.constant 0 : i32
    return %c0_i32, %arg1 : i32, i32
  }
  func.func @transform_3(%arg0: i32, %arg1: i32, %arg2: i32) -> (i32, i32) {
    %c0_i32 = arith.constant 0 : i32
    return %arg0, %arg1 : i32, i32
  }
}

</mosaic_0001>

<llo_original>
// kernel: sam_forward.12
$region0: #{sam_forward.12}
  #allocation0 [shape = 'u32[]', space=smem, size = 0x4, offset = 0x4, fixed_abs, tag = 'smem constant byte address 0x4 - core index']
  #allocation1 [shape = 'u32[144,128]{1,0:T(1,128)}', space=vmem, size = 0x12000, scoped, tag = 'internal scratch']
  %s0 = inlined_call_operand.vmem [shape: f32[2,16,192], index: 0, kind: input, shape index: {}]
  %s1 = inlined_call_operand.vmem [shape: f32[192,64], index: 1, kind: input, shape index: {}]
  %s2 = inlined_call_operand.vmem [shape: f32[1,64], index: 2, kind: input, shape index: {}]
  %s3 = inlined_call_operand.vmem [shape: f32[16,64], index: 3, kind: input, shape index: {}]
  %s4 = inlined_call_operand.vmem [shape: f32[2,16,64], index: 4, kind: output, shape index: {}]
  %s5 = sld [smem:[#allocation0]]
  $region49: #{sam_forward.12} parent=0
    _
  %s7 = ssub.s32 1, %s5
  %s8 = scalar_select 0, %s7, %s5
  loop: start=0, step=1, limit=4
  $region2: #{sam_forward.12} parent=0 // loop_pre_header
    _
  $region3: #{sam_forward.12} parent=0 // loop_header
    %s10 = sphi 0, %s14
    %p11 = scmp.ge.s32.totalorder %s10, 4
    %s20 = sphi 0, %s22
    %s23 = sphi 0, %s20
    %s24 = sphi 0, %s23
    %s40 = sphi 0, %s24
    %s44 = sphi 0, %s44
    %s46 = sphi 0, %s44
    %s47 = sphi 0, %s46
    %s61 = sphi 0, %s47
    %s65 = sphi 0, %s65
    %s67 = sphi 0, %s65
    %s68 = sphi 0, %s67
    %s82 = sphi 0, %s68
    %s86 = sphi 0, %s86
    %s88 = sphi 0, %s86
    %s89 = sphi 0, %s88
    %s103 = sphi 0, %s89
    %s109 = sphi 0, %s111
    %s112 = sphi 0, %s109
    %s113 = sphi 0, %s112
    %s129 = sphi 0, %s113
  $region4: #{sam_forward.12} parent=0 // loop_header_branch
    %13 = sbr.rel (%p11) target = $region8
  $region5: #{sam_forward.12} parent=0 // loop_body
    %s15 = ssub.s32 %s10, 1
    %s16 = ssub.s32 %s10, 2
    %s17 = sadd.s32 %s10, 1
    %s18 = ssub.s32 %s10, %s17
    %p19 = scmp.eq.s32.totalorder %s18, 0
    %s21 = sadd.s32 %s20, 1
    %s22 = scalar_select %p19, %s20, %s21
    %p25 = pneg %p19
    %p26 = scmp.eq.s32.totalorder %s10, 1
    %p27 = por %p25, %p26
    %p28 = scmp.ne.s32.totalorder %s20, %s23
    %p29 = scmp.eq.s32.totalorder %s10, 0
    %p30 = por %p28, %p29
    %p31 = scmp.ne.s32.totalorder %s20, %s23
    %p32 = scmp.eq.s32.totalorder %s15, 1
    %p33 = por %p31, %p32
    %p34 = scmp.ne.s32.totalorder %s23, %s24
    %p35 = scmp.eq.s32.totalorder %s15, 0
    %p36 = por %p34, %p35
    %p37 = scmp.ne.s32.totalorder %s23, %s24
    %p38 = scmp.eq.s32.totalorder %s16, 1
    %p39 = por %p37, %p38
    %p41 = scmp.ne.s32.totalorder %s24, %s40
    %p42 = scmp.eq.s32.totalorder %s16, 0
    %p43 = por %p41, %p42
    %s45 = sadd.s32 %s44, 1
    %p48 = scmp.eq.s32.totalorder %s10, 1
    %p49 = scmp.ne.s32.totalorder %s44, %s46
    %p50 = scmp.eq.s32.totalorder %s10, 0
    %p51 = por %p49, %p50
    %p52 = scmp.ne.s32.totalorder %s44, %s46
    %p53 = scmp.eq.s32.totalorder %s15, 1
    %p54 = por %p52, %p53
    %p55 = scmp.ne.s32.totalorder %s46, %s47
    %p56 = scmp.eq.s32.totalorder %s15, 0
    %p57 = por %p55, %p56
    %p58 = scmp.ne.s32.totalorder %s46, %s47
    %p59 = scmp.eq.s32.totalorder %s16, 1
    %p60 = por %p58, %p59
    %p62 = scmp.ne.s32.totalorder %s47, %s61
    %p63 = scmp.eq.s32.totalorder %s16, 0
    %p64 = por %p62, %p63
    %s66 = sadd.s32 %s65, 1
    %p69 = scmp.eq.s32.totalorder %s10, 1
    %p70 = scmp.ne.s32.totalorder %s65, %s67
    %p71 = scmp.eq.s32.totalorder %s10, 0
    %p72 = por %p70, %p71
    %p73 = scmp.ne.s32.totalorder %s65, %s67
    %p74 = scmp.eq.s32.totalorder %s15, 1
    %p75 = por %p73, %p74
    %p76 = scmp.ne.s32.totalorder %s67, %s68
    %p77 = scmp.eq.s32.totalorder %s15, 0
    %p78 = por %p76, %p77
    %p79 = scmp.ne.s32.totalorder %s67, %s68
    %p80 = scmp.eq.s32.totalorder %s16, 1
    %p81 = por %p79, %p80
    %p83 = scmp.ne.s32.totalorder %s68, %s82
    %p84 = scmp.eq.s32.totalorder %s16, 0
    %p85 = por %p83, %p84
    %s87 = sadd.s32 %s86, 1
    %p90 = scmp.eq.s32.totalorder %s10, 1
    %p91 = scmp.ne.s32.totalorder %s86, %s88
    %p92 = scmp.eq.s32.totalorder %s10, 0
    %p93 = por %p91, %p92
    %p94 = scmp.ne.s32.totalorder %s86, %s88
    %p95 = scmp.eq.s32.totalorder %s15, 1
    %p96 = por %p94, %p95
    %p97 = scmp.ne.s32.totalorder %s88, %s89
    %p98 = scmp.eq.s32.totalorder %s15, 0
    %p99 = por %p97, %p98
    %p100 = scmp.ne.s32.totalorder %s88, %s89
    %p101 = scmp.eq.s32.totalorder %s16, 1
    %p102 = por %p100, %p101
    %p104 = scmp.ne.s32.totalorder %s89, %s103
    %p105 = scmp.eq.s32.totalorder %s16, 0
    %p106 = por %p104, %p105
    %s107 = ssub.s32 %s10, %s17
    %p108 = scmp.eq.s32.totalorder %s107, 0
    %s110 = sadd.s32 %s109, 1
    %s111 = scalar_select %p108, %s109, %s110
    %p114 = pneg %p108
    %p115 = scmp.eq.s32.totalorder %s10, 1
    %p116 = por %p114, %p115
    %p117 = scmp.ne.s32.totalorder %s109, %s112
    %p118 = scmp.eq.s32.totalorder %s10, 0
    %p119 = por %p117, %p118
    %p120 = scmp.ne.s32.totalorder %s109, %s112
    %p121 = scmp.eq.s32.totalorder %s15, 1
    %p122 = por %p120, %p121
    %p123 = scmp.ne.s32.totalorder %s112, %s113
    %p124 = scmp.eq.s32.totalorder %s15, 0
    %p125 = por %p123, %p124
    %p126 = scmp.ne.s32.totalorder %s112, %s113
    %p127 = scmp.eq.s32.totalorder %s16, 1
    %p128 = por %p126, %p127
    %p130 = scmp.ne.s32.totalorder %s113, %s129
    %p131 = scmp.eq.s32.totalorder %s16, 0
    %p132 = por %p130, %p131
    %p133 = scmp.le.s32.totalorder 1, %s10
    %p134 = scmp.lt.s32.totalorder %s10, 3
    %p135 = pnand %p133, %p134
    %p136 = pneg %p135
    // Predicated region
    $region9: #{sam_forward.12} parent=5 // pred_check
      _
    $region10: #{sam_forward.12} parent=5 // pred_check_branch
      %138 = sbr.rel (%p135) target = $region12
    $region11: #{sam_forward.12} parent=5 // pred_region
      %s139 = ssub.s32 %s10, 1
      // Predicated region
      $region13: #{sam_forward.12} parent=11 // pred_check
        %p140 = pneg %p57
      $region14: #{sam_forward.12} parent=11 // pred_check_branch
        %142 = sbr.rel (%p140) target = $region16
      $region15: #{sam_forward.12} parent=11 // pred_region
        _
      $region16: #{sam_forward.12} parent=11 // pred_fallthru
        _
      // Predicated region
      $region17: #{sam_forward.12} parent=11 // pred_check
        %p143 = pneg %p78
      $region18: #{sam_forward.12} parent=11 // pred_check_branch
        %145 = sbr.rel (%p143) target = $region20
      $region19: #{sam_forward.12} parent=11 // pred_region
        _
      $region20: #{sam_forward.12} parent=11 // pred_fallthru
        _
      // Predicated region
      $region21: #{sam_forward.12} parent=11 // pred_check
        %p146 = pneg %p99
      $region22: #{sam_forward.12} parent=11 // pred_check_branch
        %148 = sbr.rel (%p146) target = $region24
      $region23: #{sam_forward.12} parent=11 // pred_region
        _
      $region24: #{sam_forward.12} parent=11 // pred_fallthru
        _
    $region12: #{sam_forward.12} parent=5 // pred_fallthru
      _
    %p149 = scmp.lt.s32.totalorder %s10, 2
    // Predicated region
    $region25: #{sam_forward.12} parent=5 // pred_check
      %p150 = pneg %p149
    $region26: #{sam_forward.12} parent=5 // pred_check_branch
      %152 = sbr.rel (%p150) target = $region28
    $region27: #{sam_forward.12} parent=5 // pred_region
      // Predicated region
      $region29: #{sam_forward.12} parent=27 // pred_check
        %p153 = pneg %p30
      $region30: #{sam_forward.12} parent=27 // pred_check_branch
        %155 = sbr.rel (%p153) target = $region32
      $region31: #{sam_forward.12} parent=27 // pred_region
        %p156 = scmp.lt.s32.totalorder %s10, 1
        %s157 = scalar_select %p156, %s10, 1
        %s158 = smul.addr %s157, 4
        %s159 = smul.addr %s158, 8
        %s160 = scalar_lea.vmem %s0, %s159
      $region32: #{sam_forward.12} parent=27 // pred_fallthru
        _
    $region28: #{sam_forward.12} parent=5 // pred_fallthru
      _
    %p161 = scmp.le.s32.totalorder 1, %s10
    %p162 = scmp.lt.s32.totalorder %s10, 3
    %p163 = pnand %p161, %p162
    %p164 = pneg %p163
    // Predicated region
    $region33: #{sam_forward.12} parent=5 // pred_check
      _
    $region34: #{sam_forward.12} parent=5 // pred_check_branch
      %166 = sbr.rel (%p163) target = $region36
    $region35: #{sam_forward.12} parent=5 // pred_region
      %s167 = ssub.s32 %s10, 1
      %p168 = scmp.lt.s32.totalorder %s15, 1
      %s169 = scalar_select %p168, %s15, 1
      %s170 = smul.addr %s169, 4
      %s171 = smul.addr %s170, 8
      %s172 = scalar_lea.vmem %s0, %s171
      %p173 = pneg %p36
      %p174 = pneg %p33
      %p175 = pneg %p57
      %p176 = pneg %p54
      %p177 = pneg %p78
      %p178 = pneg %p75
      %p179 = pneg %p99
      %p180 = pneg %p96
      %p181 = pneg %p125
      %p182 = pneg %p122
      %p183 = scmp.lt.s32.totalorder %s15, 1
      %s184 = scalar_select %p183, %s15, 1
      %s185 = smul.addr %s184, 2
      %s186 = smul.addr %s185, 8
      %s187 = scalar_lea.vmem %s4, %s186
      %p188 = scmp.lt.s32.totalorder %s15, 1
      %s189 = scalar_select %p188, %s15, 1
      %s190 = smul.addr %s189, 4
      %s191 = smul.addr %s190, 8
      %s192 = scalar_lea.vmem %s0, %s191
      %p193 = scmp.lt.s32.totalorder %s15, 1
      %s194 = scalar_select %p193, %s15, 1
      %s195 = smul.addr %s194, 2
      %s196 = smul.addr %s195, 8
      %s197 = scalar_lea.vmem %s4, %s196
      %v198 = vld [vmem:[%s192] sm:$0xff]
      %v199 = vld [vmem:[%s192 + $0x8] sm:$0xff]
      %v200 = vld [vmem:[%s192 + $0x10] sm:$0xff]
      %v201 = vld [vmem:[%s192 + $0x18] sm:$0xff]
      %v202 = vld [vmem:[%s1] sm:$0xff]
      %v203 = vld [vmem:[%s1 + $0x8] sm:$0xff]
      %v204 = vld [vmem:[%s1 + $0x10] sm:$0xff]
      %v205 = vld [vmem:[%s1 + $0x18] sm:$0xff]
      %v206 = vld [vmem:[%s1 + $0x20] sm:$0xff]
      %v207 = vld [vmem:[%s1 + $0x28] sm:$0xff]
      %v208 = vld [vmem:[%s1 + $0x30] sm:$0xff]
      %v209 = vld [vmem:[%s1 + $0x38] sm:$0xff]
      %v210 = vld [vmem:[%s1 + $0x40] sm:$0xff]
      %v211 = vld [vmem:[%s1 + $0x48] sm:$0xff]
      %v212 = vld [vmem:[%s1 + $0x50] sm:$0xff]
      %v213 = vld [vmem:[%s1 + $0x58] sm:$0xff]
      %v214 = vld [vmem:[%s1 + $0x60] sm:$0xff]
      %v215 = vld [vmem:[%s1 + $0x68] sm:$0xff]
      %v216 = vld [vmem:[%s1 + $0x70] sm:$0xff]
      %v217 = vld [vmem:[%s1 + $0x78] sm:$0xff]
      %v218 = vld [vmem:[%s1 + $0x80] sm:$0xff]
      %v219 = vld [vmem:[%s1 + $0x88] sm:$0xff]
      %v220 = vld [vmem:[%s1 + $0x90] sm:$0xff]
      %v221 = vld [vmem:[%s1 + $0x98] sm:$0xff]
      %v222 = vld [vmem:[%s1 + $0xa0] sm:$0xff]
      %v223 = vld [vmem:[%s1 + $0xa8] sm:$0xff]
      %v224 = vld [vmem:[%s1 + $0xb0] sm:$0xff]
      %v225 = vld [vmem:[%s1 + $0xb8] sm:$0xff]
      %v226 = vld [vmem:[%s2] sm:$0x1]
      %v228 = vlaneseq
      %v229 = vshrl.u32 %v228, 7
      %v230 = vsub.s32 0, %v229
      %v231 = vrot.slane %v226, %v230
      %vm233 = vcmask 523264
      %v235 = vsel %vm233, %v199, 0
      %v238 = vsel %vm233, %v201, 0
      %240 = vmatprep.subr.mxu0 0.0
      %241 = vmatpush1.msra.mxu0 %v202
      %242 = vmatprep.subr.mxu0 0.0
      %243 = vmatpush1.msra.mxu0 %v203
      %244 = vmatprep.subr.mxu0 0.0
      %245 = vmatpush1.msra.mxu0 %v204
      %246 = vmatprep.subr.mxu0 0.0
      %247 = vmatpush1.msra.mxu0 %v205
      %248 = vmatprep.subr.mxu0 0.0
      %249 = vmatpush1.msra.mxu0 %v206
      %250 = vmatprep.subr.mxu0 0.0
      %251 = vmatpush1.msra.mxu0 %v207
      %252 = vmatprep.subr.mxu0 0.0
      %253 = vmatpush1.msra.mxu0 %v208
      %254 = vmatprep.subr.mxu0 0.0
      %255 = vmatpush1.msra.mxu0 %v209
      %256 = vmatprep.subr.mxu0 0.0
      %257 = vmatpush1.msra.mxu0 %v210
      %258 = vmatprep.subr.mxu0 0.0
      %259 = vmatpush1.msra.mxu0 %v211
      %260 = vmatprep.subr.mxu0 0.0
      %261 = vmatpush1.msra.mxu0 %v212
      %262 = vmatprep.subr.mxu0 0.0
      %263 = vmatpush1.msra.mxu0 %v213
      %264 = vmatprep.subr.mxu0 0.0
      %265 = vmatpush1.msra.mxu0 %v214
      %266 = vmatprep.subr.mxu0 0.0
      %267 = vmatpush1.msra.mxu0 %v215
      %268 = vmatprep.subr.mxu0 0.0
      %269 = vmatpush1.msra.mxu0 %v216
      %270 = vmatprep.subr.mxu0 0.0
      %271 = vmatpush1.msra.mxu0 %v217
      %272 = vmatprep.subr.mxu0 0.0
      %273 = vmatpush1.msra.mxu0 %v218
      %274 = vmatprep.subr.mxu0 0.0
      %275 = vmatpush1.msra.mxu0 %v219
      %276 = vmatprep.subr.mxu0 0.0
      %277 = vmatpush1.msra.mxu0 %v220
      %278 = vmatprep.subr.mxu0 0.0
      %279 = vmatpush1.msra.mxu0 %v221
      %280 = vmatprep.subr.mxu0 0.0
      %281 = vmatpush1.msra.mxu0 %v222
      %282 = vmatprep.subr.mxu0 0.0
      %283 = vmatpush1.msra.mxu0 %v223
      %284 = vmatprep.subr.mxu0 0.0
      %285 = vmatpush1.msra.mxu0 %v224
      %286 = vmatprep.subr.mxu0 0.0
      %287 = vmatpush1.msra.mxu0 %v225
      %288 = vmatprep.subr.mxu0 0.0
      %289 = vmatpush1.msra.mxu0 0.0
      %290 = vmatprep.subr.mxu0 0.0
      %291 = vmatpush1.msra.mxu0 0.0
      %292 = vmatprep.subr.mxu0 0.0
      %293 = vmatpush1.msra.mxu0 0.0
      %294 = vmatprep.subr.mxu0 0.0
      %295 = vmatpush1.msra.mxu0 0.0
      %296 = vmatprep.subr.mxu0 0.0
      %297 = vmatpush1.msra.mxu0 0.0
      %298 = vmatprep.subr.mxu0 0.0
      %299 = vmatpush1.msra.mxu0 0.0
      %300 = vmatprep.subr.mxu0 0.0
      %301 = vmatpush1.msra.mxu0 0.0
      %302 = vmatprep.subr.mxu0 0.0
      %303 = vmatpush1.msra.mxu0 0.0
      %304 = vmatprep.mubr.f32.mxu0 %v235
      %305 = vmatmul.mubr.f32.gmra.mrb[0].mxu0 %v198
      %v306 = vpop.f32.mrb[0].mxu0
      %v307 = vadd.f32 %v231, %v306
      %v308 = vpop.f32.mrb[0].mxu0
      %309 = vmatprep.mubr.f32.mxu0 %v238
      %310 = vmatmul.mubr.f32.gmra.mrb[0].mxu0 %v200
      %v311 = vpop.f32.mrb[0].mxu0
      %v312 = vadd.f32 %v231, %v311
      %v313 = vpop.f32.mrb[0].mxu0
      %314 = vdwg.mxu0
      %v315 = vld [vmem:[%s3] sm:$0xff]
      %v316 = vld [vmem:[%s3 + $0x8] sm:$0xff]
      %v317 = vadd.f32 %v307, %v315
      %v318 = vadd.f32 %v312, %v316
      %319 = vst.msk [vmem:[%s197] sm:$0xff] %vm233, %v317
      %320 = vst.msk [vmem:[%s197 + $0x8] sm:$0xff] %vm233, %v318
      %p321 = scmp.lt.s32.totalorder %s15, 1
      %s322 = scalar_select %p321, %s15, 1
      %s323 = smul.addr %s322, 2
      %s324 = smul.addr %s323, 8
      %s325 = scalar_lea.vmem %s4, %s324
      // Predicated region
      $region37: #{sam_forward.12} parent=35 // pred_check
        %p326 = pneg %p122
      $region38: #{sam_forward.12} parent=35 // pred_check_branch
        %328 = sbr.rel (%p326) target = $region40
      $region39: #{sam_forward.12} parent=35 // pred_region
        _
      $region40: #{sam_forward.12} parent=35 // pred_fallthru
        _
    $region36: #{sam_forward.12} parent=5 // pred_fallthru
      _
    %p329 = scmp.le.s32.totalorder 2, %s10
    // Predicated region
    $region41: #{sam_forward.12} parent=5 // pred_check
      %p330 = pneg %p329
    $region42: #{sam_forward.12} parent=5 // pred_check_branch
      %332 = sbr.rel (%p330) target = $region44
    $region43: #{sam_forward.12} parent=5 // pred_region
      %s333 = ssub.s32 %s10, 2
      // Predicated region
      $region45: #{sam_forward.12} parent=43 // pred_check
        %p334 = pneg %p128
      $region46: #{sam_forward.12} parent=43 // pred_check_branch
        %336 = sbr.rel (%p334) target = $region48
      $region47: #{sam_forward.12} parent=43 // pred_region
        %p337 = scmp.lt.s32.totalorder %s16, 1
        %s338 = scalar_select %p337, %s16, 1
        %s339 = smul.addr %s338, 2
        %s340 = smul.addr %s339, 8
        %s341 = scalar_lea.vmem %s4, %s340
      $region48: #{sam_forward.12} parent=43 // pred_fallthru
        _
    $region44: #{sam_forward.12} parent=5 // pred_fallthru
      _
  $region6: #{sam_forward.12} parent=0 // loop_footer
    %s14 = sadd.s32 1, %s10
  $region7: #{sam_forward.12} parent=0 // loop_footer_branch
    %9 = sbr.rel target = $region3
  $region8: #{sam_forward.12} parent=0 // loop_exit
    _

// kernel: sam_forward.13
$region0: #{sam_forward.13}
  #allocation0 [shape = 'u32[]', space=smem, size = 0x4, offset = 0x4, fixed_abs, tag = 'smem constant byte address 0x4 - core index']
  #allocation1 [shape = 'u32[144,128]{1,0:T(1,128)}', space=vmem, size = 0x12000, scoped, tag = 'internal scratch']
  #allocation2 [shape = 'f32[32,192]{1,0:T(8,128)}', space=vmem, size = 0x8000, scoped, tag = 'scratch operand']
  %s0 = inlined_call_operand.vmem [shape: f32[32,64], index: 0, kind: input, shape index: {}]
  %s1 = inlined_call_operand.vmem [shape: f32[64,192], index: 1, kind: input, shape index: {}]
  %s2 = inlined_call_operand.vmem [shape: f32[1,192], index: 2, kind: input, shape index: {}]
  %s3 = inlined_call_operand.vmem [shape: f32[32,192], index: 3, kind: output, shape index: {}]
  %s4 = sld [smem:[#allocation0]]
  $region30: #{sam_forward.13} parent=0
    _
  %s6 = ssub.s32 1, %s4
  %s7 = scalar_select 0, %s6, %s4
  // Predicated region
  $region2: #{sam_forward.13} parent=0 // pred_check
    _
  $region3: #{sam_forward.13} parent=0 // pred_check_branch
    %9 = sbr.rel (0) target = $region5
  $region4: #{sam_forward.13} parent=0 // pred_region
    _
  $region5: #{sam_forward.13} parent=0 // pred_fallthru
    _
  // Predicated region
  $region6: #{sam_forward.13} parent=0 // pred_check
    _
  $region7: #{sam_forward.13} parent=0 // pred_check_branch
    %11 = sbr.rel (0) target = $region9
  $region8: #{sam_forward.13} parent=0 // pred_region
    _
  $region9: #{sam_forward.13} parent=0 // pred_fallthru
    _
  // Predicated region
  $region10: #{sam_forward.13} parent=0 // pred_check
    _
  $region11: #{sam_forward.13} parent=0 // pred_check_branch
    %13 = sbr.rel (0) target = $region13
  $region12: #{sam_forward.13} parent=0 // pred_region
    _
  $region13: #{sam_forward.13} parent=0 // pred_fallthru
    _
  %p14 = scmp.eq.s32.totalorder 0, 0
  // Predicated region
  $region14: #{sam_forward.13} parent=0 // pred_check
    %p15 = pneg %p14
  $region15: #{sam_forward.13} parent=0 // pred_check_branch
    %17 = sbr.rel (%p15) target = $region17
  $region16: #{sam_forward.13} parent=0 // pred_region
    %18 = vst [vmem:[#allocation2] sm:$0xff] 0.0
    %vm19 = vcmask 523264
    %20 = vst.msk [vmem:[#allocation2 + $0x8] sm:$0xff] %vm19, 0.0
    %21 = vst [vmem:[#allocation2 + $0x10] sm:$0xff] 0.0
    %22 = vst.msk [vmem:[#allocation2 + $0x18] sm:$0xff] %vm19, 0.0
    %23 = vst [vmem:[#allocation2 + $0x20] sm:$0xff] 0.0
    %24 = vst.msk [vmem:[#allocation2 + $0x28] sm:$0xff] %vm19, 0.0
    %25 = vst [vmem:[#allocation2 + $0x30] sm:$0xff] 0.0
    %26 = vst.msk [vmem:[#allocation2 + $0x38] sm:$0xff] %vm19, 0.0
  $region17: #{sam_forward.13} parent=0 // pred_fallthru
    _
  %v27 = vld [vmem:[#allocation2] sm:$0xff]
  %v28 = vld [vmem:[#allocation2 + $0x8] sm:$0xff]
  %v29 = vld [vmem:[#allocation2 + $0x10] sm:$0xff]
  %v30 = vld [vmem:[#allocation2 + $0x18] sm:$0xff]
  %v31 = vld [vmem:[#allocation2 + $0x20] sm:$0xff]
  %v32 = vld [vmem:[#allocation2 + $0x28] sm:$0xff]
  %v33 = vld [vmem:[#allocation2 + $0x30] sm:$0xff]
  %v34 = vld [vmem:[#allocation2 + $0x38] sm:$0xff]
  %v35 = vld [vmem:[%s0] sm:$0xff]
  %v36 = vld [vmem:[%s0 + $0x8] sm:$0xff]
  %v37 = vld [vmem:[%s0 + $0x10] sm:$0xff]
  %v38 = vld [vmem:[%s0 + $0x18] sm:$0xff]
  %v39 = vld [vmem:[%s1] sm:$0xff]
  %v40 = vld [vmem:[%s1 + $0x8] sm:$0xff]
  %v41 = vld [vmem:[%s1 + $0x10] sm:$0xff]
  %v42 = vld [vmem:[%s1 + $0x18] sm:$0xff]
  %v43 = vld [vmem:[%s1 + $0x20] sm:$0xff]
  %v44 = vld [vmem:[%s1 + $0x28] sm:$0xff]
  %v45 = vld [vmem:[%s1 + $0x30] sm:$0xff]
  %v46 = vld [vmem:[%s1 + $0x38] sm:$0xff]
  %v47 = vld [vmem:[%s1 + $0x40] sm:$0xff]
  %v48 = vld [vmem:[%s1 + $0x48] sm:$0xff]
  %v49 = vld [vmem:[%s1 + $0x50] sm:$0xff]
  %v50 = vld [vmem:[%s1 + $0x58] sm:$0xff]
  %v51 = vld [vmem:[%s1 + $0x60] sm:$0xff]
  %v52 = vld [vmem:[%s1 + $0x68] sm:$0xff]
  %v53 = vld [vmem:[%s1 + $0x70] sm:$0xff]
  %v54 = vld [vmem:[%s1 + $0x78] sm:$0xff]
  %vm55 = vcmask 523264
  %v57 = vsel %vm55, %v35, 0
  %v60 = vsel %vm55, %v36, 0
  %v63 = vsel %vm55, %v37, 0
  %v66 = vsel %vm55, %v38, 0
  %68 = vmatprep.subr.mxu0 %v40
  %69 = vmatpush1.msra.mxu0 %v39
  %70 = vmatprep.subr.mxu0 %v42
  %71 = vmatpush1.msra.mxu0 %v41
  %72 = vmatprep.subr.mxu0 %v44
  %73 = vmatpush1.msra.mxu0 %v43
  %74 = vmatprep.subr.mxu0 %v46
  %75 = vmatpush1.msra.mxu0 %v45
  %76 = vmatprep.subr.mxu0 %v48
  %77 = vmatpush1.msra.mxu0 %v47
  %78 = vmatprep.subr.mxu0 %v50
  %79 = vmatpush1.msra.mxu0 %v49
  %80 = vmatprep.subr.mxu0 %v52
  %81 = vmatpush1.msra.mxu0 %v51
  %82 = vmatprep.subr.mxu0 %v54
  %83 = vmatpush1.msra.mxu0 %v53
  %84 = vmatprep.subr.mxu0 0.0
  %85 = vmatpush1.msra.mxu0 0.0
  %86 = vmatprep.subr.mxu0 0.0
  %87 = vmatpush1.msra.mxu0 0.0
  %88 = vmatprep.subr.mxu0 0.0
  %89 = vmatpush1.msra.mxu0 0.0
  %90 = vmatprep.subr.mxu0 0.0
  %91 = vmatpush1.msra.mxu0 0.0
  %92 = vmatprep.subr.mxu0 0.0
  %93 = vmatpush1.msra.mxu0 0.0
  %94 = vmatprep.subr.mxu0 0.0
  %95 = vmatpush1.msra.mxu0 0.0
  %96 = vmatprep.subr.mxu0 0.0
  %97 = vmatpush1.msra.mxu0 0.0
  %98 = vmatprep.subr.mxu0 0.0
  %99 = vmatpush1.msra.mxu0 0.0
  %100 = vmatprep.subr.mxu0 0.0
  %101 = vmatpush1.msra.mxu0 0.0
  %102 = vmatprep.subr.mxu0 0.0
  %103 = vmatpush1.msra.mxu0 0.0
  %104 = vmatprep.subr.mxu0 0.0
  %105 = vmatpush1.msra.mxu0 0.0
  %106 = vmatprep.subr.mxu0 0.0
  %107 = vmatpush1.msra.mxu0 0.0
  %108 = vmatprep.subr.mxu0 0.0
  %109 = vmatpush1.msra.mxu0 0.0
  %110 = vmatprep.subr.mxu0 0.0
  %111 = vmatpush1.msra.mxu0 0.0
  %112 = vmatprep.subr.mxu0 0.0
  %113 = vmatpush1.msra.mxu0 0.0
  %114 = vmatprep.subr.mxu0 0.0
  %115 = vmatpush1.msra.mxu0 0.0
  %116 = vmatprep.subr.mxu0 0.0
  %117 = vmatpush1.msra.mxu0 0.0
  %118 = vmatprep.subr.mxu0 0.0
  %119 = vmatpush1.msra.mxu0 0.0
  %120 = vmatprep.subr.mxu0 0.0
  %121 = vmatpush1.msra.mxu0 0.0
  %122 = vmatprep.subr.mxu0 0.0
  %123 = vmatpush1.msra.mxu0 0.0
  %124 = vmatprep.subr.mxu0 0.0
  %125 = vmatpush1.msra.mxu0 0.0
  %126 = vmatprep.subr.mxu0 0.0
  %127 = vmatpush1.msra.mxu0 0.0
  %128 = vmatprep.subr.mxu0 0.0
  %129 = vmatpush1.msra.mxu0 0.0
  %130 = vmatprep.subr.mxu0 0.0
  %131 = vmatpush1.msra.mxu0 0.0
  %132 = vmatprep.mubr.f32.mxu0 0.0
  %133 = vmatmul.mubr.f32.gmra.mrb[0].mxu0 %v57
  %v134 = vpop.f32.mrb[0].mxu0
  %v135 = vadd.f32 0.0, %v134
  %v136 = vpop.f32.mrb[0].mxu0
  %v137 = vadd.f32 0.0, %v136
  %138 = vmatprep.mubr.f32.mxu0 0.0
  %139 = vmatmul.mubr.f32.gmra.mrb[0].mxu0 %v60
  %v140 = vpop.f32.mrb[0].mxu0
  %v141 = vadd.f32 0.0, %v140
  %v142 = vpop.f32.mrb[0].mxu0
  %v143 = vadd.f32 0.0, %v142
  %144 = vmatprep.mubr.f32.mxu0 0.0
  %145 = vmatmul.mubr.f32.gmra.mrb[0].mxu0 %v63
  %v146 = vpop.f32.mrb[0].mxu0
  %v147 = vadd.f32 0.0, %v146
  %v148 = vpop.f32.mrb[0].mxu0
  %v149 = vadd.f32 0.0, %v148
  %150 = vmatprep.mubr.f32.mxu0 0.0
  %151 = vmatmul.mubr.f32.gmra.mrb[0].mxu0 %v66
  %v152 = vpop.f32.mrb[0].mxu0
  %v153 = vadd.f32 0.0, %v152
  %v154 = vpop.f32.mrb[0].mxu0
  %v155 = vadd.f32 0.0, %v154
  %156 = vdwg.mxu0
  %v157 = vadd.f32 %v27, %v135
  %v158 = vadd.f32 %v28, %v137
  %v159 = vadd.f32 %v29, %v141
  %v160 = vadd.f32 %v30, %v143
  %v161 = vadd.f32 %v31, %v147
  %v162 = vadd.f32 %v32, %v149
  %v163 = vadd.f32 %v33, %v153
  %v164 = vadd.f32 %v34, %v155
  %165 = vst [vmem:[#allocation2] sm:$0xff] %v157
  %166 = vst.msk [vmem:[#allocation2 + $0x8] sm:$0xff] %vm55, %v158
  %167 = vst [vmem:[#allocation2 + $0x10] sm:$0xff] %v159
  %168 = vst.msk [vmem:[#allocation2 + $0x18] sm:$0xff] %vm55, %v160
  %169 = vst [vmem:[#allocation2 + $0x20] sm:$0xff] %v161
  %170 = vst.msk [vmem:[#allocation2 + $0x28] sm:$0xff] %vm55, %v162
  %171 = vst [vmem:[#allocation2 + $0x30] sm:$0xff] %v163
  %172 = vst.msk [vmem:[#allocation2 + $0x38] sm:$0xff] %vm55, %v164
  // Predicated region
  $region18: #{sam_forward.13} parent=0 // pred_check
    %p173 = pneg %p14
  $region19: #{sam_forward.13} parent=0 // pred_check_branch
    %175 = sbr.rel (%p173) target = $region21
  $region20: #{sam_forward.13} parent=0 // pred_region
    %v176 = vld [vmem:[#allocation2] sm:$0xff]
    %v177 = vld [vmem:[#allocation2 + $0x8] sm:$0xff]
    %v178 = vld [vmem:[#allocation2 + $0x10] sm:$0xff]
    %v179 = vld [vmem:[#allocation2 + $0x18] sm:$0xff]
    %v180 = vld [vmem:[#allocation2 + $0x20] sm:$0xff]
    %v181 = vld [vmem:[#allocation2 + $0x28] sm:$0xff]
    %v182 = vld [vmem:[#allocation2 + $0x30] sm:$0xff]
    %v183 = vld [vmem:[#allocation2 + $0x38] sm:$0xff]
    %v184 = vld [vmem:[%s2] sm:$0x3]
    %v186 = vlaneseq
    %v187 = vshrl.u32 %v186, 7
    %v188 = vsub.s32 0, %v187
    %v189 = vrot.slane %v184, %v188
    %v190 = vlaneseq
    %v191 = vshrl.u32 %v190, 7
    %v192 = vsub.s32 1, %v191
    %v193 = vrot.slane %v184, %v192
    %v196 = vadd.f32 %v176, %v189
    %v197 = vadd.f32 %v177, %v193
    %v198 = vadd.f32 %v178, %v189
    %v199 = vadd.f32 %v179, %v193
    %v200 = vadd.f32 %v180, %v189
    %v201 = vadd.f32 %v181, %v193
    %v202 = vadd.f32 %v182, %v189
    %v203 = vadd.f32 %v183, %v193
    %204 = vst [vmem:[%s3] sm:$0xff] %v196
    %205 = vst.msk [vmem:[%s3 + $0x8] sm:$0xff] %vm55, %v197
    %206 = vst [vmem:[%s3 + $0x10] sm:$0xff] %v198
    %207 = vst.msk [vmem:[%s3 + $0x18] sm:$0xff] %vm55, %v199
    %208 = vst [vmem:[%s3 + $0x20] sm:$0xff] %v200
    %209 = vst.msk [vmem:[%s3 + $0x28] sm:$0xff] %vm55, %v201
    %210 = vst [vmem:[%s3 + $0x30] sm:$0xff] %v202
    %211 = vst.msk [vmem:[%s3 + $0x38] sm:$0xff] %vm55, %v203
  $region21: #{sam_forward.13} parent=0 // pred_fallthru
    _
  // Predicated region
  $region22: #{sam_forward.13} parent=0 // pred_check
    _
  $region23: #{sam_forward.13} parent=0 // pred_check_branch
    %213 = sbr.rel (0) target = $region25
  $region24: #{sam_forward.13} parent=0 // pred_region
    _
  $region25: #{sam_forward.13} parent=0 // pred_fallthru
    _
  // Predicated region
  $region26: #{sam_forward.13} parent=0 // pred_check
    _
  $region27: #{sam_forward.13} parent=0 // pred_check_branch
    %215 = sbr.rel (0) target = $region29
  $region28: #{sam_forward.13} parent=0 // pred_region
    _
  $region29: #{sam_forward.13} parent=0 // pred_fallthru
    _

// kernel: sam_forward.14
$region0: #{sam_forward.14}
  #allocation0 [shape = 'u32[]', space=smem, size = 0x4, offset = 0x4, fixed_abs, tag = 'smem constant byte address 0x4 - core index']
  #allocation1 [shape = 'u32[144,128]{1,0:T(1,128)}', space=vmem, size = 0x12000, scoped, tag = 'internal scratch']
  %s0 = inlined_call_operand.vmem [shape: f32[2,16,192], index: 0, kind: input, shape index: {}]
  %s1 = inlined_call_operand.vmem [shape: f32[4,16,16], index: 1, kind: input, shape index: {}]
  %s2 = inlined_call_operand.vmem [shape: f32[2,16,64], index: 2, kind: output, shape index: {}]
  %s3 = sld [smem:[#allocation0]]
  $region41: #{sam_forward.14} parent=0
    _
  %s5 = ssub.s32 1, %s3
  %s6 = scalar_select 0, %s5, %s3
  loop: start=0, step=1, limit=4
  $region2: #{sam_forward.14} parent=0 // loop_pre_header
    _
  $region3: #{sam_forward.14} parent=0 // loop_header
    %s8 = sphi 0, %s12
    %p9 = scmp.ge.s32.totalorder %s8, 4
    %s18 = sphi 0, %s20
    %s21 = sphi 0, %s18
    %s22 = sphi 0, %s21
    %s38 = sphi 0, %s22
    %s42 = sphi 0, %s42
    %s44 = sphi 0, %s42
    %s45 = sphi 0, %s44
    %s59 = sphi 0, %s45
    %s65 = sphi 0, %s67
    %s68 = sphi 0, %s65
    %s69 = sphi 0, %s68
    %s85 = sphi 0, %s69
  $region4: #{sam_forward.14} parent=0 // loop_header_branch
    %11 = sbr.rel (%p9) target = $region8
  $region5: #{sam_forward.14} parent=0 // loop_body
    %s13 = ssub.s32 %s8, 1
    %s14 = ssub.s32 %s8, 2
    %s15 = sadd.s32 %s8, 1
    %s16 = ssub.s32 %s8, %s15
    %p17 = scmp.eq.s32.totalorder %s16, 0
    %s19 = sadd.s32 %s18, 1
    %s20 = scalar_select %p17, %s18, %s19
    %p23 = pneg %p17
    %p24 = scmp.eq.s32.totalorder %s8, 1
    %p25 = por %p23, %p24
    %p26 = scmp.ne.s32.totalorder %s18, %s21
    %p27 = scmp.eq.s32.totalorder %s8, 0
    %p28 = por %p26, %p27
    %p29 = scmp.ne.s32.totalorder %s18, %s21
    %p30 = scmp.eq.s32.totalorder %s13, 1
    %p31 = por %p29, %p30
    %p32 = scmp.ne.s32.totalorder %s21, %s22
    %p33 = scmp.eq.s32.totalorder %s13, 0
    %p34 = por %p32, %p33
    %p35 = scmp.ne.s32.totalorder %s21, %s22
    %p36 = scmp.eq.s32.totalorder %s14, 1
    %p37 = por %p35, %p36
    %p39 = scmp.ne.s32.totalorder %s22, %s38
    %p40 = scmp.eq.s32.totalorder %s14, 0
    %p41 = por %p39, %p40
    %s43 = sadd.s32 %s42, 1
    %p46 = scmp.eq.s32.totalorder %s8, 1
    %p47 = scmp.ne.s32.totalorder %s42, %s44
    %p48 = scmp.eq.s32.totalorder %s8, 0
    %p49 = por %p47, %p48
    %p50 = scmp.ne.s32.totalorder %s42, %s44
    %p51 = scmp.eq.s32.totalorder %s13, 1
    %p52 = por %p50, %p51
    %p53 = scmp.ne.s32.totalorder %s44, %s45
    %p54 = scmp.eq.s32.totalorder %s13, 0
    %p55 = por %p53, %p54
    %p56 = scmp.ne.s32.totalorder %s44, %s45
    %p57 = scmp.eq.s32.totalorder %s14, 1
    %p58 = por %p56, %p57
    %p60 = scmp.ne.s32.totalorder %s45, %s59
    %p61 = scmp.eq.s32.totalorder %s14, 0
    %p62 = por %p60, %p61
    %s63 = ssub.s32 %s8, %s15
    %p64 = scmp.eq.s32.totalorder %s63, 0
    %s66 = sadd.s32 %s65, 1
    %s67 = scalar_select %p64, %s65, %s66
    %p70 = pneg %p64
    %p71 = scmp.eq.s32.totalorder %s8, 1
    %p72 = por %p70, %p71
    %p73 = scmp.ne.s32.totalorder %s65, %s68
    %p74 = scmp.eq.s32.totalorder %s8, 0
    %p75 = por %p73, %p74
    %p76 = scmp.ne.s32.totalorder %s65, %s68
    %p77 = scmp.eq.s32.totalorder %s13, 1
    %p78 = por %p76, %p77
    %p79 = scmp.ne.s32.totalorder %s68, %s69
    %p80 = scmp.eq.s32.totalorder %s13, 0
    %p81 = por %p79, %p80
    %p82 = scmp.ne.s32.totalorder %s68, %s69
    %p83 = scmp.eq.s32.totalorder %s14, 1
    %p84 = por %p82, %p83
    %p86 = scmp.ne.s32.totalorder %s69, %s85
    %p87 = scmp.eq.s32.totalorder %s14, 0
    %p88 = por %p86, %p87
    %p89 = scmp.le.s32.totalorder 1, %s8
    %p90 = scmp.lt.s32.totalorder %s8, 3
    %p91 = pnand %p89, %p90
    %p92 = pneg %p91
    // Predicated region
    $region9: #{sam_forward.14} parent=5 // pred_check
      _
    $region10: #{sam_forward.14} parent=5 // pred_check_branch
      %94 = sbr.rel (%p91) target = $region12
    $region11: #{sam_forward.14} parent=5 // pred_region
      %s95 = ssub.s32 %s8, 1
      // Predicated region
      $region13: #{sam_forward.14} parent=11 // pred_check
        %p96 = pneg %p55
      $region14: #{sam_forward.14} parent=11 // pred_check_branch
        %98 = sbr.rel (%p96) target = $region16
      $region15: #{sam_forward.14} parent=11 // pred_region
        _
      $region16: #{sam_forward.14} parent=11 // pred_fallthru
        _
    $region12: #{sam_forward.14} parent=5 // pred_fallthru
      _
    %p99 = scmp.lt.s32.totalorder %s8, 2
    // Predicated region
    $region17: #{sam_forward.14} parent=5 // pred_check
      %p100 = pneg %p99
    $region18: #{sam_forward.14} parent=5 // pred_check_branch
      %102 = sbr.rel (%p100) target = $region20
    $region19: #{sam_forward.14} parent=5 // pred_region
      // Predicated region
      $region21: #{sam_forward.14} parent=19 // pred_check
        %p103 = pneg %p28
      $region22: #{sam_forward.14} parent=19 // pred_check_branch
        %105 = sbr.rel (%p103) target = $region24
      $region23: #{sam_forward.14} parent=19 // pred_region
        %p106 = scmp.lt.s32.totalorder %s8, 1
        %s107 = scalar_select %p106, %s8, 1
        %s108 = smul.addr %s107, 4
        %s109 = smul.addr %s108, 8
        %s110 = scalar_lea.vmem %s0, %s109
      $region24: #{sam_forward.14} parent=19 // pred_fallthru
        _
    $region20: #{sam_forward.14} parent=5 // pred_fallthru
      _
    %p111 = scmp.le.s32.totalorder 1, %s8
    %p112 = scmp.lt.s32.totalorder %s8, 3
    %p113 = pnand %p111, %p112
    %p114 = pneg %p113
    // Predicated region
    $region25: #{sam_forward.14} parent=5 // pred_check
      _
    $region26: #{sam_forward.14} parent=5 // pred_check_branch
      %116 = sbr.rel (%p113) target = $region28
    $region27: #{sam_forward.14} parent=5 // pred_region
      %s117 = ssub.s32 %s8, 1
      %p118 = scmp.lt.s32.totalorder %s13, 1
      %s119 = scalar_select %p118, %s13, 1
      %s120 = smul.addr %s119, 4
      %s121 = smul.addr %s120, 8
      %s122 = scalar_lea.vmem %s0, %s121
      %p123 = pneg %p34
      %p124 = pneg %p31
      %p125 = pneg %p55
      %p126 = pneg %p52
      %p127 = pneg %p81
      %p128 = pneg %p78
      %p129 = scmp.lt.s32.totalorder %s13, 1
      %s130 = scalar_select %p129, %s13, 1
      %s131 = smul.addr %s130, 2
      %s132 = smul.addr %s131, 8
      %s133 = scalar_lea.vmem %s2, %s132
      %p134 = scmp.lt.s32.totalorder %s13, 1
      %s135 = scalar_select %p134, %s13, 1
      %s136 = smul.addr %s135, 4
      %s137 = smul.addr %s136, 8
      %s138 = scalar_lea.vmem %s0, %s137
      %p139 = scmp.lt.s32.totalorder %s13, 1
      %s140 = scalar_select %p139, %s13, 1
      %s141 = smul.addr %s140, 2
      %s142 = smul.addr %s141, 8
      %s143 = scalar_lea.vmem %s2, %s142
      %v144 = vld [vmem:[%s138] sm:$0xff]
      %v145 = vld [vmem:[%s138 + $0x8] sm:$0xff]
      %v146 = vld [vmem:[%s138 + $0x10] sm:$0xff]
      %v147 = vld [vmem:[%s138 + $0x18] sm:$0xff]
      %150 = vrot.lane.b32.xlu0 %v144, 64
      %v151 = vpop.permute.xlu0 %150
      %152 = vrot.lane.b32.xlu0 %v146, 64
      %v153 = vpop.permute.xlu0 %152
      %vm154 = vcmask 130048
      %v155 = vsel %vm154, %v144, 0
      %v157 = vsel %vm154, %v146, 0
      %v159 = vsel %vm154, %v151, 0
      %v161 = vsel %vm154, %v153, 0
      %163 = vmatprep.subr.mxu0 0.0
      %164 = vmatpush1.xpose.msra.mxu0 %v159
      %165 = vmatprep.subr.mxu0 0.0
      %166 = vmatpush1.xpose.msra.mxu0 %v161
      %167 = vmatprep.subr.mxu0 0.0
      %168 = vmatpush1.xpose.msra.mxu0 0.0
      %169 = vmatprep.subr.mxu0 0.0
      %170 = vmatpush1.xpose.msra.mxu0 0.0
      %171 = vmatprep.subr.mxu0 0.0
      %172 = vmatpush1.xpose.msra.mxu0 0.0
      %173 = vmatprep.subr.mxu0 0.0
      %174 = vmatpush1.xpose.msra.mxu0 0.0
      %175 = vmatprep.subr.mxu0 0.0
      %176 = vmatpush1.xpose.msra.mxu0 0.0
      %177 = vmatprep.subr.mxu0 0.0
      %178 = vmatpush1.xpose.msra.mxu0 0.0
      %179 = vmatprep.subr.mxu0 0.0
      %180 = vmatpush1.xpose.msra.mxu0 0.0
      %181 = vmatprep.subr.mxu0 0.0
      %182 = vmatpush1.xpose.msra.mxu0 0.0
      %183 = vmatprep.subr.mxu0 0.0
      %184 = vmatpush1.xpose.msra.mxu0 0.0
      %185 = vmatprep.subr.mxu0 0.0
      %186 = vmatpush1.xpose.msra.mxu0 0.0
      %187 = vmatprep.subr.mxu0 0.0
      %188 = vmatpush1.xpose.msra.mxu0 0.0
      %189 = vmatprep.subr.mxu0 0.0
      %190 = vmatpush1.xpose.msra.mxu0 0.0
      %191 = vmatprep.subr.mxu0 0.0
      %192 = vmatpush1.xpose.msra.mxu0 0.0
      %193 = vmatprep.subr.mxu0 0.0
      %194 = vmatpush1.xpose.msra.mxu0 0.0
      %195 = vmatprep.subr.mxu0 0.0
      %196 = vmatpush1.xpose.msra.mxu0 0.0
      %197 = vmatprep.subr.mxu0 0.0
      %198 = vmatpush1.xpose.msra.mxu0 0.0
      %199 = vmatprep.subr.mxu0 0.0
      %200 = vmatpush1.xpose.msra.mxu0 0.0
      %201 = vmatprep.subr.mxu0 0.0
      %202 = vmatpush1.xpose.msra.mxu0 0.0
      %203 = vmatprep.subr.mxu0 0.0
      %204 = vmatpush1.xpose.msra.mxu0 0.0
      %205 = vmatprep.subr.mxu0 0.0
      %206 = vmatpush1.xpose.msra.mxu0 0.0
      %207 = vmatprep.subr.mxu0 0.0
      %208 = vmatpush1.xpose.msra.mxu0 0.0
      %209 = vmatprep.subr.mxu0 0.0
      %210 = vmatpush1.xpose.msra.mxu0 0.0
      %211 = vmatprep.subr.mxu0 0.0
      %212 = vmatpush1.xpose.msra.mxu0 0.0
      %213 = vmatprep.subr.mxu0 0.0
      %214 = vmatpush1.xpose.msra.mxu0 0.0
      %215 = vmatprep.subr.mxu0 0.0
      %216 = vmatpush1.xpose.msra.mxu0 0.0
      %217 = vmatprep.subr.mxu0 0.0
      %218 = vmatpush1.xpose.msra.mxu0 0.0
      %219 = vmatprep.subr.mxu0 0.0
      %220 = vmatpush1.xpose.msra.mxu0 0.0
      %221 = vmatprep.subr.mxu0 0.0
      %222 = vmatpush1.xpose.msra.mxu0 0.0
      %223 = vmatprep.subr.mxu0 0.0
      %224 = vmatpush1.xpose.msra.mxu0 0.0
      %225 = vmatprep.subr.mxu0 0.0
      %226 = vmatpush1.xpose.msra.mxu0 0.0
      %227 = vmatprep.mubr.f32.mxu0 0.0
      %228 = vmatmul.mubr.f32.gmra.mrb[0].mxu0 %v155
      %v229 = vpop.f32.mrb[0].mxu0
      %v230 = vadd.f32 0.0, %v229
      %v231 = vpop.f32.mrb[0].mxu0
      %232 = vmatprep.mubr.f32.mxu0 0.0
      %233 = vmatmul.mubr.f32.gmra.mrb[0].mxu0 %v157
      %v234 = vpop.f32.mrb[0].mxu0
      %v235 = vadd.f32 0.0, %v234
      %v236 = vpop.f32.mrb[0].mxu0
      %237 = vdwg.mxu0
      %v238 = vmul.f32 %v230, 0.25
      %v239 = vmul.f32 %v235, 0.25
      %v240 = vld [vmem:[%s1] sm:$0xff]
      %v241 = vld [vmem:[%s1 + $0x8] sm:$0xff]
      %v242 = vadd.f32 %v238, %v240
      %v243 = vadd.f32 %v239, %v241
      %v244 = vsel %vm154, %v242, -inf
      %245 = vmax.xlane.f32.xlu0 %v244
      %v246 = vpop.xlane.xlu0 %245
      %v247 = vsel %vm154, %v243, -inf
      %248 = vmax.xlane.f32.xlu0 %v247
      %v249 = vpop.xlane.xlu0 %248
      %v250 = vsub.f32 %v242, %v246
      %v251 = vsub.f32 %v243, %v249
      %v252 = vmul.f32 %v250, 1.442695
      %v253 = vpow.pop %v252
      %v254 = vmul.f32 %v251, 1.442695
      %v255 = vpow.pop %v254
      %v256 = vsel %vm154, %v253, 0.0
      %257 = vadd.xlane.f32.xlu0 %v256
      %v258 = vpop.xlane.xlu0 %257
      %v259 = vsel %vm154, %v255, 0.0
      %260 = vadd.xlane.f32.xlu0 %v259
      %v261 = vpop.xlane.xlu0 %260
      %v262 = vrcp.pop %v258
      %v263 = vrcp.pop %v261
      %v264 = vmul.f32 %v253, %v262
      %v265 = vmul.f32 %v255, %v263
      %v267 = vsel %vm154, %v264, 0
      %v270 = vsel %vm154, %v265, 0
      %272 = vmatprep.subr.mxu0 0.0
      %273 = vmatpush1.msra.mxu0 %v145
      %274 = vmatprep.subr.mxu0 0.0
      %275 = vmatpush1.msra.mxu0 %v147
      %276 = vmatprep.subr.mxu0 0.0
      %277 = vmatpush1.msra.mxu0 0.0
      %278 = vmatprep.subr.mxu0 0.0
      %279 = vmatpush1.msra.mxu0 0.0
      %280 = vmatprep.subr.mxu0 0.0
      %281 = vmatpush1.msra.mxu0 0.0
      %282 = vmatprep.subr.mxu0 0.0
      %283 = vmatpush1.msra.mxu0 0.0
      %284 = vmatprep.subr.mxu0 0.0
      %285 = vmatpush1.msra.mxu0 0.0
      %286 = vmatprep.subr.mxu0 0.0
      %287 = vmatpush1.msra.mxu0 0.0
      %288 = vmatprep.subr.mxu0 0.0
      %289 = vmatpush1.msra.mxu0 0.0
      %290 = vmatprep.subr.mxu0 0.0
      %291 = vmatpush1.msra.mxu0 0.0
      %292 = vmatprep.subr.mxu0 0.0
      %293 = vmatpush1.msra.mxu0 0.0
      %294 = vmatprep.subr.mxu0 0.0
      %295 = vmatpush1.msra.mxu0 0.0
      %296 = vmatprep.subr.mxu0 0.0
      %297 = vmatpush1.msra.mxu0 0.0
      %298 = vmatprep.subr.mxu0 0.0
      %299 = vmatpush1.msra.mxu0 0.0
      %300 = vmatprep.subr.mxu0 0.0
      %301 = vmatpush1.msra.mxu0 0.0
      %302 = vmatprep.subr.mxu0 0.0
      %303 = vmatpush1.msra.mxu0 0.0
      %304 = vmatprep.subr.mxu0 0.0
      %305 = vmatpush1.msra.mxu0 0.0
      %306 = vmatprep.subr.mxu0 0.0
      %307 = vmatpush1.msra.mxu0 0.0
      %308 = vmatprep.subr.mxu0 0.0
      %309 = vmatpush1.msra.mxu0 0.0
      %310 = vmatprep.subr.mxu0 0.0
      %311 = vmatpush1.msra.mxu0 0.0
      %312 = vmatprep.subr.mxu0 0.0
      %313 = vmatpush1.msra.mxu0 0.0
      %314 = vmatprep.subr.mxu0 0.0
      %315 = vmatpush1.msra.mxu0 0.0
      %316 = vmatprep.subr.mxu0 0.0
      %317 = vmatpush1.msra.mxu0 0.0
      %318 = vmatprep.subr.mxu0 0.0
      %319 = vmatpush1.msra.mxu0 0.0
      %320 = vmatprep.subr.mxu0 0.0
      %321 = vmatpush1.msra.mxu0 0.0
      %322 = vmatprep.subr.mxu0 0.0
      %323 = vmatpush1.msra.mxu0 0.0
      %324 = vmatprep.subr.mxu0 0.0
      %325 = vmatpush1.msra.mxu0 0.0
      %326 = vmatprep.subr.mxu0 0.0
      %327 = vmatpush1.msra.mxu0 0.0
      %328 = vmatprep.subr.mxu0 0.0
      %329 = vmatpush1.msra.mxu0 0.0
      %330 = vmatprep.subr.mxu0 0.0
      %331 = vmatpush1.msra.mxu0 0.0
      %332 = vmatprep.subr.mxu0 0.0
      %333 = vmatpush1.msra.mxu0 0.0
      %334 = vmatprep.subr.mxu0 0.0
      %335 = vmatpush1.msra.mxu0 0.0
      %336 = vmatprep.mubr.f32.mxu0 0.0
      %337 = vmatmul.mubr.f32.gmra.mrb[0].mxu0 %v267
      %v338 = vpop.f32.mrb[0].mxu0
      %v339 = vadd.f32 0.0, %v338
      %v340 = vpop.f32.mrb[0].mxu0
      %341 = vmatprep.mubr.f32.mxu0 0.0
      %342 = vmatmul.mubr.f32.gmra.mrb[0].mxu0 %v270
      %v343 = vpop.f32.mrb[0].mxu0
      %v344 = vadd.f32 0.0, %v343
      %v345 = vpop.f32.mrb[0].mxu0
      %346 = vdwg.mxu0
      %347 = vrot.lane.b32.xlu0 %v144, 112
      %v348 = vpop.permute.xlu0 %347
      %349 = vrot.lane.b32.xlu0 %v146, 112
      %v350 = vpop.permute.xlu0 %349
      %351 = vrot.lane.b32.xlu0 %v144, 48
      %v352 = vpop.permute.xlu0 %351
      %353 = vrot.lane.b32.xlu0 %v146, 48
      %v354 = vpop.permute.xlu0 %353
      %v355 = vsel %vm154, %v348, 0
      %v357 = vsel %vm154, %v350, 0
      %v359 = vsel %vm154, %v352, 0
      %v361 = vsel %vm154, %v354, 0
      %363 = vmatprep.subr.mxu0 0.0
      %364 = vmatpush1.xpose.msra.mxu0 %v359
      %365 = vmatprep.subr.mxu0 0.0
      %366 = vmatpush1.xpose.msra.mxu0 %v361
      %367 = vmatprep.subr.mxu0 0.0
      %368 = vmatpush1.xpose.msra.mxu0 0.0
      %369 = vmatprep.subr.mxu0 0.0
      %370 = vmatpush1.xpose.msra.mxu0 0.0
      %371 = vmatprep.subr.mxu0 0.0
      %372 = vmatpush1.xpose.msra.mxu0 0.0
      %373 = vmatprep.subr.mxu0 0.0
      %374 = vmatpush1.xpose.msra.mxu0 0.0
      %375 = vmatprep.subr.mxu0 0.0
      %376 = vmatpush1.xpose.msra.mxu0 0.0
      %377 = vmatprep.subr.mxu0 0.0
      %378 = vmatpush1.xpose.msra.mxu0 0.0
      %379 = vmatprep.subr.mxu0 0.0
      %380 = vmatpush1.xpose.msra.mxu0 0.0
      %381 = vmatprep.subr.mxu0 0.0
      %382 = vmatpush1.xpose.msra.mxu0 0.0
      %383 = vmatprep.subr.mxu0 0.0
      %384 = vmatpush1.xpose.msra.mxu0 0.0
      %385 = vmatprep.subr.mxu0 0.0
      %386 = vmatpush1.xpose.msra.mxu0 0.0
      %387 = vmatprep.subr.mxu0 0.0
      %388 = vmatpush1.xpose.msra.mxu0 0.0
      %389 = vmatprep.subr.mxu0 0.0
      %390 = vmatpush1.xpose.msra.mxu0 0.0
      %391 = vmatprep.subr.mxu0 0.0
      %392 = vmatpush1.xpose.msra.mxu0 0.0
      %393 = vmatprep.subr.mxu0 0.0
      %394 = vmatpush1.xpose.msra.mxu0 0.0
      %395 = vmatprep.subr.mxu0 0.0
      %396 = vmatpush1.xpose.msra.mxu0 0.0
      %397 = vmatprep.subr.mxu0 0.0
      %398 = vmatpush1.xpose.msra.mxu0 0.0
      %399 = vmatprep.subr.mxu0 0.0
      %400 = vmatpush1.xpose.msra.mxu0 0.0
      %401 = vmatprep.subr.mxu0 0.0
      %402 = vmatpush1.xpose.msra.mxu0 0.0
      %403 = vmatprep.subr.mxu0 0.0
      %404 = vmatpush1.xpose.msra.mxu0 0.0
      %405 = vmatprep.subr.mxu0 0.0
      %406 = vmatpush1.xpose.msra.mxu0 0.0
      %407 = vmatprep.subr.mxu0 0.0
      %408 = vmatpush1.xpose.msra.mxu0 0.0
      %409 = vmatprep.subr.mxu0 0.0
      %410 = vmatpush1.xpose.msra.mxu0 0.0
      %411 = vmatprep.subr.mxu0 0.0
      %412 = vmatpush1.xpose.msra.mxu0 0.0
      %413 = vmatprep.subr.mxu0 0.0
      %414 = vmatpush1.xpose.msra.mxu0 0.0
      %415 = vmatprep.subr.mxu0 0.0
      %416 = vmatpush1.xpose.msra.mxu0 0.0
      %417 = vmatprep.subr.mxu0 0.0
      %418 = vmatpush1.xpose.msra.mxu0 0.0
      %419 = vmatprep.subr.mxu0 0.0
      %420 = vmatpush1.xpose.msra.mxu0 0.0
      %421 = vmatprep.subr.mxu0 0.0
      %422 = vmatpush1.xpose.msra.mxu0 0.0
      %423 = vmatprep.subr.mxu0 0.0
      %424 = vmatpush1.xpose.msra.mxu0 0.0
      %425 = vmatprep.subr.mxu0 0.0
      %426 = vmatpush1.xpose.msra.mxu0 0.0
      %427 = vmatprep.mubr.f32.mxu0 0.0
      %428 = vmatmul.mubr.f32.gmra.mrb[0].mxu0 %v355
      %v429 = vpop.f32.mrb[0].mxu0
      %v430 = vadd.f32 0.0, %v429
      %v431 = vpop.f32.mrb[0].mxu0
      %432 = vmatprep.mubr.f32.mxu0 0.0
      %433 = vmatmul.mubr.f32.gmra.mrb[0].mxu0 %v357
      %v434 = vpop.f32.mrb[0].mxu0
      %v435 = vadd.f32 0.0, %v434
      %v436 = vpop.f32.mrb[0].mxu0
      %437 = vdwg.mxu0
      %v438 = vmul.f32 %v430, 0.25
      %v439 = vmul.f32 %v435, 0.25
      %s440 = scalar_lea.vmem %s1, 16
      %v441 = vld [vmem:[%s440] sm:$0xff]
      %v442 = vld [vmem:[%s440 + $0x8] sm:$0xff]
      %v443 = vadd.f32 %v438, %v441
      %v444 = vadd.f32 %v439, %v442
      %v445 = vsel %vm154, %v443, -inf
      %446 = vmax.xlane.f32.xlu0 %v445
      %v447 = vpop.xlane.xlu0 %446
      %v448 = vsel %vm154, %v444, -inf
      %449 = vmax.xlane.f32.xlu0 %v448
      %v450 = vpop.xlane.xlu0 %449
      %v451 = vsub.f32 %v443, %v447
      %v452 = vsub.f32 %v444, %v450
      %v453 = vmul.f32 %v451, 1.442695
      %v454 = vpow.pop %v453
      %v455 = vmul.f32 %v452, 1.442695
      %v456 = vpow.pop %v455
      %v457 = vsel %vm154, %v454, 0.0
      %458 = vadd.xlane.f32.xlu0 %v457
      %v459 = vpop.xlane.xlu0 %458
      %v460 = vsel %vm154, %v456, 0.0
      %461 = vadd.xlane.f32.xlu0 %v460
      %v462 = vpop.xlane.xlu0 %461
      %v463 = vrcp.pop %v459
      %v464 = vrcp.pop %v462
      %v465 = vmul.f32 %v454, %v463
      %v466 = vmul.f32 %v456, %v464
      %469 = vrot.lane.b32.xlu0 %v145, 112
      %v470 = vpop.permute.xlu0 %469
      %471 = vrot.lane.b32.xlu0 %v147, 112
      %v472 = vpop.permute.xlu0 %471
      %v476 = vsel %vm154, %v465, 0
      %v479 = vsel %vm154, %v466, 0
      %481 = vmatprep.subr.mxu0 0.0
      %482 = vmatpush1.msra.mxu0 %v470
      %483 = vmatprep.subr.mxu0 0.0
      %484 = vmatpush1.msra.mxu0 %v472
      %485 = vmatprep.subr.mxu0 0.0
      %486 = vmatpush1.msra.mxu0 0.0
      %487 = vmatprep.subr.mxu0 0.0
      %488 = vmatpush1.msra.mxu0 0.0
      %489 = vmatprep.subr.mxu0 0.0
      %490 = vmatpush1.msra.mxu0 0.0
      %491 = vmatprep.subr.mxu0 0.0
      %492 = vmatpush1.msra.mxu0 0.0
      %493 = vmatprep.subr.mxu0 0.0
      %494 = vmatpush1.msra.mxu0 0.0
      %495 = vmatprep.subr.mxu0 0.0
      %496 = vmatpush1.msra.mxu0 0.0
      %497 = vmatprep.subr.mxu0 0.0
      %498 = vmatpush1.msra.mxu0 0.0
      %499 = vmatprep.subr.mxu0 0.0
      %500 = vmatpush1.msra.mxu0 0.0
      %501 = vmatprep.subr.mxu0 0.0
      %502 = vmatpush1.msra.mxu0 0.0
      %503 = vmatprep.subr.mxu0 0.0
      %504 = vmatpush1.msra.mxu0 0.0
      %505 = vmatprep.subr.mxu0 0.0
      %506 = vmatpush1.msra.mxu0 0.0
      %507 = vmatprep.subr.mxu0 0.0
      %508 = vmatpush1.msra.mxu0 0.0
      %509 = vmatprep.subr.mxu0 0.0
      %510 = vmatpush1.msra.mxu0 0.0
      %511 = vmatprep.subr.mxu0 0.0
      %512 = vmatpush1.msra.mxu0 0.0
      %513 = vmatprep.subr.mxu0 0.0
      %514 = vmatpush1.msra.mxu0 0.0
      %515 = vmatprep.subr.mxu0 0.0
      %516 = vmatpush1.msra.mxu0 0.0
      %517 = vmatprep.subr.mxu0 0.0
      %518 = vmatpush1.msra.mxu0 0.0
      %519 = vmatprep.subr.mxu0 0.0
      %520 = vmatpush1.msra.mxu0 0.0
      %521 = vmatprep.subr.mxu0 0.0
      %522 = vmatpush1.msra.mxu0 0.0
      %523 = vmatprep.subr.mxu0 0.0
      %524 = vmatpush1.msra.mxu0 0.0
      %525 = vmatprep.subr.mxu0 0.0
      %526 = vmatpush1.msra.mxu0 0.0
      %527 = vmatprep.subr.mxu0 0.0
      %528 = vmatpush1.msra.mxu0 0.0
      %529 = vmatprep.subr.mxu0 0.0
      %530 = vmatpush1.msra.mxu0 0.0
      %531 = vmatprep.subr.mxu0 0.0
      %532 = vmatpush1.msra.mxu0 0.0
      %533 = vmatprep.subr.mxu0 0.0
      %534 = vmatpush1.msra.mxu0 0.0
      %535 = vmatprep.subr.mxu0 0.0
      %536 = vmatpush1.msra.mxu0 0.0
      %537 = vmatprep.subr.mxu0 0.0
      %538 = vmatpush1.msra.mxu0 0.0
      %539 = vmatprep.subr.mxu0 0.0
      %540 = vmatpush1.msra.mxu0 0.0
      %541 = vmatprep.subr.mxu0 0.0
      %542 = vmatpush1.msra.mxu0 0.0
      %543 = vmatprep.subr.mxu0 0.0
      %544 = vmatpush1.msra.mxu0 0.0
      %545 = vmatprep.mubr.f32.mxu0 0.0
      %546 = vmatmul.mubr.f32.gmra.mrb[0].mxu0 %v476
      %v547 = vpop.f32.mrb[0].mxu0
      %v548 = vadd.f32 0.0, %v547
      %v549 = vpop.f32.mrb[0].mxu0
      %550 = vmatprep.mubr.f32.mxu0 0.0
      %551 = vmatmul.mubr.f32.gmra.mrb[0].mxu0 %v479
      %v552 = vpop.f32.mrb[0].mxu0
      %v553 = vadd.f32 0.0, %v552
      %v554 = vpop.f32.mrb[0].mxu0
      %555 = vdwg.mxu0
      %556 = vrot.lane.b32.xlu0 %v144, 96
      %v557 = vpop.permute.xlu0 %556
      %558 = vrot.lane.b32.xlu0 %v146, 96
      %v559 = vpop.permute.xlu0 %558
      %560 = vrot.lane.b32.xlu0 %v144, 32
      %v561 = vpop.permute.xlu0 %560
      %562 = vrot.lane.b32.xlu0 %v146, 32
      %v563 = vpop.permute.xlu0 %562
      %v564 = vsel %vm154, %v557, 0
      %v566 = vsel %vm154, %v559, 0
      %v568 = vsel %vm154, %v561, 0
      %v570 = vsel %vm154, %v563, 0
      %572 = vmatprep.subr.mxu0 0.0
      %573 = vmatpush1.xpose.msra.mxu0 %v568
      %574 = vmatprep.subr.mxu0 0.0
      %575 = vmatpush1.xpose.msra.mxu0 %v570
      %576 = vmatprep.subr.mxu0 0.0
      %577 = vmatpush1.xpose.msra.mxu0 0.0
      %578 = vmatprep.subr.mxu0 0.0
      %579 = vmatpush1.xpose.msra.mxu0 0.0
      %580 = vmatprep.subr.mxu0 0.0
      %581 = vmatpush1.xpose.msra.mxu0 0.0
      %582 = vmatprep.subr.mxu0 0.0
      %583 = vmatpush1.xpose.msra.mxu0 0.0
      %584 = vmatprep.subr.mxu0 0.0
      %585 = vmatpush1.xpose.msra.mxu0 0.0
      %586 = vmatprep.subr.mxu0 0.0
      %587 = vmatpush1.xpose.msra.mxu0 0.0
      %588 = vmatprep.subr.mxu0 0.0
      %589 = vmatpush1.xpose.msra.mxu0 0.0
      %590 = vmatprep.subr.mxu0 0.0
      %591 = vmatpush1.xpose.msra.mxu0 0.0
      %592 = vmatprep.subr.mxu0 0.0
      %593 = vmatpush1.xpose.msra.mxu0 0.0
      %594 = vmatprep.subr.mxu0 0.0
      %595 = vmatpush1.xpose.msra.mxu0 0.0
      %596 = vmatprep.subr.mxu0 0.0
      %597 = vmatpush1.xpose.msra.mxu0 0.0
      %598 = vmatprep.subr.mxu0 0.0
      %599 = vmatpush1.xpose.msra.mxu0 0.0
      %600 = vmatprep.subr.mxu0 0.0
      %601 = vmatpush1.xpose.msra.mxu0 0.0
      %602 = vmatprep.subr.mxu0 0.0
      %603 = vmatpush1.xpose.msra.mxu0 0.0
      %604 = vmatprep.subr.mxu0 0.0
      %605 = vmatpush1.xpose.msra.mxu0 0.0
      %606 = vmatprep.subr.mxu0 0.0
      %607 = vmatpush1.xpose.msra.mxu0 0.0
      %608 = vmatprep.subr.mxu0 0.0
      %609 = vmatpush1.xpose.msra.mxu0 0.0
      %610 = vmatprep.subr.mxu0 0.0
      %611 = vmatpush1.xpose.msra.mxu0 0.0
      %612 = vmatprep.subr.mxu0 0.0
      %613 = vmatpush1.xpose.msra.mxu0 0.0
      %614 = vmatprep.subr.mxu0 0.0
      %615 = vmatpush1.xpose.msra.mxu0 0.0
      %616 = vmatprep.subr.mxu0 0.0
      %617 = vmatpush1.xpose.msra.mxu0 0.0
      %618 = vmatprep.subr.mxu0 0.0
      %619 = vmatpush1.xpose.msra.mxu0 0.0
      %620 = vmatprep.subr.mxu0 0.0
      %621 = vmatpush1.xpose.msra.mxu0 0.0
      %622 = vmatprep.subr.mxu0 0.0
      %623 = vmatpush1.xpose.msra.mxu0 0.0
      %624 = vmatprep.subr.mxu0 0.0
      %625 = vmatpush1.xpose.msra.mxu0 0.0
      %626 = vmatprep.subr.mxu0 0.0
      %627 = vmatpush1.xpose.msra.mxu0 0.0
      %628 = vmatprep.subr.mxu0 0.0
      %629 = vmatpush1.xpose.msra.mxu0 0.0
      %630 = vmatprep.subr.mxu0 0.0
      %631 = vmatpush1.xpose.msra.mxu0 0.0
      %632 = vmatprep.subr.mxu0 0.0
      %633 = vmatpush1.xpose.msra.mxu0 0.0
      %634 = vmatprep.subr.mxu0 0.0
      %635 = vmatpush1.xpose.msra.mxu0 0.0
      %636 = vmatprep.mubr.f32.mxu0 0.0
      %637 = vmatmul.mubr.f32.gmra.mrb[0].mxu0 %v564
      %v638 = vpop.f32.mrb[0].mxu0
      %v639 = vadd.f32 0.0, %v638
      %v640 = vpop.f32.mrb[0].mxu0
      %641 = vmatprep.mubr.f32.mxu0 0.0
      %642 = vmatmul.mubr.f32.gmra.mrb[0].mxu0 %v566
      %v643 = vpop.f32.mrb[0].mxu0
      %v644 = vadd.f32 0.0, %v643
      %v645 = vpop.f32.mrb[0].mxu0
      %646 = vdwg.mxu0
      %v647 = vmul.f32 %v639, 0.25
      %v648 = vmul.f32 %v644, 0.25
      %s649 = scalar_lea.vmem %s1, 32
      %v650 = vld [vmem:[%s649] sm:$0xff]
      %v651 = vld [vmem:[%s649 + $0x8] sm:$0xff]
      %v652 = vadd.f32 %v647, %v650
      %v653 = vadd.f32 %v648, %v651
      %v654 = vsel %vm154, %v652, -inf
      %655 = vmax.xlane.f32.xlu0 %v654
      %v656 = vpop.xlane.xlu0 %655
      %v657 = vsel %vm154, %v653, -inf
      %658 = vmax.xlane.f32.xlu0 %v657
      %v659 = vpop.xlane.xlu0 %658
      %v660 = vsub.f32 %v652, %v656
      %v661 = vsub.f32 %v653, %v659
      %v662 = vmul.f32 %v660, 1.442695
      %v663 = vpow.pop %v662
      %v664 = vmul.f32 %v661, 1.442695
      %v665 = vpow.pop %v664
      %v666 = vsel %vm154, %v663, 0.0
      %667 = vadd.xlane.f32.xlu0 %v666
      %v668 = vpop.xlane.xlu0 %667
      %v669 = vsel %vm154, %v665, 0.0
      %670 = vadd.xlane.f32.xlu0 %v669
      %v671 = vpop.xlane.xlu0 %670
      %v672 = vrcp.pop %v668
      %v673 = vrcp.pop %v671
      %v674 = vmul.f32 %v663, %v672
      %v675 = vmul.f32 %v665, %v673
      %676 = vrot.lane.b32.xlu0 %v145, 96
      %v677 = vpop.permute.xlu0 %676
      %678 = vrot.lane.b32.xlu0 %v147, 96
      %v679 = vpop.permute.xlu0 %678
      %v683 = vsel %vm154, %v674, 0
      %v686 = vsel %vm154, %v675, 0
      %688 = vmatprep.subr.mxu0 0.0
      %689 = vmatpush1.msra.mxu0 %v677
      %690 = vmatprep.subr.mxu0 0.0
      %691 = vmatpush1.msra.mxu0 %v679
      %692 = vmatprep.subr.mxu0 0.0
      %693 = vmatpush1.msra.mxu0 0.0
      %694 = vmatprep.subr.mxu0 0.0
      %695 = vmatpush1.msra.mxu0 0.0
      %696 = vmatprep.subr.mxu0 0.0
      %697 = vmatpush1.msra.mxu0 0.0
      %698 = vmatprep.subr.mxu0 0.0
      %699 = vmatpush1.msra.mxu0 0.0
      %700 = vmatprep.subr.mxu0 0.0
      %701 = vmatpush1.msra.mxu0 0.0
      %702 = vmatprep.subr.mxu0 0.0
      %703 = vmatpush1.msra.mxu0 0.0
      %704 = vmatprep.subr.mxu0 0.0
      %705 = vmatpush1.msra.mxu0 0.0
      %706 = vmatprep.subr.mxu0 0.0
      %707 = vmatpush1.msra.mxu0 0.0
      %708 = vmatprep.subr.mxu0 0.0
      %709 = vmatpush1.msra.mxu0 0.0
      %710 = vmatprep.subr.mxu0 0.0
      %711 = vmatpush1.msra.mxu0 0.0
      %712 = vmatprep.subr.mxu0 0.0
      %713 = vmatpush1.msra.mxu0 0.0
      %714 = vmatprep.subr.mxu0 0.0
      %715 = vmatpush1.msra.mxu0 0.0
      %716 = vmatprep.subr.mxu0 0.0
      %717 = vmatpush1.msra.mxu0 0.0
      %718 = vmatprep.subr.mxu0 0.0
      %719 = vmatpush1.msra.mxu0 0.0
      %720 = vmatprep.subr.mxu0 0.0
      %721 = vmatpush1.msra.mxu0 0.0
      %722 = vmatprep.subr.mxu0 0.0
      %723 = vmatpush1.msra.mxu0 0.0
      %724 = vmatprep.subr.mxu0 0.0
      %725 = vmatpush1.msra.mxu0 0.0
      %726 = vmatprep.subr.mxu0 0.0
      %727 = vmatpush1.msra.mxu0 0.0
      %728 = vmatprep.subr.mxu0 0.0
      %729 = vmatpush1.msra.mxu0 0.0
      %730 = vmatprep.subr.mxu0 0.0
      %731 = vmatpush1.msra.mxu0 0.0
      %732 = vmatprep.subr.mxu0 0.0
      %733 = vmatpush1.msra.mxu0 0.0
      %734 = vmatprep.subr.mxu0 0.0
      %735 = vmatpush1.msra.mxu0 0.0
      %736 = vmatprep.subr.mxu0 0.0
      %737 = vmatpush1.msra.mxu0 0.0
      %738 = vmatprep.subr.mxu0 0.0
      %739 = vmatpush1.msra.mxu0 0.0
      %740 = vmatprep.subr.mxu0 0.0
      %741 = vmatpush1.msra.mxu0 0.0
      %742 = vmatprep.subr.mxu0 0.0
      %743 = vmatpush1.msra.mxu0 0.0
      %744 = vmatprep.subr.mxu0 0.0
      %745 = vmatpush1.msra.mxu0 0.0
      %746 = vmatprep.subr.mxu0 0.0
      %747 = vmatpush1.msra.mxu0 0.0
      %748 = vmatprep.subr.mxu0 0.0
      %749 = vmatpush1.msra.mxu0 0.0
      %750 = vmatprep.subr.mxu0 0.0
      %751 = vmatpush1.msra.mxu0 0.0
      %752 = vmatprep.mubr.f32.mxu0 0.0
      %753 = vmatmul.mubr.f32.gmra.mrb[0].mxu0 %v683
      %v754 = vpop.f32.mrb[0].mxu0
      %v755 = vadd.f32 0.0, %v754
      %v756 = vpop.f32.mrb[0].mxu0
      %757 = vmatprep.mubr.f32.mxu0 0.0
      %758 = vmatmul.mubr.f32.gmra.mrb[0].mxu0 %v686
      %v759 = vpop.f32.mrb[0].mxu0
      %v760 = vadd.f32 0.0, %v759
      %v761 = vpop.f32.mrb[0].mxu0
      %762 = vdwg.mxu0
      %763 = vrot.lane.b32.xlu0 %v144, 80
      %v764 = vpop.permute.xlu0 %763
      %765 = vrot.lane.b32.xlu0 %v146, 80
      %v766 = vpop.permute.xlu0 %765
      %767 = vrot.lane.b32.xlu0 %v144, 16
      %v768 = vpop.permute.xlu0 %767
      %769 = vrot.lane.b32.xlu0 %v146, 16
      %v770 = vpop.permute.xlu0 %769
      %v771 = vsel %vm154, %v764, 0
      %v773 = vsel %vm154, %v766, 0
      %v775 = vsel %vm154, %v768, 0
      %v777 = vsel %vm154, %v770, 0
      %779 = vmatprep.subr.mxu0 0.0
      %780 = vmatpush1.xpose.msra.mxu0 %v775
      %781 = vmatprep.subr.mxu0 0.0
      %782 = vmatpush1.xpose.msra.mxu0 %v777
      %783 = vmatprep.subr.mxu0 0.0
      %784 = vmatpush1.xpose.msra.mxu0 0.0
      %785 = vmatprep.subr.mxu0 0.0
      %786 = vmatpush1.xpose.msra.mxu0 0.0
      %787 = vmatprep.subr.mxu0 0.0
      %788 = vmatpush1.xpose.msra.mxu0 0.0
      %789 = vmatprep.subr.mxu0 0.0
      %790 = vmatpush1.xpose.msra.mxu0 0.0
      %791 = vmatprep.subr.mxu0 0.0
      %792 = vmatpush1.xpose.msra.mxu0 0.0
      %793 = vmatprep.subr.mxu0 0.0
      %794 = vmatpush1.xpose.msra.mxu0 0.0
      %795 = vmatprep.subr.mxu0 0.0
      %796 = vmatpush1.xpose.msra.mxu0 0.0
      %797 = vmatprep.subr.mxu0 0.0
      %798 = vmatpush1.xpose.msra.mxu0 0.0
      %799 = vmatprep.subr.mxu0 0.0
      %800 = vmatpush1.xpose.msra.mxu0 0.0
      %801 = vmatprep.subr.mxu0 0.0
      %802 = vmatpush1.xpose.msra.mxu0 0.0
      %803 = vmatprep.subr.mxu0 0.0
      %804 = vmatpush1.xpose.msra.mxu0 0.0
      %805 = vmatprep.subr.mxu0 0.0
      %806 = vmatpush1.xpose.msra.mxu0 0.0
      %807 = vmatprep.subr.mxu0 0.0
      %808 = vmatpush1.xpose.msra.mxu0 0.0
      %809 = vmatprep.subr.mxu0 0.0
      %810 = vmatpush1.xpose.msra.mxu0 0.0
      %811 = vmatprep.subr.mxu0 0.0
      %812 = vmatpush1.xpose.msra.mxu0 0.0
      %813 = vmatprep.subr.mxu0 0.0
      %814 = vmatpush1.xpose.msra.mxu0 0.0
      %815 = vmatprep.subr.mxu0 0.0
      %816 = vmatpush1.xpose.msra.mxu0 0.0
      %817 = vmatprep.subr.mxu0 0.0
      %818 = vmatpush1.xpose.msra.mxu0 0.0
      %819 = vmatprep.subr.mxu0 0.0
      %820 = vmatpush1.xpose.msra.mxu0 0.0
      %821 = vmatprep.subr.mxu0 0.0
      %822 = vmatpush1.xpose.msra.mxu0 0.0
      %823 = vmatprep.subr.mxu0 0.0
      %824 = vmatpush1.xpose.msra.mxu0 0.0
      %825 = vmatprep.subr.mxu0 0.0
      %826 = vmatpush1.xpose.msra.mxu0 0.0
      %827 = vmatprep.subr.mxu0 0.0
      %828 = vmatpush1.xpose.msra.mxu0 0.0
      %829 = vmatprep.subr.mxu0 0.0
      %830 = vmatpush1.xpose.msra.mxu0 0.0
      %831 = vmatprep.subr.mxu0 0.0
      %832 = vmatpush1.xpose.msra.mxu0 0.0
      %833 = vmatprep.subr.mxu0 0.0
      %834 = vmatpush1.xpose.msra.mxu0 0.0
      %835 = vmatprep.subr.mxu0 0.0
      %836 = vmatpush1.xpose.msra.mxu0 0.0
      %837 = vmatprep.subr.mxu0 0.0
      %838 = vmatpush1.xpose.msra.mxu0 0.0
      %839 = vmatprep.subr.mxu0 0.0
      %840 = vmatpush1.xpose.msra.mxu0 0.0
      %841 = vmatprep.subr.mxu0 0.0
      %842 = vmatpush1.xpose.msra.mxu0 0.0
      %843 = vmatprep.mubr.f32.mxu0 0.0
      %844 = vmatmul.mubr.f32.gmra.mrb[0].mxu0 %v771
      %v845 = vpop.f32.mrb[0].mxu0
      %v846 = vadd.f32 0.0, %v845
      %v847 = vpop.f32.mrb[0].mxu0
      %848 = vmatprep.mubr.f32.mxu0 0.0
      %849 = vmatmul.mubr.f32.gmra.mrb[0].mxu0 %v773
      %v850 = vpop.f32.mrb[0].mxu0
      %v851 = vadd.f32 0.0, %v850
      %v852 = vpop.f32.mrb[0].mxu0
      %853 = vdwg.mxu0
      %v854 = vmul.f32 %v846, 0.25
      %v855 = vmul.f32 %v851, 0.25
      %s856 = scalar_lea.vmem %s1, 48
      %v857 = vld [vmem:[%s856] sm:$0xff]
      %v858 = vld [vmem:[%s856 + $0x8] sm:$0xff]
      %v859 = vadd.f32 %v854, %v857
      %v860 = vadd.f32 %v855, %v858
      %v861 = vsel %vm154, %v859, -inf
      %862 = vmax.xlane.f32.xlu0 %v861
      %v863 = vpop.xlane.xlu0 %862
      %v864 = vsel %vm154, %v860, -inf
      %865 = vmax.xlane.f32.xlu0 %v864
      %v866 = vpop.xlane.xlu0 %865
      %v867 = vsub.f32 %v859, %v863
      %v868 = vsub.f32 %v860, %v866
      %v869 = vmul.f32 %v867, 1.442695
      %v870 = vpow.pop %v869
      %v871 = vmul.f32 %v868, 1.442695
      %v872 = vpow.pop %v871
      %v873 = vsel %vm154, %v870, 0.0
      %874 = vadd.xlane.f32.xlu0 %v873
      %v875 = vpop.xlane.xlu0 %874
      %v876 = vsel %vm154, %v872, 0.0
      %877 = vadd.xlane.f32.xlu0 %v876
      %v878 = vpop.xlane.xlu0 %877
      %v879 = vrcp.pop %v875
      %v880 = vrcp.pop %v878
      %v881 = vmul.f32 %v870, %v879
      %v882 = vmul.f32 %v872, %v880
      %883 = vrot.lane.b32.xlu0 %v145, 80
      %v884 = vpop.permute.xlu0 %883
      %885 = vrot.lane.b32.xlu0 %v147, 80
      %v886 = vpop.permute.xlu0 %885
      %v890 = vsel %vm154, %v881, 0
      %v893 = vsel %vm154, %v882, 0
      %895 = vmatprep.subr.mxu0 0.0
      %896 = vmatpush1.msra.mxu0 %v884
      %897 = vmatprep.subr.mxu0 0.0
      %898 = vmatpush1.msra.mxu0 %v886
      %899 = vmatprep.subr.mxu0 0.0
      %900 = vmatpush1.msra.mxu0 0.0
      %901 = vmatprep.subr.mxu0 0.0
      %902 = vmatpush1.msra.mxu0 0.0
      %903 = vmatprep.subr.mxu0 0.0
      %904 = vmatpush1.msra.mxu0 0.0
      %905 = vmatprep.subr.mxu0 0.0
      %906 = vmatpush1.msra.mxu0 0.0
      %907 = vmatprep.subr.mxu0 0.0
      %908 = vmatpush1.msra.mxu0 0.0
      %909 = vmatprep.subr.mxu0 0.0
      %910 = vmatpush1.msra.mxu0 0.0
      %911 = vmatprep.subr.mxu0 0.0
      %912 = vmatpush1.msra.mxu0 0.0
      %913 = vmatprep.subr.mxu0 0.0
      %914 = vmatpush1.msra.mxu0 0.0
      %915 = vmatprep.subr.mxu0 0.0
      %916 = vmatpush1.msra.mxu0 0.0
      %917 = vmatprep.subr.mxu0 0.0
      %918 = vmatpush1.msra.mxu0 0.0
      %919 = vmatprep.subr.mxu0 0.0
      %920 = vmatpush1.msra.mxu0 0.0
      %921 = vmatprep.subr.mxu0 0.0
      %922 = vmatpush1.msra.mxu0 0.0
      %923 = vmatprep.subr.mxu0 0.0
      %924 = vmatpush1.msra.mxu0 0.0
      %925 = vmatprep.subr.mxu0 0.0
      %926 = vmatpush1.msra.mxu0 0.0
      %927 = vmatprep.subr.mxu0 0.0
      %928 = vmatpush1.msra.mxu0 0.0
      %929 = vmatprep.subr.mxu0 0.0
      %930 = vmatpush1.msra.mxu0 0.0
      %931 = vmatprep.subr.mxu0 0.0
      %932 = vmatpush1.msra.mxu0 0.0
      %933 = vmatprep.subr.mxu0 0.0
      %934 = vmatpush1.msra.mxu0 0.0
      %935 = vmatprep.subr.mxu0 0.0
      %936 = vmatpush1.msra.mxu0 0.0
      %937 = vmatprep.subr.mxu0 0.0
      %938 = vmatpush1.msra.mxu0 0.0
      %939 = vmatprep.subr.mxu0 0.0
      %940 = vmatpush1.msra.mxu0 0.0
      %941 = vmatprep.subr.mxu0 0.0
      %942 = vmatpush1.msra.mxu0 0.0
      %943 = vmatprep.subr.mxu0 0.0
      %944 = vmatpush1.msra.mxu0 0.0
      %945 = vmatprep.subr.mxu0 0.0
      %946 = vmatpush1.msra.mxu0 0.0
      %947 = vmatprep.subr.mxu0 0.0
      %948 = vmatpush1.msra.mxu0 0.0
      %949 = vmatprep.subr.mxu0 0.0
      %950 = vmatpush1.msra.mxu0 0.0
      %951 = vmatprep.subr.mxu0 0.0
      %952 = vmatpush1.msra.mxu0 0.0
      %953 = vmatprep.subr.mxu0 0.0
      %954 = vmatpush1.msra.mxu0 0.0
      %955 = vmatprep.subr.mxu0 0.0
      %956 = vmatpush1.msra.mxu0 0.0
      %957 = vmatprep.subr.mxu0 0.0
      %958 = vmatpush1.msra.mxu0 0.0
      %959 = vmatprep.mubr.f32.mxu0 0.0
      %960 = vmatmul.mubr.f32.gmra.mrb[0].mxu0 %v890
      %v961 = vpop.f32.mrb[0].mxu0
      %v962 = vadd.f32 0.0, %v961
      %v963 = vpop.f32.mrb[0].mxu0
      %964 = vmatprep.mubr.f32.mxu0 0.0
      %965 = vmatmul.mubr.f32.gmra.mrb[0].mxu0 %v893
      %v966 = vpop.f32.mrb[0].mxu0
      %v967 = vadd.f32 0.0, %v966
      %v968 = vpop.f32.mrb[0].mxu0
      %969 = vdwg.mxu0
      %972 = vrot.lane.b32.xlu0 %v548, 16
      %v973 = vpop.permute.xlu0 %972
      %974 = vrot.lane.b32.xlu0 %v553, 16
      %v975 = vpop.permute.xlu0 %974
      %980 = vrot.lane.b32.xlu0 %v755, 32
      %v981 = vpop.permute.xlu0 %980
      %982 = vrot.lane.b32.xlu0 %v760, 32
      %v983 = vpop.permute.xlu0 %982
      %988 = vrot.lane.b32.xlu0 %v962, 48
      %v989 = vpop.permute.xlu0 %988
      %990 = vrot.lane.b32.xlu0 %v967, 48
      %v991 = vpop.permute.xlu0 %990
      %v994 = vsel %vm154, %v339, %v973
      %v995 = vsel %vm154, %v344, %v975
      %vm996 = vcmask 261120
      %v997 = vsel %vm996, %v994, %v981
      %v998 = vsel %vm996, %v995, %v983
      %vm999 = vcmask 392192
      %v1000 = vsel %vm999, %v997, %v989
      %v1001 = vsel %vm999, %v998, %v991
      %vm1002 = vcmask 523264
      %1003 = vst.msk [vmem:[%s143] sm:$0xff] %vm1002, %v1000
      %1004 = vst.msk [vmem:[%s143 + $0x8] sm:$0xff] %vm1002, %v1001
      %p1005 = scmp.lt.s32.totalorder %s13, 1
      %s1006 = scalar_select %p1005, %s13, 1
      %s1007 = smul.addr %s1006, 2
      %s1008 = smul.addr %s1007, 8
      %s1009 = scalar_lea.vmem %s2, %s1008
      // Predicated region
      $region29: #{sam_forward.14} parent=27 // pred_check
        %p1010 = pneg %p78
      $region30: #{sam_forward.14} parent=27 // pred_check_branch
        %1012 = sbr.rel (%p1010) target = $region32
      $region31: #{sam_forward.14} parent=27 // pred_region
        _
      $region32: #{sam_forward.14} parent=27 // pred_fallthru
        _
    $region28: #{sam_forward.14} parent=5 // pred_fallthru
      _
    %p1013 = scmp.le.s32.totalorder 2, %s8
    // Predicated region
    $region33: #{sam_forward.14} parent=5 // pred_check
      %p1014 = pneg %p1013
    $region34: #{sam_forward.14} parent=5 // pred_check_branch
      %1016 = sbr.rel (%p1014) target = $region36
    $region35: #{sam_forward.14} parent=5 // pred_region
      %s1017 = ssub.s32 %s8, 2
      // Predicated region
      $region37: #{sam_forward.14} parent=35 // pred_check
        %p1018 = pneg %p84
      $region38: #{sam_forward.14} parent=35 // pred_check_branch
        %1020 = sbr.rel (%p1018) target = $region40
      $region39: #{sam_forward.14} parent=35 // pred_region
        %p1021 = scmp.lt.s32.totalorder %s14, 1
        %s1022 = scalar_select %p1021, %s14, 1
        %s1023 = smul.addr %s1022, 2
        %s1024 = smul.addr %s1023, 8
        %s1025 = scalar_lea.vmem %s2, %s1024
      $region40: #{sam_forward.14} parent=35 // pred_fallthru
        _
    $region36: #{sam_forward.14} parent=5 // pred_fallthru
      _
  $region6: #{sam_forward.14} parent=0 // loop_footer
    %s12 = sadd.s32 1, %s8
  $region7: #{sam_forward.14} parent=0 // loop_footer_branch
    %7 = sbr.rel target = $region3
  $region8: #{sam_forward.14} parent=0 // loop_exit
    _

// kernel: sam_forward.16
$region0: #{sam_forward.16}
  #allocation0 [shape = 'u32[]', space=smem, size = 0x4, offset = 0x4, fixed_abs, tag = 'smem constant byte address 0x4 - core index']
  #allocation1 [shape = 'u32[144,128]{1,0:T(1,128)}', space=vmem, size = 0x12000, scoped, tag = 'internal scratch']
  #allocation2 [shape = 'f32[32,128]{1,0:T(8,128)}', space=vmem, size = 0x4000, scoped, tag = 'scratch operand']
  %s0 = inlined_call_operand.vmem [shape: f32[32,64], index: 0, kind: input, shape index: {}]
  %s1 = inlined_call_operand.vmem [shape: f32[64,128], index: 1, kind: input, shape index: {}]
  %s2 = inlined_call_operand.vmem [shape: f32[1,128], index: 2, kind: input, shape index: {}]
  %s3 = inlined_call_operand.vmem [shape: f32[32,128], index: 3, kind: output, shape index: {}]
  %s4 = sld [smem:[#allocation0]]
  $region30: #{sam_forward.16} parent=0
    _
  %s6 = ssub.s32 1, %s4
  %s7 = scalar_select 0, %s6, %s4
  // Predicated region
  $region2: #{sam_forward.16} parent=0 // pred_check
    _
  $region3: #{sam_forward.16} parent=0 // pred_check_branch
    %9 = sbr.rel (0) target = $region5
  $region4: #{sam_forward.16} parent=0 // pred_region
    _
  $region5: #{sam_forward.16} parent=0 // pred_fallthru
    _
  // Predicated region
  $region6: #{sam_forward.16} parent=0 // pred_check
    _
  $region7: #{sam_forward.16} parent=0 // pred_check_branch
    %11 = sbr.rel (0) target = $region9
  $region8: #{sam_forward.16} parent=0 // pred_region
    _
  $region9: #{sam_forward.16} parent=0 // pred_fallthru
    _
  // Predicated region
  $region10: #{sam_forward.16} parent=0 // pred_check
    _
  $region11: #{sam_forward.16} parent=0 // pred_check_branch
    %13 = sbr.rel (0) target = $region13
  $region12: #{sam_forward.16} parent=0 // pred_region
    _
  $region13: #{sam_forward.16} parent=0 // pred_fallthru
    _
  %p14 = scmp.eq.s32.totalorder 0, 0
  // Predicated region
  $region14: #{sam_forward.16} parent=0 // pred_check
    %p15 = pneg %p14
  $region15: #{sam_forward.16} parent=0 // pred_check_branch
    %17 = sbr.rel (%p15) target = $region17
  $region16: #{sam_forward.16} parent=0 // pred_region
    %18 = vst [vmem:[#allocation2] sm:$0xff] 0.0
    %19 = vst [vmem:[#allocation2 + $0x8] sm:$0xff] 0.0
    %20 = vst [vmem:[#allocation2 + $0x10] sm:$0xff] 0.0
    %21 = vst [vmem:[#allocation2 + $0x18] sm:$0xff] 0.0
  $region17: #{sam_forward.16} parent=0 // pred_fallthru
    _
  %v22 = vld [vmem:[#allocation2] sm:$0xff]
  %v23 = vld [vmem:[#allocation2 + $0x8] sm:$0xff]
  %v24 = vld [vmem:[#allocation2 + $0x10] sm:$0xff]
  %v25 = vld [vmem:[#allocation2 + $0x18] sm:$0xff]
  %v26 = vld [vmem:[%s0] sm:$0xff]
  %v27 = vld [vmem:[%s0 + $0x8] sm:$0xff]
  %v28 = vld [vmem:[%s0 + $0x10] sm:$0xff]
  %v29 = vld [vmem:[%s0 + $0x18] sm:$0xff]
  %v30 = vld [vmem:[%s1] sm:$0xff]
  %v31 = vld [vmem:[%s1 + $0x8] sm:$0xff]
  %v32 = vld [vmem:[%s1 + $0x10] sm:$0xff]
  %v33 = vld [vmem:[%s1 + $0x18] sm:$0xff]
  %v34 = vld [vmem:[%s1 + $0x20] sm:$0xff]
  %v35 = vld [vmem:[%s1 + $0x28] sm:$0xff]
  %v36 = vld [vmem:[%s1 + $0x30] sm:$0xff]
  %v37 = vld [vmem:[%s1 + $0x38] sm:$0xff]
  %vm38 = vcmask 523264
  %v40 = vsel %vm38, %v26, 0
  %v43 = vsel %vm38, %v27, 0
  %v46 = vsel %vm38, %v28, 0
  %v49 = vsel %vm38, %v29, 0
  %51 = vmatprep.subr.mxu0 0.0
  %52 = vmatpush1.msra.mxu0 %v30
  %53 = vmatprep.subr.mxu0 0.0
  %54 = vmatpush1.msra.mxu0 %v31
  %55 = vmatprep.subr.mxu0 0.0
  %56 = vmatpush1.msra.mxu0 %v32
  %57 = vmatprep.subr.mxu0 0.0
  %58 = vmatpush1.msra.mxu0 %v33
  %59 = vmatprep.subr.mxu0 0.0
  %60 = vmatpush1.msra.mxu0 %v34
  %61 = vmatprep.subr.mxu0 0.0
  %62 = vmatpush1.msra.mxu0 %v35
  %63 = vmatprep.subr.mxu0 0.0
  %64 = vmatpush1.msra.mxu0 %v36
  %65 = vmatprep.subr.mxu0 0.0
  %66 = vmatpush1.msra.mxu0 %v37
  %67 = vmatprep.subr.mxu0 0.0
  %68 = vmatpush1.msra.mxu0 0.0
  %69 = vmatprep.subr.mxu0 0.0
  %70 = vmatpush1.msra.mxu0 0.0
  %71 = vmatprep.subr.mxu0 0.0
  %72 = vmatpush1.msra.mxu0 0.0
  %73 = vmatprep.subr.mxu0 0.0
  %74 = vmatpush1.msra.mxu0 0.0
  %75 = vmatprep.subr.mxu0 0.0
  %76 = vmatpush1.msra.mxu0 0.0
  %77 = vmatprep.subr.mxu0 0.0
  %78 = vmatpush1.msra.mxu0 0.0
  %79 = vmatprep.subr.mxu0 0.0
  %80 = vmatpush1.msra.mxu0 0.0
  %81 = vmatprep.subr.mxu0 0.0
  %82 = vmatpush1.msra.mxu0 0.0
  %83 = vmatprep.subr.mxu0 0.0
  %84 = vmatpush1.msra.mxu0 0.0
  %85 = vmatprep.subr.mxu0 0.0
  %86 = vmatpush1.msra.mxu0 0.0
  %87 = vmatprep.subr.mxu0 0.0
  %88 = vmatpush1.msra.mxu0 0.0
  %89 = vmatprep.subr.mxu0 0.0
  %90 = vmatpush1.msra.mxu0 0.0
  %91 = vmatprep.subr.mxu0 0.0
  %92 = vmatpush1.msra.mxu0 0.0
  %93 = vmatprep.subr.mxu0 0.0
  %94 = vmatpush1.msra.mxu0 0.0
  %95 = vmatprep.subr.mxu0 0.0
  %96 = vmatpush1.msra.mxu0 0.0
  %97 = vmatprep.subr.mxu0 0.0
  %98 = vmatpush1.msra.mxu0 0.0
  %99 = vmatprep.subr.mxu0 0.0
  %100 = vmatpush1.msra.mxu0 0.0
  %101 = vmatprep.subr.mxu0 0.0
  %102 = vmatpush1.msra.mxu0 0.0
  %103 = vmatprep.subr.mxu0 0.0
  %104 = vmatpush1.msra.mxu0 0.0
  %105 = vmatprep.subr.mxu0 0.0
  %106 = vmatpush1.msra.mxu0 0.0
  %107 = vmatprep.subr.mxu0 0.0
  %108 = vmatpush1.msra.mxu0 0.0
  %109 = vmatprep.subr.mxu0 0.0
  %110 = vmatpush1.msra.mxu0 0.0
  %111 = vmatprep.subr.mxu0 0.0
  %112 = vmatpush1.msra.mxu0 0.0
  %113 = vmatprep.subr.mxu0 0.0
  %114 = vmatpush1.msra.mxu0 0.0
  %115 = vmatprep.mubr.f32.mxu0 0.0
  %116 = vmatmul.mubr.f32.gmra.mrb[0].mxu0 %v40
  %v117 = vpop.f32.mrb[0].mxu0
  %v118 = vadd.f32 0.0, %v117
  %v119 = vpop.f32.mrb[0].mxu0
  %120 = vmatprep.mubr.f32.mxu0 0.0
  %121 = vmatmul.mubr.f32.gmra.mrb[0].mxu0 %v43
  %v122 = vpop.f32.mrb[0].mxu0
  %v123 = vadd.f32 0.0, %v122
  %v124 = vpop.f32.mrb[0].mxu0
  %125 = vmatprep.mubr.f32.mxu0 0.0
  %126 = vmatmul.mubr.f32.gmra.mrb[0].mxu0 %v46
  %v127 = vpop.f32.mrb[0].mxu0
  %v128 = vadd.f32 0.0, %v127
  %v129 = vpop.f32.mrb[0].mxu0
  %130 = vmatprep.mubr.f32.mxu0 0.0
  %131 = vmatmul.mubr.f32.gmra.mrb[0].mxu0 %v49
  %v132 = vpop.f32.mrb[0].mxu0
  %v133 = vadd.f32 0.0, %v132
  %v134 = vpop.f32.mrb[0].mxu0
  %135 = vdwg.mxu0
  %v136 = vadd.f32 %v22, %v118
  %v137 = vadd.f32 %v23, %v123
  %v138 = vadd.f32 %v24, %v128
  %v139 = vadd.f32 %v25, %v133
  %140 = vst [vmem:[#allocation2] sm:$0xff] %v136
  %141 = vst [vmem:[#allocation2 + $0x8] sm:$0xff] %v137
  %142 = vst [vmem:[#allocation2 + $0x10] sm:$0xff] %v138
  %143 = vst [vmem:[#allocation2 + $0x18] sm:$0xff] %v139
  // Predicated region
  $region18: #{sam_forward.16} parent=0 // pred_check
    %p144 = pneg %p14
  $region19: #{sam_forward.16} parent=0 // pred_check_branch
    %146 = sbr.rel (%p144) target = $region21
  $region20: #{sam_forward.16} parent=0 // pred_region
    %v147 = vld [vmem:[#allocation2] sm:$0xff]
    %v148 = vld [vmem:[#allocation2 + $0x8] sm:$0xff]
    %v149 = vld [vmem:[#allocation2 + $0x10] sm:$0xff]
    %v150 = vld [vmem:[#allocation2 + $0x18] sm:$0xff]
    %v151 = vld [vmem:[%s2] sm:$0x1]
    %v153 = vlaneseq
    %v154 = vshrl.u32 %v153, 7
    %v155 = vsub.s32 0, %v154
    %v156 = vrot.slane %v151, %v155
    %v158 = vadd.f32 %v147, %v156
    %v159 = vadd.f32 %v148, %v156
    %v160 = vadd.f32 %v149, %v156
    %v161 = vadd.f32 %v150, %v156
    %v162 = vmax.f32 %v158, 0.0
    %v163 = vmax.f32 %v159, 0.0
    %v164 = vmax.f32 %v160, 0.0
    %v165 = vmax.f32 %v161, 0.0
    %166 = vst [vmem:[%s3] sm:$0xff] %v162
    %167 = vst [vmem:[%s3 + $0x8] sm:$0xff] %v163
    %168 = vst [vmem:[%s3 + $0x10] sm:$0xff] %v164
    %169 = vst [vmem:[%s3 + $0x18] sm:$0xff] %v165
  $region21: #{sam_forward.16} parent=0 // pred_fallthru
    _
  // Predicated region
  $region22: #{sam_forward.16} parent=0 // pred_check
    _
  $region23: #{sam_forward.16} parent=0 // pred_check_branch
    %171 = sbr.rel (0) target = $region25
  $region24: #{sam_forward.16} parent=0 // pred_region
    _
  $region25: #{sam_forward.16} parent=0 // pred_fallthru
    _
  // Predicated region
  $region26: #{sam_forward.16} parent=0 // pred_check
    _
  $region27: #{sam_forward.16} parent=0 // pred_check_branch
    %173 = sbr.rel (0) target = $region29
  $region28: #{sam_forward.16} parent=0 // pred_region
    _
  $region29: #{sam_forward.16} parent=0 // pred_fallthru
    _

// kernel: sam_forward.15
$region0: #{sam_forward.15}
  #allocation0 [shape = 'u32[]', space=smem, size = 0x4, offset = 0x4, fixed_abs, tag = 'smem constant byte address 0x4 - core index']
  #allocation1 [shape = 'u32[144,128]{1,0:T(1,128)}', space=vmem, size = 0x12000, scoped, tag = 'internal scratch']
  #allocation2 [shape = 'f32[32,64]{1,0:T(8,128)}', space=vmem, size = 0x4000, scoped, tag = 'scratch operand']
  %s0 = inlined_call_operand.vmem [shape: f32[32,64], index: 0, kind: input, shape index: {}]
  %s1 = inlined_call_operand.vmem [shape: f32[64,64], index: 1, kind: input, shape index: {}]
  %s2 = inlined_call_operand.vmem [shape: f32[1,64], index: 2, kind: input, shape index: {}]
  %s3 = inlined_call_operand.vmem [shape: f32[32,64], index: 3, kind: input, shape index: {}]
  %s4 = inlined_call_operand.vmem [shape: f32[1,64], index: 4, kind: input, shape index: {}]
  %s5 = inlined_call_operand.vmem [shape: f32[1,64], index: 5, kind: input, shape index: {}]
  %s6 = inlined_call_operand.vmem [shape: f32[32,64], index: 6, kind: output, shape index: {}]
  %s7 = sld [smem:[#allocation0]]
  $region42: #{sam_forward.15} parent=0
    _
  %s9 = ssub.s32 1, %s7
  %s10 = scalar_select 0, %s9, %s7
  // Predicated region
  $region2: #{sam_forward.15} parent=0 // pred_check
    _
  $region3: #{sam_forward.15} parent=0 // pred_check_branch
    %12 = sbr.rel (0) target = $region5
  $region4: #{sam_forward.15} parent=0 // pred_region
    _
  $region5: #{sam_forward.15} parent=0 // pred_fallthru
    _
  // Predicated region
  $region6: #{sam_forward.15} parent=0 // pred_check
    _
  $region7: #{sam_forward.15} parent=0 // pred_check_branch
    %14 = sbr.rel (0) target = $region9
  $region8: #{sam_forward.15} parent=0 // pred_region
    _
  $region9: #{sam_forward.15} parent=0 // pred_fallthru
    _
  // Predicated region
  $region10: #{sam_forward.15} parent=0 // pred_check
    _
  $region11: #{sam_forward.15} parent=0 // pred_check_branch
    %16 = sbr.rel (0) target = $region13
  $region12: #{sam_forward.15} parent=0 // pred_region
    _
  $region13: #{sam_forward.15} parent=0 // pred_fallthru
    _
  // Predicated region
  $region14: #{sam_forward.15} parent=0 // pred_check
    _
  $region15: #{sam_forward.15} parent=0 // pred_check_branch
    %18 = sbr.rel (0) target = $region17
  $region16: #{sam_forward.15} parent=0 // pred_region
    _
  $region17: #{sam_forward.15} parent=0 // pred_fallthru
    _
  // Predicated region
  $region18: #{sam_forward.15} parent=0 // pred_check
    _
  $region19: #{sam_forward.15} parent=0 // pred_check_branch
    %20 = sbr.rel (0) target = $region21
  $region20: #{sam_forward.15} parent=0 // pred_region
    _
  $region21: #{sam_forward.15} parent=0 // pred_fallthru
    _
  // Predicated region
  $region22: #{sam_forward.15} parent=0 // pred_check
    _
  $region23: #{sam_forward.15} parent=0 // pred_check_branch
    %22 = sbr.rel (0) target = $region25
  $region24: #{sam_forward.15} parent=0 // pred_region
    _
  $region25: #{sam_forward.15} parent=0 // pred_fallthru
    _
  %p23 = scmp.eq.s32.totalorder 0, 0
  // Predicated region
  $region26: #{sam_forward.15} parent=0 // pred_check
    %p24 = pneg %p23
  $region27: #{sam_forward.15} parent=0 // pred_check_branch
    %26 = sbr.rel (%p24) target = $region29
  $region28: #{sam_forward.15} parent=0 // pred_region
    %vm27 = vcmask 523264
    %28 = vst.msk [vmem:[#allocation2] sm:$0xff] %vm27, 0.0
    %29 = vst.msk [vmem:[#allocation2 + $0x8] sm:$0xff] %vm27, 0.0
    %30 = vst.msk [vmem:[#allocation2 + $0x10] sm:$0xff] %vm27, 0.0
    %31 = vst.msk [vmem:[#allocation2 + $0x18] sm:$0xff] %vm27, 0.0
  $region29: #{sam_forward.15} parent=0 // pred_fallthru
    _
  %v32 = vld [vmem:[#allocation2] sm:$0xff]
  %v33 = vld [vmem:[#allocation2 + $0x8] sm:$0xff]
  %v34 = vld [vmem:[#allocation2 + $0x10] sm:$0xff]
  %v35 = vld [vmem:[#allocation2 + $0x18] sm:$0xff]
  %v36 = vld [vmem:[%s0] sm:$0xff]
  %v37 = vld [vmem:[%s0 + $0x8] sm:$0xff]
  %v38 = vld [vmem:[%s0 + $0x10] sm:$0xff]
  %v39 = vld [vmem:[%s0 + $0x18] sm:$0xff]
  %v40 = vld [vmem:[%s1] sm:$0xff]
  %v41 = vld [vmem:[%s1 + $0x8] sm:$0xff]
  %v42 = vld [vmem:[%s1 + $0x10] sm:$0xff]
  %v43 = vld [vmem:[%s1 + $0x18] sm:$0xff]
  %v44 = vld [vmem:[%s1 + $0x20] sm:$0xff]
  %v45 = vld [vmem:[%s1 + $0x28] sm:$0xff]
  %v46 = vld [vmem:[%s1 + $0x30] sm:$0xff]
  %v47 = vld [vmem:[%s1 + $0x38] sm:$0xff]
  %vm48 = vcmask 523264
  %v50 = vsel %vm48, %v36, 0
  %v53 = vsel %vm48, %v37, 0
  %v56 = vsel %vm48, %v38, 0
  %v59 = vsel %vm48, %v39, 0
  %61 = vmatprep.subr.mxu0 0.0
  %62 = vmatpush1.msra.mxu0 %v40
  %63 = vmatprep.subr.mxu0 0.0
  %64 = vmatpush1.msra.mxu0 %v41
  %65 = vmatprep.subr.mxu0 0.0
  %66 = vmatpush1.msra.mxu0 %v42
  %67 = vmatprep.subr.mxu0 0.0
  %68 = vmatpush1.msra.mxu0 %v43
  %69 = vmatprep.subr.mxu0 0.0
  %70 = vmatpush1.msra.mxu0 %v44
  %71 = vmatprep.subr.mxu0 0.0
  %72 = vmatpush1.msra.mxu0 %v45
  %73 = vmatprep.subr.mxu0 0.0
  %74 = vmatpush1.msra.mxu0 %v46
  %75 = vmatprep.subr.mxu0 0.0
  %76 = vmatpush1.msra.mxu0 %v47
  %77 = vmatprep.subr.mxu0 0.0
  %78 = vmatpush1.msra.mxu0 0.0
  %79 = vmatprep.subr.mxu0 0.0
  %80 = vmatpush1.msra.mxu0 0.0
  %81 = vmatprep.subr.mxu0 0.0
  %82 = vmatpush1.msra.mxu0 0.0
  %83 = vmatprep.subr.mxu0 0.0
  %84 = vmatpush1.msra.mxu0 0.0
  %85 = vmatprep.subr.mxu0 0.0
  %86 = vmatpush1.msra.mxu0 0.0
  %87 = vmatprep.subr.mxu0 0.0
  %88 = vmatpush1.msra.mxu0 0.0
  %89 = vmatprep.subr.mxu0 0.0
  %90 = vmatpush1.msra.mxu0 0.0
  %91 = vmatprep.subr.mxu0 0.0
  %92 = vmatpush1.msra.mxu0 0.0
  %93 = vmatprep.subr.mxu0 0.0
  %94 = vmatpush1.msra.mxu0 0.0
  %95 = vmatprep.subr.mxu0 0.0
  %96 = vmatpush1.msra.mxu0 0.0
  %97 = vmatprep.subr.mxu0 0.0
  %98 = vmatpush1.msra.mxu0 0.0
  %99 = vmatprep.subr.mxu0 0.0
  %100 = vmatpush1.msra.mxu0 0.0
  %101 = vmatprep.subr.mxu0 0.0
  %102 = vmatpush1.msra.mxu0 0.0
  %103 = vmatprep.subr.mxu0 0.0
  %104 = vmatpush1.msra.mxu0 0.0
  %105 = vmatprep.subr.mxu0 0.0
  %106 = vmatpush1.msra.mxu0 0.0
  %107 = vmatprep.subr.mxu0 0.0
  %108 = vmatpush1.msra.mxu0 0.0
  %109 = vmatprep.subr.mxu0 0.0
  %110 = vmatpush1.msra.mxu0 0.0
  %111 = vmatprep.subr.mxu0 0.0
  %112 = vmatpush1.msra.mxu0 0.0
  %113 = vmatprep.subr.mxu0 0.0
  %114 = vmatpush1.msra.mxu0 0.0
  %115 = vmatprep.subr.mxu0 0.0
  %116 = vmatpush1.msra.mxu0 0.0
  %117 = vmatprep.subr.mxu0 0.0
  %118 = vmatpush1.msra.mxu0 0.0
  %119 = vmatprep.subr.mxu0 0.0
  %120 = vmatpush1.msra.mxu0 0.0
  %121 = vmatprep.subr.mxu0 0.0
  %122 = vmatpush1.msra.mxu0 0.0
  %123 = vmatprep.subr.mxu0 0.0
  %124 = vmatpush1.msra.mxu0 0.0
  %125 = vmatprep.mubr.f32.mxu0 0.0
  %126 = vmatmul.mubr.f32.gmra.mrb[0].mxu0 %v50
  %v127 = vpop.f32.mrb[0].mxu0
  %v128 = vadd.f32 0.0, %v127
  %v129 = vpop.f32.mrb[0].mxu0
  %130 = vmatprep.mubr.f32.mxu0 0.0
  %131 = vmatmul.mubr.f32.gmra.mrb[0].mxu0 %v53
  %v132 = vpop.f32.mrb[0].mxu0
  %v133 = vadd.f32 0.0, %v132
  %v134 = vpop.f32.mrb[0].mxu0
  %135 = vmatprep.mubr.f32.mxu0 0.0
  %136 = vmatmul.mubr.f32.gmra.mrb[0].mxu0 %v56
  %v137 = vpop.f32.mrb[0].mxu0
  %v138 = vadd.f32 0.0, %v137
  %v139 = vpop.f32.mrb[0].mxu0
  %140 = vmatprep.mubr.f32.mxu0 0.0
  %141 = vmatmul.mubr.f32.gmra.mrb[0].mxu0 %v59
  %v142 = vpop.f32.mrb[0].mxu0
  %v143 = vadd.f32 0.0, %v142
  %v144 = vpop.f32.mrb[0].mxu0
  %145 = vdwg.mxu0
  %v146 = vadd.f32 %v32, %v128
  %v147 = vadd.f32 %v33, %v133
  %v148 = vadd.f32 %v34, %v138
  %v149 = vadd.f32 %v35, %v143
  %150 = vst.msk [vmem:[#allocation2] sm:$0xff] %vm48, %v146
  %151 = vst.msk [vmem:[#allocation2 + $0x8] sm:$0xff] %vm48, %v147
  %152 = vst.msk [vmem:[#allocation2 + $0x10] sm:$0xff] %vm48, %v148
  %153 = vst.msk [vmem:[#allocation2 + $0x18] sm:$0xff] %vm48, %v149
  // Predicated region
  $region30: #{sam_forward.15} parent=0 // pred_check
    %p154 = pneg %p23
  $region31: #{sam_forward.15} parent=0 // pred_check_branch
    %156 = sbr.rel (%p154) target = $region33
  $region32: #{sam_forward.15} parent=0 // pred_region
    %v157 = vld [vmem:[#allocation2] sm:$0xff]
    %v158 = vld [vmem:[#allocation2 + $0x8] sm:$0xff]
    %v159 = vld [vmem:[#allocation2 + $0x10] sm:$0xff]
    %v160 = vld [vmem:[#allocation2 + $0x18] sm:$0xff]
    %v161 = vld [vmem:[%s2] sm:$0x1]
    %v163 = vlaneseq
    %v164 = vshrl.u32 %v163, 7
    %v165 = vsub.s32 0, %v164
    %v166 = vrot.slane %v161, %v165
    %v168 = vadd.f32 %v157, %v166
    %v169 = vadd.f32 %v158, %v166
    %v170 = vadd.f32 %v159, %v166
    %v171 = vadd.f32 %v160, %v166
    %v172 = vld [vmem:[%s3] sm:$0xff]
    %v173 = vld [vmem:[%s3 + $0x8] sm:$0xff]
    %v174 = vld [vmem:[%s3 + $0x10] sm:$0xff]
    %v175 = vld [vmem:[%s3 + $0x18] sm:$0xff]
    %v176 = vadd.f32 %v168, %v172
    %v177 = vadd.f32 %v169, %v173
    %v178 = vadd.f32 %v170, %v174
    %v179 = vadd.f32 %v171, %v175
    %v180 = vsel %vm48, %v176, 0.0
    %181 = vadd.xlane.f32.xlu0 %v180
    %v182 = vpop.xlane.xlu0 %181
    %v183 = vsel %vm48, %v177, 0.0
    %184 = vadd.xlane.f32.xlu0 %v183
    %v185 = vpop.xlane.xlu0 %184
    %v186 = vsel %vm48, %v178, 0.0
    %187 = vadd.xlane.f32.xlu0 %v186
    %v188 = vpop.xlane.xlu0 %187
    %v189 = vsel %vm48, %v179, 0.0
    %190 = vadd.xlane.f32.xlu0 %v189
    %v191 = vpop.xlane.xlu0 %190
    %v192 = vrcp.pop 64.0
    %v193 = vmul.f32 %v182, %v192
    %v194 = vmul.f32 %v185, %v192
    %v195 = vmul.f32 %v188, %v192
    %v196 = vmul.f32 %v191, %v192
    %v197 = vsub.f32 %v176, %v193
    %v198 = vsub.f32 %v177, %v194
    %v199 = vsub.f32 %v178, %v195
    %v200 = vsub.f32 %v179, %v196
    %v201 = vmul.f32 %v197, %v197
    %v202 = vmul.f32 %v198, %v198
    %v203 = vmul.f32 %v199, %v199
    %v204 = vmul.f32 %v200, %v200
    %v205 = vsel %vm48, %v201, 0.0
    %206 = vadd.xlane.f32.xlu0 %v205
    %v207 = vpop.xlane.xlu0 %206
    %v208 = vsel %vm48, %v202, 0.0
    %209 = vadd.xlane.f32.xlu0 %v208
    %v210 = vpop.xlane.xlu0 %209
    %v211 = vsel %vm48, %v203, 0.0
    %212 = vadd.xlane.f32.xlu0 %v211
    %v213 = vpop.xlane.xlu0 %212
    %v214 = vsel %vm48, %v204, 0.0
    %215 = vadd.xlane.f32.xlu0 %v214
    %v216 = vpop.xlane.xlu0 %215
    %v217 = vmul.f32 %v207, %v192
    %v218 = vmul.f32 %v210, %v192
    %v219 = vmul.f32 %v213, %v192
    %v220 = vmul.f32 %v216, %v192
    %v221 = vadd.f32 %v217, 1e-05
    %v222 = vadd.f32 %v218, 1e-05
    %v223 = vadd.f32 %v219, 1e-05
    %v224 = vadd.f32 %v220, 1e-05
    %v225 = vrsqrt.pop %v221
    %v226 = vrsqrt.pop %v222
    %v227 = vrsqrt.pop %v223
    %v228 = vrsqrt.pop %v224
    %v229 = vmul.f32 %v197, %v225
    %v230 = vmul.f32 %v198, %v226
    %v231 = vmul.f32 %v199, %v227
    %v232 = vmul.f32 %v200, %v228
    %v233 = vld [vmem:[%s4] sm:$0x1]
    %v235 = vlaneseq
    %v236 = vshrl.u32 %v235, 7
    %v237 = vsub.s32 0, %v236
    %v238 = vrot.slane %v233, %v237
    %v240 = vmul.f32 %v229, %v238
    %v241 = vmul.f32 %v230, %v238
    %v242 = vmul.f32 %v231, %v238
    %v243 = vmul.f32 %v232, %v238
    %v244 = vld [vmem:[%s5] sm:$0x1]
    %v246 = vlaneseq
    %v247 = vshrl.u32 %v246, 7
    %v248 = vsub.s32 0, %v247
    %v249 = vrot.slane %v244, %v248
    %v251 = vadd.f32 %v240, %v249
    %v252 = vadd.f32 %v241, %v249
    %v253 = vadd.f32 %v242, %v249
    %v254 = vadd.f32 %v243, %v249
    %255 = vst.msk [vmem:[%s6] sm:$0xff] %vm48, %v251
    %256 = vst.msk [vmem:[%s6 + $0x8] sm:$0xff] %vm48, %v252
    %257 = vst.msk [vmem:[%s6 + $0x10] sm:$0xff] %vm48, %v253
    %258 = vst.msk [vmem:[%s6 + $0x18] sm:$0xff] %vm48, %v254
  $region33: #{sam_forward.15} parent=0 // pred_fallthru
    _
  // Predicated region
  $region34: #{sam_forward.15} parent=0 // pred_check
    _
  $region35: #{sam_forward.15} parent=0 // pred_check_branch
    %260 = sbr.rel (0) target = $region37
  $region36: #{sam_forward.15} parent=0 // pred_region
    _
  $region37: #{sam_forward.15} parent=0 // pred_fallthru
    _
  // Predicated region
  $region38: #{sam_forward.15} parent=0 // pred_check
    _
  $region39: #{sam_forward.15} parent=0 // pred_check_branch
    %262 = sbr.rel (0) target = $region41
  $region40: #{sam_forward.15} parent=0 // pred_region
    _
  $region41: #{sam_forward.15} parent=0 // pred_fallthru
    _

// kernel: sam_forward.17
$region0: #{sam_forward.17}
  #allocation0 [shape = 'u32[]', space=smem, size = 0x4, offset = 0x4, fixed_abs, tag = 'smem constant byte address 0x4 - core index']
  #allocation1 [shape = 'u32[144,128]{1,0:T(1,128)}', space=vmem, size = 0x12000, scoped, tag = 'internal scratch']
  #allocation2 [shape = 'f32[32,64]{1,0:T(8,128)}', space=vmem, size = 0x4000, scoped, tag = 'scratch operand']
  %s0 = inlined_call_operand.vmem [shape: f32[32,128], index: 0, kind: input, shape index: {}]
  %s1 = inlined_call_operand.vmem [shape: f32[128,64], index: 1, kind: input, shape index: {}]
  %s2 = inlined_call_operand.vmem [shape: f32[1,64], index: 2, kind: input, shape index: {}]
  %s3 = inlined_call_operand.vmem [shape: f32[32,64], index: 3, kind: input, shape index: {}]
  %s4 = inlined_call_operand.vmem [shape: f32[1,64], index: 4, kind: input, shape index: {}]
  %s5 = inlined_call_operand.vmem [shape: f32[1,64], index: 5, kind: input, shape index: {}]
  %s6 = inlined_call_operand.vmem [shape: f32[32,64], index: 6, kind: output, shape index: {}]
  %s7 = sld [smem:[#allocation0]]
  $region42: #{sam_forward.17} parent=0
    _
  %s9 = ssub.s32 1, %s7
  %s10 = scalar_select 0, %s9, %s7
  // Predicated region
  $region2: #{sam_forward.17} parent=0 // pred_check
    _
  $region3: #{sam_forward.17} parent=0 // pred_check_branch
    %12 = sbr.rel (0) target = $region5
  $region4: #{sam_forward.17} parent=0 // pred_region
    _
  $region5: #{sam_forward.17} parent=0 // pred_fallthru
    _
  // Predicated region
  $region6: #{sam_forward.17} parent=0 // pred_check
    _
  $region7: #{sam_forward.17} parent=0 // pred_check_branch
    %14 = sbr.rel (0) target = $region9
  $region8: #{sam_forward.17} parent=0 // pred_region
    _
  $region9: #{sam_forward.17} parent=0 // pred_fallthru
    _
  // Predicated region
  $region10: #{sam_forward.17} parent=0 // pred_check
    _
  $region11: #{sam_forward.17} parent=0 // pred_check_branch
    %16 = sbr.rel (0) target = $region13
  $region12: #{sam_forward.17} parent=0 // pred_region
    _
  $region13: #{sam_forward.17} parent=0 // pred_fallthru
    _
  // Predicated region
  $region14: #{sam_forward.17} parent=0 // pred_check
    _
  $region15: #{sam_forward.17} parent=0 // pred_check_branch
    %18 = sbr.rel (0) target = $region17
  $region16: #{sam_forward.17} parent=0 // pred_region
    _
  $region17: #{sam_forward.17} parent=0 // pred_fallthru
    _
  // Predicated region
  $region18: #{sam_forward.17} parent=0 // pred_check
    _
  $region19: #{sam_forward.17} parent=0 // pred_check_branch
    %20 = sbr.rel (0) target = $region21
  $region20: #{sam_forward.17} parent=0 // pred_region
    _
  $region21: #{sam_forward.17} parent=0 // pred_fallthru
    _
  // Predicated region
  $region22: #{sam_forward.17} parent=0 // pred_check
    _
  $region23: #{sam_forward.17} parent=0 // pred_check_branch
    %22 = sbr.rel (0) target = $region25
  $region24: #{sam_forward.17} parent=0 // pred_region
    _
  $region25: #{sam_forward.17} parent=0 // pred_fallthru
    _
  %p23 = scmp.eq.s32.totalorder 0, 0
  // Predicated region
  $region26: #{sam_forward.17} parent=0 // pred_check
    %p24 = pneg %p23
  $region27: #{sam_forward.17} parent=0 // pred_check_branch
    %26 = sbr.rel (%p24) target = $region29
  $region28: #{sam_forward.17} parent=0 // pred_region
    %vm27 = vcmask 523264
    %28 = vst.msk [vmem:[#allocation2] sm:$0xff] %vm27, 0.0
    %29 = vst.msk [vmem:[#allocation2 + $0x8] sm:$0xff] %vm27, 0.0
    %30 = vst.msk [vmem:[#allocation2 + $0x10] sm:$0xff] %vm27, 0.0
    %31 = vst.msk [vmem:[#allocation2 + $0x18] sm:$0xff] %vm27, 0.0
  $region29: #{sam_forward.17} parent=0 // pred_fallthru
    _
  %v32 = vld [vmem:[#allocation2] sm:$0xff]
  %v33 = vld [vmem:[#allocation2 + $0x8] sm:$0xff]
  %v34 = vld [vmem:[#allocation2 + $0x10] sm:$0xff]
  %v35 = vld [vmem:[#allocation2 + $0x18] sm:$0xff]
  %v36 = vld [vmem:[%s0] sm:$0xff]
  %v37 = vld [vmem:[%s0 + $0x8] sm:$0xff]
  %v38 = vld [vmem:[%s0 + $0x10] sm:$0xff]
  %v39 = vld [vmem:[%s0 + $0x18] sm:$0xff]
  %v40 = vld [vmem:[%s1] sm:$0xff]
  %v41 = vld [vmem:[%s1 + $0x8] sm:$0xff]
  %v42 = vld [vmem:[%s1 + $0x10] sm:$0xff]
  %v43 = vld [vmem:[%s1 + $0x18] sm:$0xff]
  %v44 = vld [vmem:[%s1 + $0x20] sm:$0xff]
  %v45 = vld [vmem:[%s1 + $0x28] sm:$0xff]
  %v46 = vld [vmem:[%s1 + $0x30] sm:$0xff]
  %v47 = vld [vmem:[%s1 + $0x38] sm:$0xff]
  %v48 = vld [vmem:[%s1 + $0x40] sm:$0xff]
  %v49 = vld [vmem:[%s1 + $0x48] sm:$0xff]
  %v50 = vld [vmem:[%s1 + $0x50] sm:$0xff]
  %v51 = vld [vmem:[%s1 + $0x58] sm:$0xff]
  %v52 = vld [vmem:[%s1 + $0x60] sm:$0xff]
  %v53 = vld [vmem:[%s1 + $0x68] sm:$0xff]
  %v54 = vld [vmem:[%s1 + $0x70] sm:$0xff]
  %v55 = vld [vmem:[%s1 + $0x78] sm:$0xff]
  %56 = vmatprep.subr.mxu0 0.0
  %57 = vmatpush1.msra.mxu0 %v40
  %58 = vmatprep.subr.mxu0 0.0
  %59 = vmatpush1.msra.mxu0 %v41
  %60 = vmatprep.subr.mxu0 0.0
  %61 = vmatpush1.msra.mxu0 %v42
  %62 = vmatprep.subr.mxu0 0.0
  %63 = vmatpush1.msra.mxu0 %v43
  %64 = vmatprep.subr.mxu0 0.0
  %65 = vmatpush1.msra.mxu0 %v44
  %66 = vmatprep.subr.mxu0 0.0
  %67 = vmatpush1.msra.mxu0 %v45
  %68 = vmatprep.subr.mxu0 0.0
  %69 = vmatpush1.msra.mxu0 %v46
  %70 = vmatprep.subr.mxu0 0.0
  %71 = vmatpush1.msra.mxu0 %v47
  %72 = vmatprep.subr.mxu0 0.0
  %73 = vmatpush1.msra.mxu0 %v48
  %74 = vmatprep.subr.mxu0 0.0
  %75 = vmatpush1.msra.mxu0 %v49
  %76 = vmatprep.subr.mxu0 0.0
  %77 = vmatpush1.msra.mxu0 %v50
  %78 = vmatprep.subr.mxu0 0.0
  %79 = vmatpush1.msra.mxu0 %v51
  %80 = vmatprep.subr.mxu0 0.0
  %81 = vmatpush1.msra.mxu0 %v52
  %82 = vmatprep.subr.mxu0 0.0
  %83 = vmatpush1.msra.mxu0 %v53
  %84 = vmatprep.subr.mxu0 0.0
  %85 = vmatpush1.msra.mxu0 %v54
  %86 = vmatprep.subr.mxu0 0.0
  %87 = vmatpush1.msra.mxu0 %v55
  %88 = vmatprep.subr.mxu0 0.0
  %89 = vmatpush1.msra.mxu0 0.0
  %90 = vmatprep.subr.mxu0 0.0
  %91 = vmatpush1.msra.mxu0 0.0
  %92 = vmatprep.subr.mxu0 0.0
  %93 = vmatpush1.msra.mxu0 0.0
  %94 = vmatprep.subr.mxu0 0.0
  %95 = vmatpush1.msra.mxu0 0.0
  %96 = vmatprep.subr.mxu0 0.0
  %97 = vmatpush1.msra.mxu0 0.0
  %98 = vmatprep.subr.mxu0 0.0
  %99 = vmatpush1.msra.mxu0 0.0
  %100 = vmatprep.subr.mxu0 0.0
  %101 = vmatpush1.msra.mxu0 0.0
  %102 = vmatprep.subr.mxu0 0.0
  %103 = vmatpush1.msra.mxu0 0.0
  %104 = vmatprep.subr.mxu0 0.0
  %105 = vmatpush1.msra.mxu0 0.0
  %106 = vmatprep.subr.mxu0 0.0
  %107 = vmatpush1.msra.mxu0 0.0
  %108 = vmatprep.subr.mxu0 0.0
  %109 = vmatpush1.msra.mxu0 0.0
  %110 = vmatprep.subr.mxu0 0.0
  %111 = vmatpush1.msra.mxu0 0.0
  %112 = vmatprep.subr.mxu0 0.0
  %113 = vmatpush1.msra.mxu0 0.0
  %114 = vmatprep.subr.mxu0 0.0
  %115 = vmatpush1.msra.mxu0 0.0
  %116 = vmatprep.subr.mxu0 0.0
  %117 = vmatpush1.msra.mxu0 0.0
  %118 = vmatprep.subr.mxu0 0.0
  %119 = vmatpush1.msra.mxu0 0.0
  %120 = vmatprep.mubr.f32.mxu0 0.0
  %121 = vmatmul.mubr.f32.gmra.mrb[0].mxu0 %v36
  %v122 = vpop.f32.mrb[0].mxu0
  %v123 = vadd.f32 0.0, %v122
  %v124 = vpop.f32.mrb[0].mxu0
  %125 = vmatprep.mubr.f32.mxu0 0.0
  %126 = vmatmul.mubr.f32.gmra.mrb[0].mxu0 %v37
  %v127 = vpop.f32.mrb[0].mxu0
  %v128 = vadd.f32 0.0, %v127
  %v129 = vpop.f32.mrb[0].mxu0
  %130 = vmatprep.mubr.f32.mxu0 0.0
  %131 = vmatmul.mubr.f32.gmra.mrb[0].mxu0 %v38
  %v132 = vpop.f32.mrb[0].mxu0
  %v133 = vadd.f32 0.0, %v132
  %v134 = vpop.f32.mrb[0].mxu0
  %135 = vmatprep.mubr.f32.mxu0 0.0
  %136 = vmatmul.mubr.f32.gmra.mrb[0].mxu0 %v39
  %v137 = vpop.f32.mrb[0].mxu0
  %v138 = vadd.f32 0.0, %v137
  %v139 = vpop.f32.mrb[0].mxu0
  %140 = vdwg.mxu0
  %v141 = vadd.f32 %v32, %v123
  %v142 = vadd.f32 %v33, %v128
  %v143 = vadd.f32 %v34, %v133
  %v144 = vadd.f32 %v35, %v138
  %vm145 = vcmask 523264
  %146 = vst.msk [vmem:[#allocation2] sm:$0xff] %vm145, %v141
  %147 = vst.msk [vmem:[#allocation2 + $0x8] sm:$0xff] %vm145, %v142
  %148 = vst.msk [vmem:[#allocation2 + $0x10] sm:$0xff] %vm145, %v143
  %149 = vst.msk [vmem:[#allocation2 + $0x18] sm:$0xff] %vm145, %v144
  // Predicated region
  $region30: #{sam_forward.17} parent=0 // pred_check
    %p150 = pneg %p23
  $region31: #{sam_forward.17} parent=0 // pred_check_branch
    %152 = sbr.rel (%p150) target = $region33
  $region32: #{sam_forward.17} parent=0 // pred_region
    %v153 = vld [vmem:[#allocation2] sm:$0xff]
    %v154 = vld [vmem:[#allocation2 + $0x8] sm:$0xff]
    %v155 = vld [vmem:[#allocation2 + $0x10] sm:$0xff]
    %v156 = vld [vmem:[#allocation2 + $0x18] sm:$0xff]
    %v157 = vld [vmem:[%s2] sm:$0x1]
    %v159 = vlaneseq
    %v160 = vshrl.u32 %v159, 7
    %v161 = vsub.s32 0, %v160
    %v162 = vrot.slane %v157, %v161
    %v164 = vadd.f32 %v153, %v162
    %v165 = vadd.f32 %v154, %v162
    %v166 = vadd.f32 %v155, %v162
    %v167 = vadd.f32 %v156, %v162
    %v168 = vld [vmem:[%s3] sm:$0xff]
    %v169 = vld [vmem:[%s3 + $0x8] sm:$0xff]
    %v170 = vld [vmem:[%s3 + $0x10] sm:$0xff]
    %v171 = vld [vmem:[%s3 + $0x18] sm:$0xff]
    %v172 = vadd.f32 %v164, %v168
    %v173 = vadd.f32 %v165, %v169
    %v174 = vadd.f32 %v166, %v170
    %v175 = vadd.f32 %v167, %v171
    %v176 = vsel %vm145, %v172, 0.0
    %177 = vadd.xlane.f32.xlu0 %v176
    %v178 = vpop.xlane.xlu0 %177
    %v179 = vsel %vm145, %v173, 0.0
    %180 = vadd.xlane.f32.xlu0 %v179
    %v181 = vpop.xlane.xlu0 %180
    %v182 = vsel %vm145, %v174, 0.0
    %183 = vadd.xlane.f32.xlu0 %v182
    %v184 = vpop.xlane.xlu0 %183
    %v185 = vsel %vm145, %v175, 0.0
    %186 = vadd.xlane.f32.xlu0 %v185
    %v187 = vpop.xlane.xlu0 %186
    %v188 = vrcp.pop 64.0
    %v189 = vmul.f32 %v178, %v188
    %v190 = vmul.f32 %v181, %v188
    %v191 = vmul.f32 %v184, %v188
    %v192 = vmul.f32 %v187, %v188
    %v193 = vsub.f32 %v172, %v189
    %v194 = vsub.f32 %v173, %v190
    %v195 = vsub.f32 %v174, %v191
    %v196 = vsub.f32 %v175, %v192
    %v197 = vmul.f32 %v193, %v193
    %v198 = vmul.f32 %v194, %v194
    %v199 = vmul.f32 %v195, %v195
    %v200 = vmul.f32 %v196, %v196
    %v201 = vsel %vm145, %v197, 0.0
    %202 = vadd.xlane.f32.xlu0 %v201
    %v203 = vpop.xlane.xlu0 %202
    %v204 = vsel %vm145, %v198, 0.0
    %205 = vadd.xlane.f32.xlu0 %v204
    %v206 = vpop.xlane.xlu0 %205
    %v207 = vsel %vm145, %v199, 0.0
    %208 = vadd.xlane.f32.xlu0 %v207
    %v209 = vpop.xlane.xlu0 %208
    %v210 = vsel %vm145, %v200, 0.0
    %211 = vadd.xlane.f32.xlu0 %v210
    %v212 = vpop.xlane.xlu0 %211
    %v213 = vmul.f32 %v203, %v188
    %v214 = vmul.f32 %v206, %v188
    %v215 = vmul.f32 %v209, %v188
    %v216 = vmul.f32 %v212, %v188
    %v217 = vadd.f32 %v213, 1e-05
    %v218 = vadd.f32 %v214, 1e-05
    %v219 = vadd.f32 %v215, 1e-05
    %v220 = vadd.f32 %v216, 1e-05
    %v221 = vrsqrt.pop %v217
    %v222 = vrsqrt.pop %v218
    %v223 = vrsqrt.pop %v219
    %v224 = vrsqrt.pop %v220
    %v225 = vmul.f32 %v193, %v221
    %v226 = vmul.f32 %v194, %v222
    %v227 = vmul.f32 %v195, %v223
    %v228 = vmul.f32 %v196, %v224
    %v229 = vld [vmem:[%s4] sm:$0x1]
    %v231 = vlaneseq
    %v232 = vshrl.u32 %v231, 7
    %v233 = vsub.s32 0, %v232
    %v234 = vrot.slane %v229, %v233
    %v236 = vmul.f32 %v225, %v234
    %v237 = vmul.f32 %v226, %v234
    %v238 = vmul.f32 %v227, %v234
    %v239 = vmul.f32 %v228, %v234
    %v240 = vld [vmem:[%s5] sm:$0x1]
    %v242 = vlaneseq
    %v243 = vshrl.u32 %v242, 7
    %v244 = vsub.s32 0, %v243
    %v245 = vrot.slane %v240, %v244
    %v247 = vadd.f32 %v236, %v245
    %v248 = vadd.f32 %v237, %v245
    %v249 = vadd.f32 %v238, %v245
    %v250 = vadd.f32 %v239, %v245
    %251 = vst.msk [vmem:[%s6] sm:$0xff] %vm145, %v247
    %252 = vst.msk [vmem:[%s6 + $0x8] sm:$0xff] %vm145, %v248
    %253 = vst.msk [vmem:[%s6 + $0x10] sm:$0xff] %vm145, %v249
    %254 = vst.msk [vmem:[%s6 + $0x18] sm:$0xff] %vm145, %v250
  $region33: #{sam_forward.17} parent=0 // pred_fallthru
    _
  // Predicated region
  $region34: #{sam_forward.17} parent=0 // pred_check
    _
  $region35: #{sam_forward.17} parent=0 // pred_check_branch
    %256 = sbr.rel (0) target = $region37
  $region36: #{sam_forward.17} parent=0 // pred_region
    _
  $region37: #{sam_forward.17} parent=0 // pred_fallthru
    _
  // Predicated region
  $region38: #{sam_forward.17} parent=0 // pred_check
    _
  $region39: #{sam_forward.17} parent=0 // pred_check_branch
    %258 = sbr.rel (0) target = $region41
  $region40: #{sam_forward.17} parent=0 // pred_region
    _
  $region41: #{sam_forward.17} parent=0 // pred_fallthru
    _

// kernel: sam_forward.19
$region0: #{sam_forward.19}
  #allocation0 [shape = 'u32[]', space=smem, size = 0x4, offset = 0x4, fixed_abs, tag = 'smem constant byte address 0x4 - core index']
  #allocation1 [shape = 'u32[144,128]{1,0:T(1,128)}', space=vmem, size = 0x12000, scoped, tag = 'internal scratch']
  %s0 = inlined_call_operand.vmem [shape: f32[2,16,192], index: 0, kind: input, shape index: {}]
  %s1 = inlined_call_operand.vmem [shape: f32[4,16,16], index: 1, kind: input, shape index: {}]
  %s2 = inlined_call_operand.vmem [shape: f32[2,16,64], index: 2, kind: output, shape index: {0}]
  %s3 = inlined_call_operand.hbm [shape: f32[2,4,16,16], index: 3, kind: output, shape index: {1}]
  %s4 = inlined_call_operand.hbm [shape: f32[2,16,16], index: 4, kind: output, shape index: {2}]
  %s5 = inlined_call_operand.vmem [shape: f32[2,1,16], index: 5, kind: output, shape index: {3}]
  %6 = xla_tuple %s2, %s3, %s4, %s5
  %s7 = sld [smem:[#allocation0]]
  $region65: #{sam_forward.19} parent=0
    _
  %s9 = ssub.s32 1, %s7
  %s10 = scalar_select 0, %s9, %s7
  $region1: #{sam_forward.19} parent=0
    #allocation2 [shape = 'u8[65536]{0}', space=vmem, size = 0x10000, scoped, tag = 'output window, operand 1']
    #allocation3 [shape = 's32[2]{0}', space=sflag, size = 0x8, scoped, tag = 'scoped memory for sam_forward.19']
    #allocation4 [shape = 'u8[16384]{0}', space=vmem, size = 0x4000, scoped, tag = 'output window, operand 2']
    #allocation5 [shape = 's32[2]{0}', space=sflag, size = 0x8, scoped, tag = 'scoped memory for sam_forward.19']
    %11 = vsyncpa [#allocation3], 0
    %s12 = scalar_lea.sflag [#allocation3], 1
    %13 = vsyncpa %s12, 0
    %14 = vsyncpa [#allocation5], 0
    %s15 = scalar_lea.sflag [#allocation5], 1
    %16 = vsyncpa %s15, 0
    loop: start=0, step=1, limit=4
    $region2: #{sam_forward.19} parent=1 // loop_pre_header
      _
    $region3: #{sam_forward.19} parent=1 // loop_header
      %s18 = sphi 0, %s22
      %p19 = scmp.ge.s32.totalorder %s18, 4
      %s28 = sphi 0, %s30
      %s31 = sphi 0, %s28
      %s32 = sphi 0, %s31
      %s48 = sphi 0, %s32
      %s52 = sphi 0, %s52
      %s54 = sphi 0, %s52
      %s55 = sphi 0, %s54
      %s69 = sphi 0, %s55
      %s75 = sphi 0, %s77
      %s78 = sphi 0, %s75
      %s79 = sphi 0, %s78
      %s95 = sphi 0, %s79
      %s101 = sphi 0, %s103
      %s104 = sphi 0, %s101
      %s105 = sphi 0, %s104
      %s121 = sphi 0, %s105
      %s127 = sphi 0, %s129
      %s130 = sphi 0, %s127
      %s131 = sphi 0, %s130
      %s147 = sphi 0, %s131
      %s153 = sphi 0, %s155
      %s156 = sphi 0, %s153
      %s157 = sphi 0, %s156
      %s173 = sphi 0, %s157
    $region4: #{sam_forward.19} parent=1 // loop_header_branch
      %21 = sbr.rel (%p19) target = $region8
    $region5: #{sam_forward.19} parent=1 // loop_body
      %s23 = ssub.s32 %s18, 1
      %s24 = ssub.s32 %s18, 2
      %s25 = sadd.s32 %s18, 1
      %s26 = ssub.s32 %s18, %s25
      %p27 = scmp.eq.s32.totalorder %s26, 0
      %s29 = sadd.s32 %s28, 1
      %s30 = scalar_select %p27, %s28, %s29
      %p33 = pneg %p27
      %p34 = scmp.eq.s32.totalorder %s18, 1
      %p35 = por %p33, %p34
      %p36 = scmp.ne.s32.totalorder %s28, %s31
      %p37 = scmp.eq.s32.totalorder %s18, 0
      %p38 = por %p36, %p37
      %p39 = scmp.ne.s32.totalorder %s28, %s31
      %p40 = scmp.eq.s32.totalorder %s23, 1
      %p41 = por %p39, %p40
      %p42 = scmp.ne.s32.totalorder %s31, %s32
      %p43 = scmp.eq.s32.totalorder %s23, 0
      %p44 = por %p42, %p43
      %p45 = scmp.ne.s32.totalorder %s31, %s32
      %p46 = scmp.eq.s32.totalorder %s24, 1
      %p47 = por %p45, %p46
      %p49 = scmp.ne.s32.totalorder %s32, %s48
      %p50 = scmp.eq.s32.totalorder %s24, 0
      %p51 = por %p49, %p50
      %s53 = sadd.s32 %s52, 1
      %p56 = scmp.eq.s32.totalorder %s18, 1
      %p57 = scmp.ne.s32.totalorder %s52, %s54
      %p58 = scmp.eq.s32.totalorder %s18, 0
      %p59 = por %p57, %p58
      %p60 = scmp.ne.s32.totalorder %s52, %s54
      %p61 = scmp.eq.s32.totalorder %s23, 1
      %p62 = por %p60, %p61
      %p63 = scmp.ne.s32.totalorder %s54, %s55
      %p64 = scmp.eq.s32.totalorder %s23, 0
      %p65 = por %p63, %p64
      %p66 = scmp.ne.s32.totalorder %s54, %s55
      %p67 = scmp.eq.s32.totalorder %s24, 1
      %p68 = por %p66, %p67
      %p70 = scmp.ne.s32.totalorder %s55, %s69
      %p71 = scmp.eq.s32.totalorder %s24, 0
      %p72 = por %p70, %p71
      %s73 = ssub.s32 %s18, %s25
      %p74 = scmp.eq.s32.totalorder %s73, 0
      %s76 = sadd.s32 %s75, 1
      %s77 = scalar_select %p74, %s75, %s76
      %p80 = pneg %p74
      %p81 = scmp.eq.s32.totalorder %s18, 1
      %p82 = por %p80, %p81
      %p83 = scmp.ne.s32.totalorder %s75, %s78
      %p84 = scmp.eq.s32.totalorder %s18, 0
      %p85 = por %p83, %p84
      %p86 = scmp.ne.s32.totalorder %s75, %s78
      %p87 = scmp.eq.s32.totalorder %s23, 1
      %p88 = por %p86, %p87
      %p89 = scmp.ne.s32.totalorder %s78, %s79
      %p90 = scmp.eq.s32.totalorder %s23, 0
      %p91 = por %p89, %p90
      %p92 = scmp.ne.s32.totalorder %s78, %s79
      %p93 = scmp.eq.s32.totalorder %s24, 1
      %p94 = por %p92, %p93
      %p96 = scmp.ne.s32.totalorder %s79, %s95
      %p97 = scmp.eq.s32.totalorder %s24, 0
      %p98 = por %p96, %p97
      %s99 = ssub.s32 %s18, %s25
      %p100 = scmp.eq.s32.totalorder %s99, 0
      %s102 = sadd.s32 %s101, 1
      %s103 = scalar_select %p100, %s101, %s102
      %p106 = pneg %p100
      %p107 = scmp.eq.s32.totalorder %s18, 1
      %p108 = por %p106, %p107
      %p109 = scmp.ne.s32.totalorder %s101, %s104
      %p110 = scmp.eq.s32.totalorder %s18, 0
      %p111 = por %p109, %p110
      %p112 = scmp.ne.s32.totalorder %s101, %s104
      %p113 = scmp.eq.s32.totalorder %s23, 1
      %p114 = por %p112, %p113
      %p115 = scmp.ne.s32.totalorder %s104, %s105
      %p116 = scmp.eq.s32.totalorder %s23, 0
      %p117 = por %p115, %p116
      %p118 = scmp.ne.s32.totalorder %s104, %s105
      %p119 = scmp.eq.s32.totalorder %s24, 1
      %p120 = por %p118, %p119
      %p122 = scmp.ne.s32.totalorder %s105, %s121
      %p123 = scmp.eq.s32.totalorder %s24, 0
      %p124 = por %p122, %p123
      %s125 = ssub.s32 %s18, %s25
      %p126 = scmp.eq.s32.totalorder %s125, 0
      %s128 = sadd.s32 %s127, 1
      %s129 = scalar_select %p126, %s127, %s128
      %p132 = pneg %p126
      %p133 = scmp.eq.s32.totalorder %s18, 1
      %p134 = por %p132, %p133
      %p135 = scmp.ne.s32.totalorder %s127, %s130
      %p136 = scmp.eq.s32.totalorder %s18, 0
      %p137 = por %p135, %p136
      %p138 = scmp.ne.s32.totalorder %s127, %s130
      %p139 = scmp.eq.s32.totalorder %s23, 1
      %p140 = por %p138, %p139
      %p141 = scmp.ne.s32.totalorder %s130, %s131
      %p142 = scmp.eq.s32.totalorder %s23, 0
      %p143 = por %p141, %p142
      %p144 = scmp.ne.s32.totalorder %s130, %s131
      %p145 = scmp.eq.s32.totalorder %s24, 1
      %p146 = por %p144, %p145
      %p148 = scmp.ne.s32.totalorder %s131, %s147
      %p149 = scmp.eq.s32.totalorder %s24, 0
      %p150 = por %p148, %p149
      %s151 = ssub.s32 %s18, %s25
      %p152 = scmp.eq.s32.totalorder %s151, 0
      %s154 = sadd.s32 %s153, 1
      %s155 = scalar_select %p152, %s153, %s154
      %p158 = pneg %p152
      %p159 = scmp.eq.s32.totalorder %s18, 1
      %p160 = por %p158, %p159
      %p161 = scmp.ne.s32.totalorder %s153, %s156
      %p162 = scmp.eq.s32.totalorder %s18, 0
      %p163 = por %p161, %p162
      %p164 = scmp.ne.s32.totalorder %s153, %s156
      %p165 = scmp.eq.s32.totalorder %s23, 1
      %p166 = por %p164, %p165
      %p167 = scmp.ne.s32.totalorder %s156, %s157
      %p168 = scmp.eq.s32.totalorder %s23, 0
      %p169 = por %p167, %p168
      %p170 = scmp.ne.s32.totalorder %s156, %s157
      %p171 = scmp.eq.s32.totalorder %s24, 1
      %p172 = por %p170, %p171
      %p174 = scmp.ne.s32.totalorder %s157, %s173
      %p175 = scmp.eq.s32.totalorder %s24, 0
      %p176 = por %p174, %p175
      %p177 = scmp.le.s32.totalorder 1, %s18
      %p178 = scmp.lt.s32.totalorder %s18, 3
      %p179 = pnand %p177, %p178
      %p180 = pneg %p179
      // Predicated region
      $region9: #{sam_forward.19} parent=5 // pred_check
        _
      $region10: #{sam_forward.19} parent=5 // pred_check_branch
        %182 = sbr.rel (%p179) target = $region12
      $region11: #{sam_forward.19} parent=5 // pred_region
        %s183 = ssub.s32 %s18, 1
        // Predicated region
        $region13: #{sam_forward.19} parent=11 // pred_check
          %p184 = pneg %p65
        $region14: #{sam_forward.19} parent=11 // pred_check_branch
          %186 = sbr.rel (%p184) target = $region16
        $region15: #{sam_forward.19} parent=11 // pred_region
          _
        $region16: #{sam_forward.19} parent=11 // pred_fallthru
          _
      $region12: #{sam_forward.19} parent=5 // pred_fallthru
        _
      %p187 = scmp.lt.s32.totalorder %s18, 2
      // Predicated region
      $region17: #{sam_forward.19} parent=5 // pred_check
        %p188 = pneg %p187
      $region18: #{sam_forward.19} parent=5 // pred_check_branch
        %190 = sbr.rel (%p188) target = $region20
      $region19: #{sam_forward.19} parent=5 // pred_region
        // Predicated region
        $region21: #{sam_forward.19} parent=19 // pred_check
          %p191 = pneg %p38
        $region22: #{sam_forward.19} parent=19 // pred_check_branch
          %193 = sbr.rel (%p191) target = $region24
        $region23: #{sam_forward.19} parent=19 // pred_region
          %p194 = scmp.lt.s32.totalorder %s18, 1
          %s195 = scalar_select %p194, %s18, 1
          %s196 = smul.addr %s195, 4
          %s197 = smul.addr %s196, 8
          %s198 = scalar_lea.vmem %s0, %s197
        $region24: #{sam_forward.19} parent=19 // pred_fallthru
          _
      $region20: #{sam_forward.19} parent=5 // pred_fallthru
        _
      %p199 = scmp.le.s32.totalorder 1, %s18
      %p200 = scmp.lt.s32.totalorder %s18, 3
      %p201 = pnand %p199, %p200
      %p202 = pneg %p201
      // Predicated region
      $region25: #{sam_forward.19} parent=5 // pred_check
        _
      $region26: #{sam_forward.19} parent=5 // pred_check_branch
        %204 = sbr.rel (%p201) target = $region28
      $region27: #{sam_forward.19} parent=5 // pred_region
        %s205 = ssub.s32 %s18, 1
        %p206 = scmp.lt.s32.totalorder %s23, 1
        %s207 = scalar_select %p206, %s23, 1
        %s208 = smul.addr %s207, 4
        %s209 = smul.addr %s208, 8
        %s210 = scalar_lea.vmem %s0, %s209
        %p211 = pneg %p44
        %p212 = pneg %p41
        %p213 = pneg %p65
        %p214 = pneg %p62
        %p215 = pneg %p91
        %p216 = pneg %p88
        %p217 = scmp.lt.s32.totalorder %s23, 1
        %s218 = scalar_select %p217, %s23, 1
        %s219 = smul.addr %s218, 2
        %s220 = smul.addr %s219, 8
        %s221 = scalar_lea.vmem %s2, %s220
        %p222 = pneg %p117
        %p223 = pneg %p114
        %s224 = sand.u32 %s104, 1
        %s225 = scalar_lea.sflag [#allocation3], %s224
        %s226 = sand.u32 %s104, 1
        %s227 = smul.addr %s226, 64
        %s228 = scalar_lea.vmem [#allocation2], %s227
        %p229 = pneg %p143
        %p230 = pneg %p140
        %s231 = sand.u32 %s130, 1
        %s232 = scalar_lea.sflag [#allocation5], %s231
        %s233 = sand.u32 %s130, 1
        %s234 = smul.addr %s233, 16
        %s235 = scalar_lea.vmem [#allocation4], %s234
        %p236 = pneg %p169
        %p237 = pneg %p166
        %p238 = scmp.lt.s32.totalorder %s23, 1
        %s239 = scalar_select %p238, %s23, 1
        %s240 = scalar_lea.vmem %s5, %s239
        %p241 = scmp.lt.s32.totalorder %s23, 1
        %s242 = scalar_select %p241, %s23, 1
        %s243 = smul.addr %s242, 4
        %s244 = smul.addr %s243, 8
        %s245 = scalar_lea.vmem %s0, %s244
        %p246 = scmp.lt.s32.totalorder %s23, 1
        %s247 = scalar_select %p246, %s23, 1
        %s248 = smul.addr %s247, 2
        %s249 = smul.addr %s248, 8
        %s250 = scalar_lea.vmem %s2, %s249
        %p251 = scmp.lt.s32.totalorder %s23, 1
        %s252 = scalar_select %p251, %s23, 1
        %s253 = scalar_lea.vmem %s5, %s252
        %v254 = vld [vmem:[%s245] sm:$0xff]
        %v255 = vld [vmem:[%s245 + $0x8] sm:$0xff]
        %v256 = vld [vmem:[%s245 + $0x10] sm:$0xff]
        %v257 = vld [vmem:[%s245 + $0x18] sm:$0xff]
        %260 = vrot.lane.b32.xlu0 %v254, 64
        %v261 = vpop.permute.xlu0 %260
        %262 = vrot.lane.b32.xlu0 %v256, 64
        %v263 = vpop.permute.xlu0 %262
        %vm264 = vcmask 130048
        %v265 = vsel %vm264, %v254, 0
        %v267 = vsel %vm264, %v256, 0
        %v269 = vsel %vm264, %v261, 0
        %v271 = vsel %vm264, %v263, 0
        %273 = vmatprep.subr.mxu0 0.0
        %274 = vmatpush1.xpose.msra.mxu0 %v269
        %275 = vmatprep.subr.mxu0 0.0
        %276 = vmatpush1.xpose.msra.mxu0 %v271
        %277 = vmatprep.subr.mxu0 0.0
        %278 = vmatpush1.xpose.msra.mxu0 0.0
        %279 = vmatprep.subr.mxu0 0.0
        %280 = vmatpush1.xpose.msra.mxu0 0.0
        %281 = vmatprep.subr.mxu0 0.0
        %282 = vmatpush1.xpose.msra.mxu0 0.0
        %283 = vmatprep.subr.mxu0 0.0
        %284 = vmatpush1.xpose.msra.mxu0 0.0
        %285 = vmatprep.subr.mxu0 0.0
        %286 = vmatpush1.xpose.msra.mxu0 0.0
        %287 = vmatprep.subr.mxu0 0.0
        %288 = vmatpush1.xpose.msra.mxu0 0.0
        %289 = vmatprep.subr.mxu0 0.0
        %290 = vmatpush1.xpose.msra.mxu0 0.0
        %291 = vmatprep.subr.mxu0 0.0
        %292 = vmatpush1.xpose.msra.mxu0 0.0
        %293 = vmatprep.subr.mxu0 0.0
        %294 = vmatpush1.xpose.msra.mxu0 0.0
        %295 = vmatprep.subr.mxu0 0.0
        %296 = vmatpush1.xpose.msra.mxu0 0.0
        %297 = vmatprep.subr.mxu0 0.0
        %298 = vmatpush1.xpose.msra.mxu0 0.0
        %299 = vmatprep.subr.mxu0 0.0
        %300 = vmatpush1.xpose.msra.mxu0 0.0
        %301 = vmatprep.subr.mxu0 0.0
        %302 = vmatpush1.xpose.msra.mxu0 0.0
        %303 = vmatprep.subr.mxu0 0.0
        %304 = vmatpush1.xpose.msra.mxu0 0.0
        %305 = vmatprep.subr.mxu0 0.0
        %306 = vmatpush1.xpose.msra.mxu0 0.0
        %307 = vmatprep.subr.mxu0 0.0
        %308 = vmatpush1.xpose.msra.mxu0 0.0
        %309 = vmatprep.subr.mxu0 0.0
        %310 = vmatpush1.xpose.msra.mxu0 0.0
        %311 = vmatprep.subr.mxu0 0.0
        %312 = vmatpush1.xpose.msra.mxu0 0.0
        %313 = vmatprep.subr.mxu0 0.0
        %314 = vmatpush1.xpose.msra.mxu0 0.0
        %315 = vmatprep.subr.mxu0 0.0
        %316 = vmatpush1.xpose.msra.mxu0 0.0
        %317 = vmatprep.subr.mxu0 0.0
        %318 = vmatpush1.xpose.msra.mxu0 0.0
        %319 = vmatprep.subr.mxu0 0.0
        %320 = vmatpush1.xpose.msra.mxu0 0.0
        %321 = vmatprep.subr.mxu0 0.0
        %322 = vmatpush1.xpose.msra.mxu0 0.0
        %323 = vmatprep.subr.mxu0 0.0
        %324 = vmatpush1.xpose.msra.mxu0 0.0
        %325 = vmatprep.subr.mxu0 0.0
        %326 = vmatpush1.xpose.msra.mxu0 0.0
        %327 = vmatprep.subr.mxu0 0.0
        %328 = vmatpush1.xpose.msra.mxu0 0.0
        %329 = vmatprep.subr.mxu0 0.0
        %330 = vmatpush1.xpose.msra.mxu0 0.0
        %331 = vmatprep.subr.mxu0 0.0
        %332 = vmatpush1.xpose.msra.mxu0 0.0
        %333 = vmatprep.subr.mxu0 0.0
        %334 = vmatpush1.xpose.msra.mxu0 0.0
        %335 = vmatprep.subr.mxu0 0.0
        %336 = vmatpush1.xpose.msra.mxu0 0.0
        %337 = vmatprep.mubr.f32.mxu0 0.0
        %338 = vmatmul.mubr.f32.gmra.mrb[0].mxu0 %v265
        %v339 = vpop.f32.mrb[0].mxu0
        %v340 = vadd.f32 0.0, %v339
        %v341 = vpop.f32.mrb[0].mxu0
        %342 = vmatprep.mubr.f32.mxu0 0.0
        %343 = vmatmul.mubr.f32.gmra.mrb[0].mxu0 %v267
        %v344 = vpop.f32.mrb[0].mxu0
        %v345 = vadd.f32 0.0, %v344
        %v346 = vpop.f32.mrb[0].mxu0
        %347 = vdwg.mxu0
        %v348 = vmul.f32 %v340, 0.25
        %v349 = vmul.f32 %v345, 0.25
        %v350 = vld [vmem:[%s1] sm:$0xff]
        %v351 = vld [vmem:[%s1 + $0x8] sm:$0xff]
        %v352 = vadd.f32 %v348, %v350
        %v353 = vadd.f32 %v349, %v351
        %v354 = vsel %vm264, %v352, -inf
        %355 = vmax.xlane.f32.xlu0 %v354
        %v356 = vpop.xlane.xlu0 %355
        %v357 = vsel %vm264, %v353, -inf
        %358 = vmax.xlane.f32.xlu0 %v357
        %v359 = vpop.xlane.xlu0 %358
        %v360 = vsub.f32 %v352, %v356
        %v361 = vsub.f32 %v353, %v359
        %v362 = vmul.f32 %v360, 1.442695
        %v363 = vpow.pop %v362
        %v364 = vmul.f32 %v361, 1.442695
        %v365 = vpow.pop %v364
        %v366 = vsel %vm264, %v363, 0.0
        %367 = vadd.xlane.f32.xlu0 %v366
        %v368 = vpop.xlane.xlu0 %367
        %v369 = vsel %vm264, %v365, 0.0
        %370 = vadd.xlane.f32.xlu0 %v369
        %v371 = vpop.xlane.xlu0 %370
        %v372 = vrcp.pop %v368
        %v373 = vrcp.pop %v371
        %v374 = vmul.f32 %v363, %v372
        %v375 = vmul.f32 %v365, %v373
        %v377 = vsel %vm264, %v374, 0
        %v380 = vsel %vm264, %v375, 0
        %382 = vmatprep.subr.mxu0 0.0
        %383 = vmatpush1.msra.mxu0 %v255
        %384 = vmatprep.subr.mxu0 0.0
        %385 = vmatpush1.msra.mxu0 %v257
        %386 = vmatprep.subr.mxu0 0.0
        %387 = vmatpush1.msra.mxu0 0.0
        %388 = vmatprep.subr.mxu0 0.0
        %389 = vmatpush1.msra.mxu0 0.0
        %390 = vmatprep.subr.mxu0 0.0
        %391 = vmatpush1.msra.mxu0 0.0
        %392 = vmatprep.subr.mxu0 0.0
        %393 = vmatpush1.msra.mxu0 0.0
        %394 = vmatprep.subr.mxu0 0.0
        %395 = vmatpush1.msra.mxu0 0.0
        %396 = vmatprep.subr.mxu0 0.0
        %397 = vmatpush1.msra.mxu0 0.0
        %398 = vmatprep.subr.mxu0 0.0
        %399 = vmatpush1.msra.mxu0 0.0
        %400 = vmatprep.subr.mxu0 0.0
        %401 = vmatpush1.msra.mxu0 0.0
        %402 = vmatprep.subr.mxu0 0.0
        %403 = vmatpush1.msra.mxu0 0.0
        %404 = vmatprep.subr.mxu0 0.0
        %405 = vmatpush1.msra.mxu0 0.0
        %406 = vmatprep.subr.mxu0 0.0
        %407 = vmatpush1.msra.mxu0 0.0
        %408 = vmatprep.subr.mxu0 0.0
        %409 = vmatpush1.msra.mxu0 0.0
        %410 = vmatprep.subr.mxu0 0.0
        %411 = vmatpush1.msra.mxu0 0.0
        %412 = vmatprep.subr.mxu0 0.0
        %413 = vmatpush1.msra.mxu0 0.0
        %414 = vmatprep.subr.mxu0 0.0
        %415 = vmatpush1.msra.mxu0 0.0
        %416 = vmatprep.subr.mxu0 0.0
        %417 = vmatpush1.msra.mxu0 0.0
        %418 = vmatprep.subr.mxu0 0.0
        %419 = vmatpush1.msra.mxu0 0.0
        %420 = vmatprep.subr.mxu0 0.0
        %421 = vmatpush1.msra.mxu0 0.0
        %422 = vmatprep.subr.mxu0 0.0
        %423 = vmatpush1.msra.mxu0 0.0
        %424 = vmatprep.subr.mxu0 0.0
        %425 = vmatpush1.msra.mxu0 0.0
        %426 = vmatprep.subr.mxu0 0.0
        %427 = vmatpush1.msra.mxu0 0.0
        %428 = vmatprep.subr.mxu0 0.0
        %429 = vmatpush1.msra.mxu0 0.0
        %430 = vmatprep.subr.mxu0 0.0
        %431 = vmatpush1.msra.mxu0 0.0
        %432 = vmatprep.subr.mxu0 0.0
        %433 = vmatpush1.msra.mxu0 0.0
        %434 = vmatprep.subr.mxu0 0.0
        %435 = vmatpush1.msra.mxu0 0.0
        %436 = vmatprep.subr.mxu0 0.0
        %437 = vmatpush1.msra.mxu0 0.0
        %438 = vmatprep.subr.mxu0 0.0
        %439 = vmatpush1.msra.mxu0 0.0
        %440 = vmatprep.subr.mxu0 0.0
        %441 = vmatpush1.msra.mxu0 0.0
        %442 = vmatprep.subr.mxu0 0.0
        %443 = vmatpush1.msra.mxu0 0.0
        %444 = vmatprep.subr.mxu0 0.0
        %445 = vmatpush1.msra.mxu0 0.0
        %446 = vmatprep.mubr.f32.mxu0 0.0
        %447 = vmatmul.mubr.f32.gmra.mrb[0].mxu0 %v377
        %v448 = vpop.f32.mrb[0].mxu0
        %v449 = vadd.f32 0.0, %v448
        %v450 = vpop.f32.mrb[0].mxu0
        %451 = vmatprep.mubr.f32.mxu0 0.0
        %452 = vmatmul.mubr.f32.gmra.mrb[0].mxu0 %v380
        %v453 = vpop.f32.mrb[0].mxu0
        %v454 = vadd.f32 0.0, %v453
        %v455 = vpop.f32.mrb[0].mxu0
        %456 = vdwg.mxu0
        %457 = vst.msk [vmem:[%s228] sm:$0xff] %vm264, %v374
        %458 = vst.msk [vmem:[%s228 + $0x8] sm:$0xff] %vm264, %v375
        %459 = vrot.lane.b32.xlu0 %v254, 112
        %v460 = vpop.permute.xlu0 %459
        %461 = vrot.lane.b32.xlu0 %v256, 112
        %v462 = vpop.permute.xlu0 %461
        %463 = vrot.lane.b32.xlu0 %v254, 48
        %v464 = vpop.permute.xlu0 %463
        %465 = vrot.lane.b32.xlu0 %v256, 48
        %v466 = vpop.permute.xlu0 %465
        %v467 = vsel %vm264, %v460, 0
        %v469 = vsel %vm264, %v462, 0
        %v471 = vsel %vm264, %v464, 0
        %v473 = vsel %vm264, %v466, 0
        %475 = vmatprep.subr.mxu0 0.0
        %476 = vmatpush1.xpose.msra.mxu0 %v471
        %477 = vmatprep.subr.mxu0 0.0
        %478 = vmatpush1.xpose.msra.mxu0 %v473
        %479 = vmatprep.subr.mxu0 0.0
        %480 = vmatpush1.xpose.msra.mxu0 0.0
        %481 = vmatprep.subr.mxu0 0.0
        %482 = vmatpush1.xpose.msra.mxu0 0.0
        %483 = vmatprep.subr.mxu0 0.0
        %484 = vmatpush1.xpose.msra.mxu0 0.0
        %485 = vmatprep.subr.mxu0 0.0
        %486 = vmatpush1.xpose.msra.mxu0 0.0
        %487 = vmatprep.subr.mxu0 0.0
        %488 = vmatpush1.xpose.msra.mxu0 0.0
        %489 = vmatprep.subr.mxu0 0.0
        %490 = vmatpush1.xpose.msra.mxu0 0.0
        %491 = vmatprep.subr.mxu0 0.0
        %492 = vmatpush1.xpose.msra.mxu0 0.0
        %493 = vmatprep.subr.mxu0 0.0
        %494 = vmatpush1.xpose.msra.mxu0 0.0
        %495 = vmatprep.subr.mxu0 0.0
        %496 = vmatpush1.xpose.msra.mxu0 0.0
        %497 = vmatprep.subr.mxu0 0.0
        %498 = vmatpush1.xpose.msra.mxu0 0.0
        %499 = vmatprep.subr.mxu0 0.0
        %500 = vmatpush1.xpose.msra.mxu0 0.0
        %501 = vmatprep.subr.mxu0 0.0
        %502 = vmatpush1.xpose.msra.mxu0 0.0
        %503 = vmatprep.subr.mxu0 0.0
        %504 = vmatpush1.xpose.msra.mxu0 0.0
        %505 = vmatprep.subr.mxu0 0.0
        %506 = vmatpush1.xpose.msra.mxu0 0.0
        %507 = vmatprep.subr.mxu0 0.0
        %508 = vmatpush1.xpose.msra.mxu0 0.0
        %509 = vmatprep.subr.mxu0 0.0
        %510 = vmatpush1.xpose.msra.mxu0 0.0
        %511 = vmatprep.subr.mxu0 0.0
        %512 = vmatpush1.xpose.msra.mxu0 0.0
        %513 = vmatprep.subr.mxu0 0.0
        %514 = vmatpush1.xpose.msra.mxu0 0.0
        %515 = vmatprep.subr.mxu0 0.0
        %516 = vmatpush1.xpose.msra.mxu0 0.0
        %517 = vmatprep.subr.mxu0 0.0
        %518 = vmatpush1.xpose.msra.mxu0 0.0
        %519 = vmatprep.subr.mxu0 0.0
        %520 = vmatpush1.xpose.msra.mxu0 0.0
        %521 = vmatprep.subr.mxu0 0.0
        %522 = vmatpush1.xpose.msra.mxu0 0.0
        %523 = vmatprep.subr.mxu0 0.0
        %524 = vmatpush1.xpose.msra.mxu0 0.0
        %525 = vmatprep.subr.mxu0 0.0
        %526 = vmatpush1.xpose.msra.mxu0 0.0
        %527 = vmatprep.subr.mxu0 0.0
        %528 = vmatpush1.xpose.msra.mxu0 0.0
        %529 = vmatprep.subr.mxu0 0.0
        %530 = vmatpush1.xpose.msra.mxu0 0.0
        %531 = vmatprep.subr.mxu0 0.0
        %532 = vmatpush1.xpose.msra.mxu0 0.0
        %533 = vmatprep.subr.mxu0 0.0
        %534 = vmatpush1.xpose.msra.mxu0 0.0
        %535 = vmatprep.subr.mxu0 0.0
        %536 = vmatpush1.xpose.msra.mxu0 0.0
        %537 = vmatprep.subr.mxu0 0.0
        %538 = vmatpush1.xpose.msra.mxu0 0.0
        %539 = vmatprep.mubr.f32.mxu0 0.0
        %540 = vmatmul.mubr.f32.gmra.mrb[0].mxu0 %v467
        %v541 = vpop.f32.mrb[0].mxu0
        %v542 = vadd.f32 0.0, %v541
        %v543 = vpop.f32.mrb[0].mxu0
        %544 = vmatprep.mubr.f32.mxu0 0.0
        %545 = vmatmul.mubr.f32.gmra.mrb[0].mxu0 %v469
        %v546 = vpop.f32.mrb[0].mxu0
        %v547 = vadd.f32 0.0, %v546
        %v548 = vpop.f32.mrb[0].mxu0
        %549 = vdwg.mxu0
        %v550 = vmul.f32 %v542, 0.25
        %v551 = vmul.f32 %v547, 0.25
        %s552 = scalar_lea.vmem %s1, 16
        %v553 = vld [vmem:[%s552] sm:$0xff]
        %v554 = vld [vmem:[%s552 + $0x8] sm:$0xff]
        %v555 = vadd.f32 %v550, %v553
        %v556 = vadd.f32 %v551, %v554
        %v557 = vsel %vm264, %v555, -inf
        %558 = vmax.xlane.f32.xlu0 %v557
        %v559 = vpop.xlane.xlu0 %558
        %v560 = vsel %vm264, %v556, -inf
        %561 = vmax.xlane.f32.xlu0 %v560
        %v562 = vpop.xlane.xlu0 %561
        %v563 = vsub.f32 %v555, %v559
        %v564 = vsub.f32 %v556, %v562
        %v565 = vmul.f32 %v563, 1.442695
        %v566 = vpow.pop %v565
        %v567 = vmul.f32 %v564, 1.442695
        %v568 = vpow.pop %v567
        %v569 = vsel %vm264, %v566, 0.0
        %570 = vadd.xlane.f32.xlu0 %v569
        %v571 = vpop.xlane.xlu0 %570
        %v572 = vsel %vm264, %v568, 0.0
        %573 = vadd.xlane.f32.xlu0 %v572
        %v574 = vpop.xlane.xlu0 %573
        %v575 = vrcp.pop %v571
        %v576 = vrcp.pop %v574
        %v577 = vmul.f32 %v566, %v575
        %v578 = vmul.f32 %v568, %v576
        %581 = vrot.lane.b32.xlu0 %v255, 112
        %v582 = vpop.permute.xlu0 %581
        %583 = vrot.lane.b32.xlu0 %v257, 112
        %v584 = vpop.permute.xlu0 %583
        %v588 = vsel %vm264, %v577, 0
        %v591 = vsel %vm264, %v578, 0
        %593 = vmatprep.subr.mxu0 0.0
        %594 = vmatpush1.msra.mxu0 %v582
        %595 = vmatprep.subr.mxu0 0.0
        %596 = vmatpush1.msra.mxu0 %v584
        %597 = vmatprep.subr.mxu0 0.0
        %598 = vmatpush1.msra.mxu0 0.0
        %599 = vmatprep.subr.mxu0 0.0
        %600 = vmatpush1.msra.mxu0 0.0
        %601 = vmatprep.subr.mxu0 0.0
        %602 = vmatpush1.msra.mxu0 0.0
        %603 = vmatprep.subr.mxu0 0.0
        %604 = vmatpush1.msra.mxu0 0.0
        %605 = vmatprep.subr.mxu0 0.0
        %606 = vmatpush1.msra.mxu0 0.0
        %607 = vmatprep.subr.mxu0 0.0
        %608 = vmatpush1.msra.mxu0 0.0
        %609 = vmatprep.subr.mxu0 0.0
        %610 = vmatpush1.msra.mxu0 0.0
        %611 = vmatprep.subr.mxu0 0.0
        %612 = vmatpush1.msra.mxu0 0.0
        %613 = vmatprep.subr.mxu0 0.0
        %614 = vmatpush1.msra.mxu0 0.0
        %615 = vmatprep.subr.mxu0 0.0
        %616 = vmatpush1.msra.mxu0 0.0
        %617 = vmatprep.subr.mxu0 0.0
        %618 = vmatpush1.msra.mxu0 0.0
        %619 = vmatprep.subr.mxu0 0.0
        %620 = vmatpush1.msra.mxu0 0.0
        %621 = vmatprep.subr.mxu0 0.0
        %622 = vmatpush1.msra.mxu0 0.0
        %623 = vmatprep.subr.mxu0 0.0
        %624 = vmatpush1.msra.mxu0 0.0
        %625 = vmatprep.subr.mxu0 0.0
        %626 = vmatpush1.msra.mxu0 0.0
        %627 = vmatprep.subr.mxu0 0.0
        %628 = vmatpush1.msra.mxu0 0.0
        %629 = vmatprep.subr.mxu0 0.0
        %630 = vmatpush1.msra.mxu0 0.0
        %631 = vmatprep.subr.mxu0 0.0
        %632 = vmatpush1.msra.mxu0 0.0
        %633 = vmatprep.subr.mxu0 0.0
        %634 = vmatpush1.msra.mxu0 0.0
        %635 = vmatprep.subr.mxu0 0.0
        %636 = vmatpush1.msra.mxu0 0.0
        %637 = vmatprep.subr.mxu0 0.0
        %638 = vmatpush1.msra.mxu0 0.0
        %639 = vmatprep.subr.mxu0 0.0
        %640 = vmatpush1.msra.mxu0 0.0
        %641 = vmatprep.subr.mxu0 0.0
        %642 = vmatpush1.msra.mxu0 0.0
        %643 = vmatprep.subr.mxu0 0.0
        %644 = vmatpush1.msra.mxu0 0.0
        %645 = vmatprep.subr.mxu0 0.0
        %646 = vmatpush1.msra.mxu0 0.0
        %647 = vmatprep.subr.mxu0 0.0
        %648 = vmatpush1.msra.mxu0 0.0
        %649 = vmatprep.subr.mxu0 0.0
        %650 = vmatpush1.msra.mxu0 0.0
        %651 = vmatprep.subr.mxu0 0.0
        %652 = vmatpush1.msra.mxu0 0.0
        %653 = vmatprep.subr.mxu0 0.0
        %654 = vmatpush1.msra.mxu0 0.0
        %655 = vmatprep.subr.mxu0 0.0
        %656 = vmatpush1.msra.mxu0 0.0
        %657 = vmatprep.mubr.f32.mxu0 0.0
        %658 = vmatmul.mubr.f32.gmra.mrb[0].mxu0 %v588
        %v659 = vpop.f32.mrb[0].mxu0
        %v660 = vadd.f32 0.0, %v659
        %v661 = vpop.f32.mrb[0].mxu0
        %662 = vmatprep.mubr.f32.mxu0 0.0
        %663 = vmatmul.mubr.f32.gmra.mrb[0].mxu0 %v591
        %v664 = vpop.f32.mrb[0].mxu0
        %v665 = vadd.f32 0.0, %v664
        %v666 = vpop.f32.mrb[0].mxu0
        %667 = vdwg.mxu0
        %s668 = scalar_lea.vmem %s228, 16 [#allocation2]
        %669 = vst.msk [vmem:[%s668] sm:$0xff] %vm264, %v577
        %670 = vst.msk [vmem:[%s668 + $0x8] sm:$0xff] %vm264, %v578
        %v671 = vadd.f32 %v374, %v577
        %v672 = vadd.f32 %v375, %v578
        %673 = vrot.lane.b32.xlu0 %v254, 96
        %v674 = vpop.permute.xlu0 %673
        %675 = vrot.lane.b32.xlu0 %v256, 96
        %v676 = vpop.permute.xlu0 %675
        %677 = vrot.lane.b32.xlu0 %v254, 32
        %v678 = vpop.permute.xlu0 %677
        %679 = vrot.lane.b32.xlu0 %v256, 32
        %v680 = vpop.permute.xlu0 %679
        %v681 = vsel %vm264, %v674, 0
        %v683 = vsel %vm264, %v676, 0
        %v685 = vsel %vm264, %v678, 0
        %v687 = vsel %vm264, %v680, 0
        %689 = vmatprep.subr.mxu0 0.0
        %690 = vmatpush1.xpose.msra.mxu0 %v685
        %691 = vmatprep.subr.mxu0 0.0
        %692 = vmatpush1.xpose.msra.mxu0 %v687
        %693 = vmatprep.subr.mxu0 0.0
        %694 = vmatpush1.xpose.msra.mxu0 0.0
        %695 = vmatprep.subr.mxu0 0.0
        %696 = vmatpush1.xpose.msra.mxu0 0.0
        %697 = vmatprep.subr.mxu0 0.0
        %698 = vmatpush1.xpose.msra.mxu0 0.0
        %699 = vmatprep.subr.mxu0 0.0
        %700 = vmatpush1.xpose.msra.mxu0 0.0
        %701 = vmatprep.subr.mxu0 0.0
        %702 = vmatpush1.xpose.msra.mxu0 0.0
        %703 = vmatprep.subr.mxu0 0.0
        %704 = vmatpush1.xpose.msra.mxu0 0.0
        %705 = vmatprep.subr.mxu0 0.0
        %706 = vmatpush1.xpose.msra.mxu0 0.0
        %707 = vmatprep.subr.mxu0 0.0
        %708 = vmatpush1.xpose.msra.mxu0 0.0
        %709 = vmatprep.subr.mxu0 0.0
        %710 = vmatpush1.xpose.msra.mxu0 0.0
        %711 = vmatprep.subr.mxu0 0.0
        %712 = vmatpush1.xpose.msra.mxu0 0.0
        %713 = vmatprep.subr.mxu0 0.0
        %714 = vmatpush1.xpose.msra.mxu0 0.0
        %715 = vmatprep.subr.mxu0 0.0
        %716 = vmatpush1.xpose.msra.mxu0 0.0
        %717 = vmatprep.subr.mxu0 0.0
        %718 = vmatpush1.xpose.msra.mxu0 0.0
        %719 = vmatprep.subr.mxu0 0.0
        %720 = vmatpush1.xpose.msra.mxu0 0.0
        %721 = vmatprep.subr.mxu0 0.0
        %722 = vmatpush1.xpose.msra.mxu0 0.0
        %723 = vmatprep.subr.mxu0 0.0
        %724 = vmatpush1.xpose.msra.mxu0 0.0
        %725 = vmatprep.subr.mxu0 0.0
        %726 = vmatpush1.xpose.msra.mxu0 0.0
        %727 = vmatprep.subr.mxu0 0.0
        %728 = vmatpush1.xpose.msra.mxu0 0.0
        %729 = vmatprep.subr.mxu0 0.0
        %730 = vmatpush1.xpose.msra.mxu0 0.0
        %731 = vmatprep.subr.mxu0 0.0
        %732 = vmatpush1.xpose.msra.mxu0 0.0
        %733 = vmatprep.subr.mxu0 0.0
        %734 = vmatpush1.xpose.msra.mxu0 0.0
        %735 = vmatprep.subr.mxu0 0.0
        %736 = vmatpush1.xpose.msra.mxu0 0.0
        %737 = vmatprep.subr.mxu0 0.0
        %738 = vmatpush1.xpose.msra.mxu0 0.0
        %739 = vmatprep.subr.mxu0 0.0
        %740 = vmatpush1.xpose.msra.mxu0 0.0
        %741 = vmatprep.subr.mxu0 0.0
        %742 = vmatpush1.xpose.msra.mxu0 0.0
        %743 = vmatprep.subr.mxu0 0.0
        %744 = vmatpush1.xpose.msra.mxu0 0.0
        %745 = vmatprep.subr.mxu0 0.0
        %746 = vmatpush1.xpose.msra.mxu0 0.0
        %747 = vmatprep.subr.mxu0 0.0
        %748 = vmatpush1.xpose.msra.mxu0 0.0
        %749 = vmatprep.subr.mxu0 0.0
        %750 = vmatpush1.xpose.msra.mxu0 0.0
        %751 = vmatprep.subr.mxu0 0.0
        %752 = vmatpush1.xpose.msra.mxu0 0.0
        %753 = vmatprep.mubr.f32.mxu0 0.0
        %754 = vmatmul.mubr.f32.gmra.mrb[0].mxu0 %v681
        %v755 = vpop.f32.mrb[0].mxu0
        %v756 = vadd.f32 0.0, %v755
        %v757 = vpop.f32.mrb[0].mxu0
        %758 = vmatprep.mubr.f32.mxu0 0.0
        %759 = vmatmul.mubr.f32.gmra.mrb[0].mxu0 %v683
        %v760 = vpop.f32.mrb[0].mxu0
        %v761 = vadd.f32 0.0, %v760
        %v762 = vpop.f32.mrb[0].mxu0
        %763 = vdwg.mxu0
        %v764 = vmul.f32 %v756, 0.25
        %v765 = vmul.f32 %v761, 0.25
        %s766 = scalar_lea.vmem %s1, 32
        %v767 = vld [vmem:[%s766] sm:$0xff]
        %v768 = vld [vmem:[%s766 + $0x8] sm:$0xff]
        %v769 = vadd.f32 %v764, %v767
        %v770 = vadd.f32 %v765, %v768
        %v771 = vsel %vm264, %v769, -inf
        %772 = vmax.xlane.f32.xlu0 %v771
        %v773 = vpop.xlane.xlu0 %772
        %v774 = vsel %vm264, %v770, -inf
        %775 = vmax.xlane.f32.xlu0 %v774
        %v776 = vpop.xlane.xlu0 %775
        %v777 = vsub.f32 %v769, %v773
        %v778 = vsub.f32 %v770, %v776
        %v779 = vmul.f32 %v777, 1.442695
        %v780 = vpow.pop %v779
        %v781 = vmul.f32 %v778, 1.442695
        %v782 = vpow.pop %v781
        %v783 = vsel %vm264, %v780, 0.0
        %784 = vadd.xlane.f32.xlu0 %v783
        %v785 = vpop.xlane.xlu0 %784
        %v786 = vsel %vm264, %v782, 0.0
        %787 = vadd.xlane.f32.xlu0 %v786
        %v788 = vpop.xlane.xlu0 %787
        %v789 = vrcp.pop %v785
        %v790 = vrcp.pop %v788
        %v791 = vmul.f32 %v780, %v789
        %v792 = vmul.f32 %v782, %v790
        %793 = vrot.lane.b32.xlu0 %v255, 96
        %v794 = vpop.permute.xlu0 %793
        %795 = vrot.lane.b32.xlu0 %v257, 96
        %v796 = vpop.permute.xlu0 %795
        %v800 = vsel %vm264, %v791, 0
        %v803 = vsel %vm264, %v792, 0
        %805 = vmatprep.subr.mxu0 0.0
        %806 = vmatpush1.msra.mxu0 %v794
        %807 = vmatprep.subr.mxu0 0.0
        %808 = vmatpush1.msra.mxu0 %v796
        %809 = vmatprep.subr.mxu0 0.0
        %810 = vmatpush1.msra.mxu0 0.0
        %811 = vmatprep.subr.mxu0 0.0
        %812 = vmatpush1.msra.mxu0 0.0
        %813 = vmatprep.subr.mxu0 0.0
        %814 = vmatpush1.msra.mxu0 0.0
        %815 = vmatprep.subr.mxu0 0.0
        %816 = vmatpush1.msra.mxu0 0.0
        %817 = vmatprep.subr.mxu0 0.0
        %818 = vmatpush1.msra.mxu0 0.0
        %819 = vmatprep.subr.mxu0 0.0
        %820 = vmatpush1.msra.mxu0 0.0
        %821 = vmatprep.subr.mxu0 0.0
        %822 = vmatpush1.msra.mxu0 0.0
        %823 = vmatprep.subr.mxu0 0.0
        %824 = vmatpush1.msra.mxu0 0.0
        %825 = vmatprep.subr.mxu0 0.0
        %826 = vmatpush1.msra.mxu0 0.0
        %827 = vmatprep.subr.mxu0 0.0
        %828 = vmatpush1.msra.mxu0 0.0
        %829 = vmatprep.subr.mxu0 0.0
        %830 = vmatpush1.msra.mxu0 0.0
        %831 = vmatprep.subr.mxu0 0.0
        %832 = vmatpush1.msra.mxu0 0.0
        %833 = vmatprep.subr.mxu0 0.0
        %834 = vmatpush1.msra.mxu0 0.0
        %835 = vmatprep.subr.mxu0 0.0
        %836 = vmatpush1.msra.mxu0 0.0
        %837 = vmatprep.subr.mxu0 0.0
        %838 = vmatpush1.msra.mxu0 0.0
        %839 = vmatprep.subr.mxu0 0.0
        %840 = vmatpush1.msra.mxu0 0.0
        %841 = vmatprep.subr.mxu0 0.0
        %842 = vmatpush1.msra.mxu0 0.0
        %843 = vmatprep.subr.mxu0 0.0
        %844 = vmatpush1.msra.mxu0 0.0
        %845 = vmatprep.subr.mxu0 0.0
        %846 = vmatpush1.msra.mxu0 0.0
        %847 = vmatprep.subr.mxu0 0.0
        %848 = vmatpush1.msra.mxu0 0.0
        %849 = vmatprep.subr.mxu0 0.0
        %850 = vmatpush1.msra.mxu0 0.0
        %851 = vmatprep.subr.mxu0 0.0
        %852 = vmatpush1.msra.mxu0 0.0
        %853 = vmatprep.subr.mxu0 0.0
        %854 = vmatpush1.msra.mxu0 0.0
        %855 = vmatprep.subr.mxu0 0.0
        %856 = vmatpush1.msra.mxu0 0.0
        %857 = vmatprep.subr.mxu0 0.0
        %858 = vmatpush1.msra.mxu0 0.0
        %859 = vmatprep.subr.mxu0 0.0
        %860 = vmatpush1.msra.mxu0 0.0
        %861 = vmatprep.subr.mxu0 0.0
        %862 = vmatpush1.msra.mxu0 0.0
        %863 = vmatprep.subr.mxu0 0.0
        %864 = vmatpush1.msra.mxu0 0.0
        %865 = vmatprep.subr.mxu0 0.0
        %866 = vmatpush1.msra.mxu0 0.0
        %867 = vmatprep.subr.mxu0 0.0
        %868 = vmatpush1.msra.mxu0 0.0
        %869 = vmatprep.mubr.f32.mxu0 0.0
        %870 = vmatmul.mubr.f32.gmra.mrb[0].mxu0 %v800
        %v871 = vpop.f32.mrb[0].mxu0
        %v872 = vadd.f32 0.0, %v871
        %v873 = vpop.f32.mrb[0].mxu0
        %874 = vmatprep.mubr.f32.mxu0 0.0
        %875 = vmatmul.mubr.f32.gmra.mrb[0].mxu0 %v803
        %v876 = vpop.f32.mrb[0].mxu0
        %v877 = vadd.f32 0.0, %v876
        %v878 = vpop.f32.mrb[0].mxu0
        %879 = vdwg.mxu0
        %s880 = scalar_lea.vmem %s228, 32 [#allocation2]
        %881 = vst.msk [vmem:[%s880] sm:$0xff] %vm264, %v791
        %882 = vst.msk [vmem:[%s880 + $0x8] sm:$0xff] %vm264, %v792
        %v883 = vadd.f32 %v671, %v791
        %v884 = vadd.f32 %v672, %v792
        %885 = vrot.lane.b32.xlu0 %v254, 80
        %v886 = vpop.permute.xlu0 %885
        %887 = vrot.lane.b32.xlu0 %v256, 80
        %v888 = vpop.permute.xlu0 %887
        %889 = vrot.lane.b32.xlu0 %v254, 16
        %v890 = vpop.permute.xlu0 %889
        %891 = vrot.lane.b32.xlu0 %v256, 16
        %v892 = vpop.permute.xlu0 %891
        %v893 = vsel %vm264, %v886, 0
        %v895 = vsel %vm264, %v888, 0
        %v897 = vsel %vm264, %v890, 0
        %v899 = vsel %vm264, %v892, 0
        %901 = vmatprep.subr.mxu0 0.0
        %902 = vmatpush1.xpose.msra.mxu0 %v897
        %903 = vmatprep.subr.mxu0 0.0
        %904 = vmatpush1.xpose.msra.mxu0 %v899
        %905 = vmatprep.subr.mxu0 0.0
        %906 = vmatpush1.xpose.msra.mxu0 0.0
        %907 = vmatprep.subr.mxu0 0.0
        %908 = vmatpush1.xpose.msra.mxu0 0.0
        %909 = vmatprep.subr.mxu0 0.0
        %910 = vmatpush1.xpose.msra.mxu0 0.0
        %911 = vmatprep.subr.mxu0 0.0
        %912 = vmatpush1.xpose.msra.mxu0 0.0
        %913 = vmatprep.subr.mxu0 0.0
        %914 = vmatpush1.xpose.msra.mxu0 0.0
        %915 = vmatprep.subr.mxu0 0.0
        %916 = vmatpush1.xpose.msra.mxu0 0.0
        %917 = vmatprep.subr.mxu0 0.0
        %918 = vmatpush1.xpose.msra.mxu0 0.0
        %919 = vmatprep.subr.mxu0 0.0
        %920 = vmatpush1.xpose.msra.mxu0 0.0
        %921 = vmatprep.subr.mxu0 0.0
        %922 = vmatpush1.xpose.msra.mxu0 0.0
        %923 = vmatprep.subr.mxu0 0.0
        %924 = vmatpush1.xpose.msra.mxu0 0.0
        %925 = vmatprep.subr.mxu0 0.0
        %926 = vmatpush1.xpose.msra.mxu0 0.0
        %927 = vmatprep.subr.mxu0 0.0
        %928 = vmatpush1.xpose.msra.mxu0 0.0
        %929 = vmatprep.subr.mxu0 0.0
        %930 = vmatpush1.xpose.msra.mxu0 0.0
        %931 = vmatprep.subr.mxu0 0.0
        %932 = vmatpush1.xpose.msra.mxu0 0.0
        %933 = vmatprep.subr.mxu0 0.0
        %934 = vmatpush1.xpose.msra.mxu0 0.0
        %935 = vmatprep.subr.mxu0 0.0
        %936 = vmatpush1.xpose.msra.mxu0 0.0
        %937 = vmatprep.subr.mxu0 0.0
        %938 = vmatpush1.xpose.msra.mxu0 0.0
        %939 = vmatprep.subr.mxu0 0.0
        %940 = vmatpush1.xpose.msra.mxu0 0.0
        %941 = vmatprep.subr.mxu0 0.0
        %942 = vmatpush1.xpose.msra.mxu0 0.0
        %943 = vmatprep.subr.mxu0 0.0
        %944 = vmatpush1.xpose.msra.mxu0 0.0
        %945 = vmatprep.subr.mxu0 0.0
        %946 = vmatpush1.xpose.msra.mxu0 0.0
        %947 = vmatprep.subr.mxu0 0.0
        %948 = vmatpush1.xpose.msra.mxu0 0.0
        %949 = vmatprep.subr.mxu0 0.0
        %950 = vmatpush1.xpose.msra.mxu0 0.0
        %951 = vmatprep.subr.mxu0 0.0
        %952 = vmatpush1.xpose.msra.mxu0 0.0
        %953 = vmatprep.subr.mxu0 0.0
        %954 = vmatpush1.xpose.msra.mxu0 0.0
        %955 = vmatprep.subr.mxu0 0.0
        %956 = vmatpush1.xpose.msra.mxu0 0.0
        %957 = vmatprep.subr.mxu0 0.0
        %958 = vmatpush1.xpose.msra.mxu0 0.0
        %959 = vmatprep.subr.mxu0 0.0
        %960 = vmatpush1.xpose.msra.mxu0 0.0
        %961 = vmatprep.subr.mxu0 0.0
        %962 = vmatpush1.xpose.msra.mxu0 0.0
        %963 = vmatprep.subr.mxu0 0.0
        %964 = vmatpush1.xpose.msra.mxu0 0.0
        %965 = vmatprep.mubr.f32.mxu0 0.0
        %966 = vmatmul.mubr.f32.gmra.mrb[0].mxu0 %v893
        %v967 = vpop.f32.mrb[0].mxu0
        %v968 = vadd.f32 0.0, %v967
        %v969 = vpop.f32.mrb[0].mxu0
        %970 = vmatprep.mubr.f32.mxu0 0.0
        %971 = vmatmul.mubr.f32.gmra.mrb[0].mxu0 %v895
        %v972 = vpop.f32.mrb[0].mxu0
        %v973 = vadd.f32 0.0, %v972
        %v974 = vpop.f32.mrb[0].mxu0
        %975 = vdwg.mxu0
        %v976 = vmul.f32 %v968, 0.25
        %v977 = vmul.f32 %v973, 0.25
        %s978 = scalar_lea.vmem %s1, 48
        %v979 = vld [vmem:[%s978] sm:$0xff]
        %v980 = vld [vmem:[%s978 + $0x8] sm:$0xff]
        %v981 = vadd.f32 %v976, %v979
        %v982 = vadd.f32 %v977, %v980
        %v983 = vsel %vm264, %v981, -inf
        %984 = vmax.xlane.f32.xlu0 %v983
        %v985 = vpop.xlane.xlu0 %984
        %v986 = vsel %vm264, %v982, -inf
        %987 = vmax.xlane.f32.xlu0 %v986
        %v988 = vpop.xlane.xlu0 %987
        %v989 = vsub.f32 %v981, %v985
        %v990 = vsub.f32 %v982, %v988
        %v991 = vmul.f32 %v989, 1.442695
        %v992 = vpow.pop %v991
        %v993 = vmul.f32 %v990, 1.442695
        %v994 = vpow.pop %v993
        %v995 = vsel %vm264, %v992, 0.0
        %996 = vadd.xlane.f32.xlu0 %v995
        %v997 = vpop.xlane.xlu0 %996
        %v998 = vsel %vm264, %v994, 0.0
        %999 = vadd.xlane.f32.xlu0 %v998
        %v1000 = vpop.xlane.xlu0 %999
        %v1001 = vrcp.pop %v997
        %v1002 = vrcp.pop %v1000
        %v1003 = vmul.f32 %v992, %v1001
        %v1004 = vmul.f32 %v994, %v1002
        %1005 = vrot.lane.b32.xlu0 %v255, 80
        %v1006 = vpop.permute.xlu0 %1005
        %1007 = vrot.lane.b32.xlu0 %v257, 80
        %v1008 = vpop.permute.xlu0 %1007
        %v1012 = vsel %vm264, %v1003, 0
        %v1015 = vsel %vm264, %v1004, 0
        %1017 = vmatprep.subr.mxu0 0.0
        %1018 = vmatpush1.msra.mxu0 %v1006
        %1019 = vmatprep.subr.mxu0 0.0
        %1020 = vmatpush1.msra.mxu0 %v1008
        %1021 = vmatprep.subr.mxu0 0.0
        %1022 = vmatpush1.msra.mxu0 0.0
        %1023 = vmatprep.subr.mxu0 0.0
        %1024 = vmatpush1.msra.mxu0 0.0
        %1025 = vmatprep.subr.mxu0 0.0
        %1026 = vmatpush1.msra.mxu0 0.0
        %1027 = vmatprep.subr.mxu0 0.0
        %1028 = vmatpush1.msra.mxu0 0.0
        %1029 = vmatprep.subr.mxu0 0.0
        %1030 = vmatpush1.msra.mxu0 0.0
        %1031 = vmatprep.subr.mxu0 0.0
        %1032 = vmatpush1.msra.mxu0 0.0
        %1033 = vmatprep.subr.mxu0 0.0
        %1034 = vmatpush1.msra.mxu0 0.0
        %1035 = vmatprep.subr.mxu0 0.0
        %1036 = vmatpush1.msra.mxu0 0.0
        %1037 = vmatprep.subr.mxu0 0.0
        %1038 = vmatpush1.msra.mxu0 0.0
        %1039 = vmatprep.subr.mxu0 0.0
        %1040 = vmatpush1.msra.mxu0 0.0
        %1041 = vmatprep.subr.mxu0 0.0
        %1042 = vmatpush1.msra.mxu0 0.0
        %1043 = vmatprep.subr.mxu0 0.0
        %1044 = vmatpush1.msra.mxu0 0.0
        %1045 = vmatprep.subr.mxu0 0.0
        %1046 = vmatpush1.msra.mxu0 0.0
        %1047 = vmatprep.subr.mxu0 0.0
        %1048 = vmatpush1.msra.mxu0 0.0
        %1049 = vmatprep.subr.mxu0 0.0
        %1050 = vmatpush1.msra.mxu0 0.0
        %1051 = vmatprep.subr.mxu0 0.0
        %1052 = vmatpush1.msra.mxu0 0.0
        %1053 = vmatprep.subr.mxu0 0.0
        %1054 = vmatpush1.msra.mxu0 0.0
        %1055 = vmatprep.subr.mxu0 0.0
        %1056 = vmatpush1.msra.mxu0 0.0
        %1057 = vmatprep.subr.mxu0 0.0
        %1058 = vmatpush1.msra.mxu0 0.0
        %1059 = vmatprep.subr.mxu0 0.0
        %1060 = vmatpush1.msra.mxu0 0.0
        %1061 = vmatprep.subr.mxu0 0.0
        %1062 = vmatpush1.msra.mxu0 0.0
        %1063 = vmatprep.subr.mxu0 0.0
        %1064 = vmatpush1.msra.mxu0 0.0
        %1065 = vmatprep.subr.mxu0 0.0
        %1066 = vmatpush1.msra.mxu0 0.0
        %1067 = vmatprep.subr.mxu0 0.0
        %1068 = vmatpush1.msra.mxu0 0.0
        %1069 = vmatprep.subr.mxu0 0.0
        %1070 = vmatpush1.msra.mxu0 0.0
        %1071 = vmatprep.subr.mxu0 0.0
        %1072 = vmatpush1.msra.mxu0 0.0
        %1073 = vmatprep.subr.mxu0 0.0
        %1074 = vmatpush1.msra.mxu0 0.0
        %1075 = vmatprep.subr.mxu0 0.0
        %1076 = vmatpush1.msra.mxu0 0.0
        %1077 = vmatprep.subr.mxu0 0.0
        %1078 = vmatpush1.msra.mxu0 0.0
        %1079 = vmatprep.subr.mxu0 0.0
        %1080 = vmatpush1.msra.mxu0 0.0
        %1081 = vmatprep.mubr.f32.mxu0 0.0
        %1082 = vmatmul.mubr.f32.gmra.mrb[0].mxu0 %v1012
        %v1083 = vpop.f32.mrb[0].mxu0
        %v1084 = vadd.f32 0.0, %v1083
        %v1085 = vpop.f32.mrb[0].mxu0
        %1086 = vmatprep.mubr.f32.mxu0 0.0
        %1087 = vmatmul.mubr.f32.gmra.mrb[0].mxu0 %v1015
        %v1088 = vpop.f32.mrb[0].mxu0
        %v1089 = vadd.f32 0.0, %v1088
        %v1090 = vpop.f32.mrb[0].mxu0
        %1091 = vdwg.mxu0
        %s1092 = scalar_lea.vmem %s228, 48 [#allocation2]
        %1093 = vst.msk [vmem:[%s1092] sm:$0xff] %vm264, %v1003
        %1094 = vst.msk [vmem:[%s1092 + $0x8] sm:$0xff] %vm264, %v1004
        %v1095 = vadd.f32 %v883, %v1003
        %v1096 = vadd.f32 %v884, %v1004
        %1099 = vrot.lane.b32.xlu0 %v660, 16
        %v1100 = vpop.permute.xlu0 %1099
        %1101 = vrot.lane.b32.xlu0 %v665, 16
        %v1102 = vpop.permute.xlu0 %1101
        %1107 = vrot.lane.b32.xlu0 %v872, 32
        %v1108 = vpop.permute.xlu0 %1107
        %1109 = vrot.lane.b32.xlu0 %v877, 32
        %v1110 = vpop.permute.xlu0 %1109
        %1115 = vrot.lane.b32.xlu0 %v1084, 48
        %v1116 = vpop.permute.xlu0 %1115
        %1117 = vrot.lane.b32.xlu0 %v1089, 48
        %v1118 = vpop.permute.xlu0 %1117
        %v1121 = vsel %vm264, %v449, %v1100
        %v1122 = vsel %vm264, %v454, %v1102
        %vm1123 = vcmask 261120
        %v1124 = vsel %vm1123, %v1121, %v1108
        %v1125 = vsel %vm1123, %v1122, %v1110
        %vm1126 = vcmask 392192
        %v1127 = vsel %vm1126, %v1124, %v1116
        %v1128 = vsel %vm1126, %v1125, %v1118
        %vm1129 = vcmask 523264
        %1130 = vst.msk [vmem:[%s250] sm:$0xff] %vm1129, %v1127
        %1131 = vst.msk [vmem:[%s250 + $0x8] sm:$0xff] %vm1129, %v1128
        %v1132 = vmul.f32 %v1095, 0.25
        %v1133 = vmul.f32 %v1096, 0.25
        %1134 = vst.msk [vmem:[%s235] sm:$0xff] %vm264, %v1132
        %1135 = vst.msk [vmem:[%s235 + $0x8] sm:$0xff] %vm264, %v1133
        %v1136 = vsel %vm264, %v1132, 0.0
        %v1137 = vsel %vm264, %v1133, 0.0
        %v1138 = vadd.f32 %v1136, %v1137
        %v1139 = vrot.slane %v1138, 4
        %v1140 = vadd.f32 %v1138, %v1139
        %v1141 = vrot.slane %v1140, 2
        %v1142 = vadd.f32 %v1140, %v1141
        %v1143 = vrot.slane %v1142, 1
        %v1144 = vadd.f32 %v1142, %v1143
        %v1145 = vrcp.pop 16.0
        %v1146 = vmul.f32 %v1144, %v1145
        %vm1147 = vcmask 122880
        %1148 = vst.msk [vmem:[%s253] sm:$0x1] %vm1147, %v1146
        %p1149 = scmp.lt.s32.totalorder %s23, 1
        %s1150 = scalar_select %p1149, %s23, 1
        %s1151 = smul.addr %s1150, 2
        %s1152 = smul.addr %s1151, 8
        %s1153 = scalar_lea.vmem %s2, %s1152
        %s1154 = sand.u32 %s104, 1
        %s1155 = scalar_lea.sflag [#allocation3], %s1154
        %s1156 = sand.u32 %s104, 1
        %s1157 = smul.addr %s1156, 64
        %s1158 = scalar_lea.vmem [#allocation2], %s1157
        %s1159 = sand.u32 %s130, 1
        %s1160 = scalar_lea.sflag [#allocation5], %s1159
        %s1161 = sand.u32 %s130, 1
        %s1162 = smul.addr %s1161, 16
        %s1163 = scalar_lea.vmem [#allocation4], %s1162
        %p1164 = scmp.lt.s32.totalorder %s23, 1
        %s1165 = scalar_select %p1164, %s23, 1
        %s1166 = scalar_lea.vmem %s5, %s1165
        // Predicated region
        $region29: #{sam_forward.19} parent=27 // pred_check
          %p1167 = pneg %p88
        $region30: #{sam_forward.19} parent=27 // pred_check_branch
          %1169 = sbr.rel (%p1167) target = $region32
        $region31: #{sam_forward.19} parent=27 // pred_region
          _
        $region32: #{sam_forward.19} parent=27 // pred_fallthru
          _
        // Predicated region
        $region33: #{sam_forward.19} parent=27 // pred_check
          %p1170 = pneg %p114
        $region34: #{sam_forward.19} parent=27 // pred_check_branch
          %1172 = sbr.rel (%p1170) target = $region36
        $region35: #{sam_forward.19} parent=27 // pred_region
          %s1174 = ssub.s32 1024, 1024
          %1175 = vsyncadd %s1155, %s1174
          %s1176 = smul.addr %s23, 8
          %s1177 = smul.addr %s1176, 128
          %s1178 = scalar_lea.hbm %s3, %s1177
          %s1179 = sshll.u32 %s1158, 4
          %s1180 = int_to_ptr.vmem [resolvable:$true] %s1179
          %1185 = dma.vmem_to_hbm [thread:$0]  %s1180, 1024, %s1178, %s1155, 128, 128, 8
        $region36: #{sam_forward.19} parent=27 // pred_fallthru
          _
        // Predicated region
        $region37: #{sam_forward.19} parent=27 // pred_check
          %p1186 = pneg %p140
        $region38: #{sam_forward.19} parent=27 // pred_check_branch
          %1188 = sbr.rel (%p1186) target = $region40
        $region39: #{sam_forward.19} parent=27 // pred_region
          %s1190 = ssub.s32 256, 256
          %1191 = vsyncadd %s1160, %s1190
          %s1192 = smul.addr %s23, 2
          %s1193 = smul.addr %s1192, 128
          %s1194 = scalar_lea.hbm %s4, %s1193
          %s1195 = sshll.u32 %s1163, 4
          %s1196 = int_to_ptr.vmem [resolvable:$true] %s1195
          %1201 = dma.vmem_to_hbm [thread:$0]  %s1196, 256, %s1194, %s1160, 128, 128, 8
        $region40: #{sam_forward.19} parent=27 // pred_fallthru
          _
        // Predicated region
        $region41: #{sam_forward.19} parent=27 // pred_check
          %p1202 = pneg %p166
        $region42: #{sam_forward.19} parent=27 // pred_check_branch
          %1204 = sbr.rel (%p1202) target = $region44
        $region43: #{sam_forward.19} parent=27 // pred_region
          _
        $region44: #{sam_forward.19} parent=27 // pred_fallthru
          _
      $region28: #{sam_forward.19} parent=5 // pred_fallthru
        _
      %p1205 = scmp.le.s32.totalorder 2, %s18
      // Predicated region
      $region45: #{sam_forward.19} parent=5 // pred_check
        %p1206 = pneg %p1205
      $region46: #{sam_forward.19} parent=5 // pred_check_branch
        %1208 = sbr.rel (%p1206) target = $region48
      $region47: #{sam_forward.19} parent=5 // pred_region
        %s1209 = ssub.s32 %s18, 2
        // Predicated region
        $region49: #{sam_forward.19} parent=47 // pred_check
          %p1210 = pneg %p94
        $region50: #{sam_forward.19} parent=47 // pred_check_branch
          %1212 = sbr.rel (%p1210) target = $region52
        $region51: #{sam_forward.19} parent=47 // pred_region
          %p1213 = scmp.lt.s32.totalorder %s24, 1
          %s1214 = scalar_select %p1213, %s24, 1
          %s1215 = smul.addr %s1214, 2
          %s1216 = smul.addr %s1215, 8
          %s1217 = scalar_lea.vmem %s2, %s1216
        $region52: #{sam_forward.19} parent=47 // pred_fallthru
          _
        // Predicated region
        $region53: #{sam_forward.19} parent=47 // pred_check
          %p1218 = pneg %p120
        $region54: #{sam_forward.19} parent=47 // pred_check_branch
          %1220 = sbr.rel (%p1218) target = $region56
        $region55: #{sam_forward.19} parent=47 // pred_region
          %s1221 = sand.u32 %s105, 1
          %s1222 = scalar_lea.sflag [#allocation3], %s1221
          %s1223 = sand.u32 %s105, 1
          %s1224 = smul.addr %s1223, 64
          %s1225 = scalar_lea.vmem [#allocation2], %s1224
          %1226 = dma.done %s1222, 1024
        $region56: #{sam_forward.19} parent=47 // pred_fallthru
          _
        // Predicated region
        $region57: #{sam_forward.19} parent=47 // pred_check
          %p1227 = pneg %p146
        $region58: #{sam_forward.19} parent=47 // pred_check_branch
          %1229 = sbr.rel (%p1227) target = $region60
        $region59: #{sam_forward.19} parent=47 // pred_region
          %s1230 = sand.u32 %s131, 1
          %s1231 = scalar_lea.sflag [#allocation5], %s1230
          %s1232 = sand.u32 %s131, 1
          %s1233 = smul.addr %s1232, 16
          %s1234 = scalar_lea.vmem [#allocation4], %s1233
          %1235 = dma.done %s1231, 256
        $region60: #{sam_forward.19} parent=47 // pred_fallthru
          _
        // Predicated region
        $region61: #{sam_forward.19} parent=47 // pred_check
          %p1236 = pneg %p172
        $region62: #{sam_forward.19} parent=47 // pred_check_branch
          %1238 = sbr.rel (%p1236) target = $region64
        $region63: #{sam_forward.19} parent=47 // pred_region
          %p1239 = scmp.lt.s32.totalorder %s24, 1
          %s1240 = scalar_select %p1239, %s24, 1
          %s1241 = scalar_lea.vmem %s5, %s1240
        $region64: #{sam_forward.19} parent=47 // pred_fallthru
          _
      $region48: #{sam_forward.19} parent=5 // pred_fallthru
        _
    $region6: #{sam_forward.19} parent=1 // loop_footer
      %s22 = sadd.s32 1, %s18
    $region7: #{sam_forward.19} parent=1 // loop_footer_branch
      %17 = sbr.rel target = $region3
    $region8: #{sam_forward.19} parent=1 // loop_exit
      _
    %1242 = vsyncpa [#allocation3], 1
    %s1243 = scalar_lea.sflag [#allocation3], 1
    %1244 = vsyncpa %s1243, 1
    %1245 = vsyncpa [#allocation5], 1
    %s1246 = scalar_lea.sflag [#allocation5], 1
    %1247 = vsyncpa %s1246, 1

// kernel: sam_forward.23
$region0: #{sam_forward.23}
  #allocation0 [shape = 'u32[]', space=smem, size = 0x4, offset = 0x4, fixed_abs, tag = 'smem constant byte address 0x4 - core index']
  #allocation1 [shape = 'u32[144,128]{1,0:T(1,128)}', space=vmem, size = 0x12000, scoped, tag = 'internal scratch']
  #allocation2 [shape = 'f32[2,4]{1,0:T(2,128)}', space=vmem, size = 0x400, scoped, tag = 'scratch operand']
  %s0 = inlined_call_operand.vmem [shape: f32[2,64], index: 0, kind: input, shape index: {}]
  %s1 = inlined_call_operand.vmem [shape: f32[64,4], index: 1, kind: input, shape index: {}]
  %s2 = inlined_call_operand.vmem [shape: f32[1,4], index: 2, kind: input, shape index: {}]
  %s3 = inlined_call_operand.hbm [shape: f32[2,4], index: 3, kind: output, shape index: {}]
  %s4 = sld [smem:[#allocation0]]
  $region30: #{sam_forward.23} parent=0
    _
  %s6 = ssub.s32 1, %s4
  %s7 = scalar_select 0, %s6, %s4
  $region1: #{sam_forward.23} parent=0
    #allocation3 [shape = 'u8[1024]{0}', space=vmem, size = 0x400, scoped, tag = 'output window, operand 0, single buffered']
    #allocation4 [shape = 's32[1]{0}', space=sflag, size = 0x4, scoped, tag = 'scoped memory for sam_forward.23']
    %8 = vsyncpa [#allocation4], 0
    // Predicated region
    $region2: #{sam_forward.23} parent=1 // pred_check
      _
    $region3: #{sam_forward.23} parent=1 // pred_check_branch
      %10 = sbr.rel (0) target = $region5
    $region4: #{sam_forward.23} parent=1 // pred_region
      _
    $region5: #{sam_forward.23} parent=1 // pred_fallthru
      _
    // Predicated region
    $region6: #{sam_forward.23} parent=1 // pred_check
      _
    $region7: #{sam_forward.23} parent=1 // pred_check_branch
      %12 = sbr.rel (0) target = $region9
    $region8: #{sam_forward.23} parent=1 // pred_region
      _
    $region9: #{sam_forward.23} parent=1 // pred_fallthru
      _
    // Predicated region
    $region10: #{sam_forward.23} parent=1 // pred_check
      _
    $region11: #{sam_forward.23} parent=1 // pred_check_branch
      %14 = sbr.rel (0) target = $region13
    $region12: #{sam_forward.23} parent=1 // pred_region
      _
    $region13: #{sam_forward.23} parent=1 // pred_fallthru
      _
    %p15 = scmp.eq.s32.totalorder 0, 0
    // Predicated region
    $region14: #{sam_forward.23} parent=1 // pred_check
      %p16 = pneg %p15
    $region15: #{sam_forward.23} parent=1 // pred_check_branch
      %18 = sbr.rel (%p16) target = $region17
    $region16: #{sam_forward.23} parent=1 // pred_region
      %vm19 = vcmask 25600
      %20 = vst.msk [vmem:[#allocation2] sm:$0x3] %vm19, 0.0
    $region17: #{sam_forward.23} parent=1 // pred_fallthru
      _
    %v21 = vld [vmem:[#allocation2] sm:$0x3]
    %v22 = vld [vmem:[%s0] sm:$0x3]
    %v23 = vld [vmem:[%s1] sm:$0xff]
    %v24 = vld [vmem:[%s1 + $0x8] sm:$0xff]
    %v25 = vld [vmem:[%s1 + $0x10] sm:$0xff]
    %v26 = vld [vmem:[%s1 + $0x18] sm:$0xff]
    %v27 = vld [vmem:[%s1 + $0x20] sm:$0xff]
    %v28 = vld [vmem:[%s1 + $0x28] sm:$0xff]
    %v29 = vld [vmem:[%s1 + $0x30] sm:$0xff]
    %v30 = vld [vmem:[%s1 + $0x38] sm:$0xff]
    %vm31 = vcmask 523264
    %v33 = vsel %vm31, %v22, 0
    %35 = vmatprep.subr.mxu0 0.0
    %36 = vmatpush1.msra.mxu0 %v23
    %37 = vmatprep.subr.mxu0 0.0
    %38 = vmatpush1.msra.mxu0 %v24
    %39 = vmatprep.subr.mxu0 0.0
    %40 = vmatpush1.msra.mxu0 %v25
    %41 = vmatprep.subr.mxu0 0.0
    %42 = vmatpush1.msra.mxu0 %v26
    %43 = vmatprep.subr.mxu0 0.0
    %44 = vmatpush1.msra.mxu0 %v27
    %45 = vmatprep.subr.mxu0 0.0
    %46 = vmatpush1.msra.mxu0 %v28
    %47 = vmatprep.subr.mxu0 0.0
    %48 = vmatpush1.msra.mxu0 %v29
    %49 = vmatprep.subr.mxu0 0.0
    %50 = vmatpush1.msra.mxu0 %v30
    %51 = vmatprep.subr.mxu0 0.0
    %52 = vmatpush1.msra.mxu0 0.0
    %53 = vmatprep.subr.mxu0 0.0
    %54 = vmatpush1.msra.mxu0 0.0
    %55 = vmatprep.subr.mxu0 0.0
    %56 = vmatpush1.msra.mxu0 0.0
    %57 = vmatprep.subr.mxu0 0.0
    %58 = vmatpush1.msra.mxu0 0.0
    %59 = vmatprep.subr.mxu0 0.0
    %60 = vmatpush1.msra.mxu0 0.0
    %61 = vmatprep.subr.mxu0 0.0
    %62 = vmatpush1.msra.mxu0 0.0
    %63 = vmatprep.subr.mxu0 0.0
    %64 = vmatpush1.msra.mxu0 0.0
    %65 = vmatprep.subr.mxu0 0.0
    %66 = vmatpush1.msra.mxu0 0.0
    %67 = vmatprep.subr.mxu0 0.0
    %68 = vmatpush1.msra.mxu0 0.0
    %69 = vmatprep.subr.mxu0 0.0
    %70 = vmatpush1.msra.mxu0 0.0
    %71 = vmatprep.subr.mxu0 0.0
    %72 = vmatpush1.msra.mxu0 0.0
    %73 = vmatprep.subr.mxu0 0.0
    %74 = vmatpush1.msra.mxu0 0.0
    %75 = vmatprep.subr.mxu0 0.0
    %76 = vmatpush1.msra.mxu0 0.0
    %77 = vmatprep.subr.mxu0 0.0
    %78 = vmatpush1.msra.mxu0 0.0
    %79 = vmatprep.subr.mxu0 0.0
    %80 = vmatpush1.msra.mxu0 0.0
    %81 = vmatprep.subr.mxu0 0.0
    %82 = vmatpush1.msra.mxu0 0.0
    %83 = vmatprep.subr.mxu0 0.0
    %84 = vmatpush1.msra.mxu0 0.0
    %85 = vmatprep.subr.mxu0 0.0
    %86 = vmatpush1.msra.mxu0 0.0
    %87 = vmatprep.subr.mxu0 0.0
    %88 = vmatpush1.msra.mxu0 0.0
    %89 = vmatprep.subr.mxu0 0.0
    %90 = vmatpush1.msra.mxu0 0.0
    %91 = vmatprep.subr.mxu0 0.0
    %92 = vmatpush1.msra.mxu0 0.0
    %93 = vmatprep.subr.mxu0 0.0
    %94 = vmatpush1.msra.mxu0 0.0
    %95 = vmatprep.subr.mxu0 0.0
    %96 = vmatpush1.msra.mxu0 0.0
    %97 = vmatprep.subr.mxu0 0.0
    %98 = vmatpush1.msra.mxu0 0.0
    %99 = vmatprep.mubr.f32.mxu0 0.0
    %100 = vmatmul.mubr.f32.gmra.mrb[0].mxu0 %v33
    %v101 = vpop.f32.mrb[0].mxu0
    %v102 = vadd.f32 0.0, %v101
    %v103 = vpop.f32.mrb[0].mxu0
    %104 = vdwg.mxu0
    %v105 = vadd.f32 %v21, %v102
    %vm106 = vcmask 25600
    %107 = vst.msk [vmem:[#allocation2] sm:$0x3] %vm106, %v105
    // Predicated region
    $region18: #{sam_forward.23} parent=1 // pred_check
      %p108 = pneg %p15
    $region19: #{sam_forward.23} parent=1 // pred_check_branch
      %110 = sbr.rel (%p108) target = $region21
    $region20: #{sam_forward.23} parent=1 // pred_region
      %v111 = vld [vmem:[#allocation2] sm:$0x3]
      %v112 = vld [vmem:[%s2] sm:$0x1]
      %v114 = vlaneseq
      %v115 = vshrl.u32 %v114, 7
      %v116 = vsub.s32 0, %v115
      %v117 = vrot.slane %v112, %v116
      %v119 = vadd.f32 %v111, %v117
      %120 = vst.msk [vmem:[#allocation3] sm:$0x3] %vm106, %v119
    $region21: #{sam_forward.23} parent=1 // pred_fallthru
      _
    // Predicated region
    $region22: #{sam_forward.23} parent=1 // pred_check
      _
    $region23: #{sam_forward.23} parent=1 // pred_check_branch
      %122 = sbr.rel (0) target = $region25
    $region24: #{sam_forward.23} parent=1 // pred_region
      %s124 = ssub.s32 32, 32
      %125 = vsyncadd [#allocation4], %s124
      %s127 = sshll.u32 [#allocation3], 4
      %s128 = int_to_ptr.vmem [resolvable:$true] %s127
      %130 = dma.vmem_to_hbm [thread:$0]  %s128, 32, %s3, [#allocation4]
    $region25: #{sam_forward.23} parent=1 // pred_fallthru
      _
    // Predicated region
    $region26: #{sam_forward.23} parent=1 // pred_check
      _
    $region27: #{sam_forward.23} parent=1 // pred_check_branch
      %132 = sbr.rel (0) target = $region29
    $region28: #{sam_forward.23} parent=1 // pred_region
      %133 = dma.done [#allocation4], 32
    $region29: #{sam_forward.23} parent=1 // pred_fallthru
      _
    %134 = vsyncpa [#allocation4], 1

</llo_original>
